<compile_context>
chip_gen: v6e
topology: v6e:2x2x1
jax: 0.10.0
libtpu: 0.0.40
codegen_flags: <defaults>
</compile_context>

<pallas_src>
import functools
import math

import jax
import jax.numpy as jnp
from jax.experimental import pallas as pl
from jax.experimental.pallas import tpu as pltpu

# ------------------------------ config (small) ------------------------------
ROAD_NUM = 16          # configs.road_num
EMB_DIM = 128          # road embedding dim (forced by ST_Tokenizer: static=128)
T_DYN = 4              # dynamic embedding time steps
D_MODEL = 64           # configs.d_model
N_HEADS = 4
HEAD_DIM = D_MODEL // N_HEADS
D_FF = 128             # LLaMA intermediate size (small)
N_LAYERS = 2
N_TIME_FEAT = 4        # x_mark_enc feature dim
GATTN_HEADS = 8        # GlobalAttnLayer(2*d, d, 8)

LORA_R = 8
LORA_ALPHA = 32
LORA_SCALE = float(LORA_ALPHA) / float(LORA_R)

BATCH = 2
SEQ_LEN = 8
HEAD_OUT_PAD = 128     # lane-dense padded width for the fused cls/time/flow head

F32 = jnp.float32
BF16 = jnp.bfloat16


# --------------------------- pallas_call plumbing ---------------------------
def _full_spec(shape):
    # single full-array block (block == full dims is always legal)
    n = len(shape)
    return pl.BlockSpec(shape, lambda i, _n=n: (0,) * _n)


def _call(kernel, out_shape, *args):
    """Single-block pallas_call: every operand is one full VMEM tile."""
    return pl.pallas_call(
        kernel,
        out_shape=jax.ShapeDtypeStruct(out_shape, F32),
        grid=(1,),
        in_specs=[_full_spec(a.shape) for a in args],
        out_specs=_full_spec(out_shape),
        compiler_params=pltpu.CompilerParams(dimension_semantics=("arbitrary",)),
    )(*args)


def _rms(x, w):
    return x * jax.lax.rsqrt(jnp.mean(x * x, axis=-1, keepdims=True) + 1e-5) * w


def _softmax_rows(s):
    m = jnp.max(s, axis=-1, keepdims=True)
    p = jnp.exp(s - m)
    return p * pl.reciprocal(jnp.sum(p, axis=-1, keepdims=True), approx=True)


# ------------------------------ fused kernels --------------------------------
def _st_tokenizer_kernel(static_ref, dyn_ref, convw_ref, convb_ref,
                         wqkv3_ref, wo3_ref, o_ref, *, nheads):
    # conv1d(kernel_size=T) over permuted dynamic embedding == flattened matmul
    dyn_out = jnp.dot(dyn_ref[...].astype(BF16), convw_ref[...],
                      preferred_element_type=F32) + convb_ref[...]
    road = jnp.concatenate([static_ref[...], dyn_out], axis=-1)        # [N, 2d]
    n, dg = road.shape
    hd = dg // nheads
    rb = jnp.broadcast_to(road.astype(BF16)[None], (nheads, n, dg))    # cast once
    qkv = jnp.einsum('hnd,hdc->hnc', rb, wqkv3_ref[...],
                     preferred_element_type=F32)                       # [H, N, 3*hd]
    q = qkv[..., 0 * hd:1 * hd]
    k = qkv[..., 1 * hd:2 * hd]
    v = qkv[..., 2 * hd:3 * hd]
    s = jnp.einsum('hmd,hnd->hmn', q.astype(BF16), k.astype(BF16),
                   preferred_element_type=F32) * (1.0 / math.sqrt(hd))
    p = _softmax_rows(s)
    ctx = jnp.einsum('hmn,hnd->hmd', p.astype(BF16), v.astype(BF16),
                     preferred_element_type=F32)                       # [H, N, hd]
    # output projection: sum over heads of per-head [N,hd]@[hd,d] == concat @ wo
    proj = jnp.einsum('hmd,hdk->hmk', ctx.astype(BF16), wo3_ref[...],
                      preferred_element_type=F32)                      # [H, N, d]
    o_ref[...] = jnp.sum(proj, axis=0)                                 # [N, d]


def _embed_kernel(xe_ref, xm_ref, vw_ref, mw_ref, b_ref, o_ref):
    # TrajDataEmbedding: value projection + temporal projection + shared bias
    val = jnp.dot(xe_ref[...].astype(BF16), vw_ref[...],
                  preferred_element_type=F32)
    tmp = jnp.dot(xm_ref[...].astype(BF16), mw_ref[...],
                  preferred_element_type=F32)
    o_ref[...] = val + tmp + b_ref[...]


def _layers_kernel(h0_ref, cos_ref, sin_ref, bias_ref,
                   anorm_ref, wqkv3_ref, wo3_ref,
                   fnorm_ref, wgu_ref, wd_ref,
                   o_ref, *, nheads, headdim):
    """One decoder layer per grid step; residual stream stays in o_ref (VMEM)."""
    @pl.when(pl.program_id(0) == 0)
    def _():
        o_ref[...] = h0_ref[...]

    h = o_ref[...]                                                     # [M, D] f32
    M, D = h.shape
    hd = headdim
    scale = 1.0 / math.sqrt(hd)

    # ---- attention sublayer ----
    x = _rms(h, anorm_ref[...]).astype(BF16)                           # cast once
    xb = jnp.broadcast_to(x[None], (nheads, M, D))                     # [H, M, D]
    # wqkv3 per head: [wq | wk | wv | wq@R | wk@R]  (R = rotate-half matrix)
    qkv = jnp.einsum('hmd,hdc->hmc', xb, wqkv3_ref[...],
                     preferred_element_type=F32)                       # [H, M, 5*hd]
    cos = cos_ref[...][None]                                           # [1, M, hd]
    sin = sin_ref[...][None]
    q = (qkv[..., 0 * hd:1 * hd] * cos + qkv[..., 3 * hd:4 * hd] * sin) * scale
    k = qkv[..., 1 * hd:2 * hd] * cos + qkv[..., 4 * hd:5 * hd] * sin
    v = qkv[..., 2 * hd:3 * hd]
    s = jnp.einsum('hmd,hnd->hmn', q.astype(BF16), k.astype(BF16),
                   preferred_element_type=F32) + bias_ref[...][None]   # f32 scores
    p = _softmax_rows(s)
    ctx = jnp.einsum('hmn,hnd->hmd', p.astype(BF16), v.astype(BF16),
                     preferred_element_type=F32)                       # [H, M, hd]
    proj = jnp.einsum('hmd,hdn->hmn', ctx.astype(BF16), wo3_ref[...],
                      preferred_element_type=F32)                      # [H, M, D]
    h = h + jnp.sum(proj, axis=0)

    # ---- SwiGLU MLP sublayer (LoRA pre-merged) ----
    x2 = _rms(h, fnorm_ref[...]).astype(BF16)
    gu = jnp.dot(x2, wgu_ref[...], preferred_element_type=F32)         # [M, 2F]
    ff = gu.shape[-1] // 2
    gate, up = gu[:, :ff], gu[:, ff:]
    act = gate * jax.nn.sigmoid(gate) * up                             # SiLU*up, f32
    o_ref[...] = h + jnp.dot(act.astype(BF16), wd_ref[...],
                             preferred_element_type=F32)


def _head_kernel(hs_ref, norm_ref, w_ref, b_ref, o_ref):
    # final RMSNorm (row-wise, so applying after the gather is equivalent)
    x = _rms(hs_ref[...], norm_ref[...])
    o_ref[...] = jnp.dot(x.astype(BF16), w_ref[...],
                         preferred_element_type=F32) + b_ref[...]


# ---------------------- one fused call for all layers ------------------------
def _run_layers(h0, prep):
    M, D = h0.shape
    nl = prep["wqkv3"].shape[0]
    kernel = functools.partial(_layers_kernel, nheads=N_HEADS, headdim=HEAD_DIM)

    def const_spec(a):
        n = a.ndim
        return pl.BlockSpec(a.shape, lambda l, _n=n: (0,) * _n)

    def layer_spec(a):
        n = a.ndim
        return pl.BlockSpec((None,) + a.shape[1:],
                            lambda l, _n=n: (l,) + (0,) * (_n - 1))

    return pl.pallas_call(
        kernel,
        out_shape=jax.ShapeDtypeStruct((M, D), F32),
        grid=(nl,),
        in_specs=[const_spec(h0), const_spec(prep["cos"]), const_spec(prep["sin"]),
                  const_spec(prep["bias"]),
                  layer_spec(prep["anorm"]), layer_spec(prep["wqkv3"]),
                  layer_spec(prep["wo3"]),
                  layer_spec(prep["fnorm"]), layer_spec(prep["wgu"]),
                  layer_spec(prep["wd"])],
        out_specs=pl.BlockSpec((M, D), lambda l: (0, 0)),
        compiler_params=pltpu.CompilerParams(dimension_semantics=("arbitrary",)),
    )(h0, prep["cos"], prep["sin"], prep["bias"],
      prep["anorm"], prep["wqkv3"], prep["wo3"],
      prep["fnorm"], prep["wgu"], prep["wd"])


# ------------------- one-shot weight preprocessing (hoisted) ------------------
def _split_heads_cols(w, hd):
    # [in, H*hd] -> [H, in, hd]   (per-head column blocks)
    return w.reshape(w.shape[0], -1, hd).transpose(1, 0, 2)


def prepare_params(p):
    prep = {}
    # ---- ST_Tokenizer ----
    prep["static_emb"] = p["static_emb"]
    prep["dyn_flat"] = p["dynamic_emb"].transpose(0, 2, 1).reshape(
        ROAD_NUM, EMB_DIM * T_DYN)
    prep["conv_w"] = p["conv_w"].reshape(EMB_DIM, EMB_DIM * T_DYN).T.astype(BF16)
    prep["conv_b"] = p["conv_b"].reshape(1, EMB_DIM)
    dg = 2 * EMB_DIM
    ghd = dg // GATTN_HEADS
    g = p["gattn"]
    gq = _split_heads_cols(g["wq"], ghd)
    gk = _split_heads_cols(g["wk"], ghd)
    gv = _split_heads_cols(g["wv"], ghd)
    prep["g_wqkv3"] = jnp.concatenate([gq, gk, gv], axis=-1).astype(BF16)  # [H,2d,3*ghd]
    prep["g_wo3"] = g["wo"].reshape(GATTN_HEADS, ghd, EMB_DIM).astype(BF16)
    # 4 special rows: arange(4).unsqueeze(1).repeat(1, 128)
    prep["special"] = jnp.tile(jnp.arange(4, dtype=F32)[:, None], (1, EMB_DIM))

    # ---- TrajDataEmbedding ----
    prep["val_w"] = p["val_w"].astype(BF16)
    prep["mark_w"] = p["mark_w"].astype(BF16)
    prep["emb_b"] = (p["val_b"] + p["mark_b"]).reshape(1, D_MODEL)

    # ---- RoPE tables + block-diag causal bias (static in B, L) ----
    half = HEAD_DIM // 2
    pos = jnp.arange(SEQ_LEN, dtype=F32)
    freqs = 1.0 / (10000.0 ** (jnp.arange(half, dtype=F32) / half))
    ang = pos[:, None] * freqs[None, :]                                 # [L, half]
    cos_h = jnp.concatenate([jnp.cos(ang), jnp.cos(ang)], axis=-1)      # [L, hd]
    sin_h = jnp.concatenate([jnp.sin(ang), jnp.sin(ang)], axis=-1)
    prep["cos"] = jnp.tile(cos_h, (BATCH, 1))                           # [M, hd]
    prep["sin"] = jnp.tile(sin_h, (BATCH, 1))
    M = BATCH * SEQ_LEN
    row = jnp.arange(M)[:, None]
    col = jnp.arange(M)[None, :]
    mask = (row // SEQ_LEN == col // SEQ_LEN) & (col <= row)
    prep["bias"] = jnp.where(mask, 0.0, -1e30).astype(F32)              # [M, M]

    # rotate-half as a matrix: (q @ R) == [-q2, q1] per head
    R = jnp.zeros((HEAD_DIM, HEAD_DIM), F32)
    idx = jnp.arange(half)
    R = R.at[idx + half, idx].set(-1.0)
    R = R.at[idx, idx + half].set(1.0)

    # ---- decoder layers: LoRA merge + per-head stacking + RoPE folding ----
    wqkv3_l, wo3_l, wgu_l, wd_l, anorm_l, fnorm_l = [], [], [], [], [], []
    for lp in p["layers"]:
        wq3 = _split_heads_cols(lp["wq"], HEAD_DIM)                     # [H, D, hd]
        wk3 = _split_heads_cols(lp["wk"], HEAD_DIM)
        wv3 = _split_heads_cols(lp["wv"], HEAD_DIM)
        wq3r = jnp.einsum('hdk,kj->hdj', wq3, R)
        wk3r = jnp.einsum('hdk,kj->hdj', wk3, R)
        wqkv3_l.append(jnp.concatenate([wq3, wk3, wv3, wq3r, wk3r], axis=-1))
        wo3_l.append(lp["wo"].reshape(N_HEADS, HEAD_DIM, D_MODEL))      # [H, hd, D]
        # pre-merge LoRA into frozen base weights (redo after every update)
        wg_eff = lp["wg"] + LORA_SCALE * (lp["ag"] @ lp["bg"])
        wu_eff = lp["wu"] + LORA_SCALE * (lp["au"] @ lp["bu"])
        wd_eff = lp["wd"] + LORA_SCALE * (lp["ad"] @ lp["bd"])
        wgu_l.append(jnp.concatenate([wg_eff, wu_eff], axis=-1))        # [D, 2F]
        wd_l.append(wd_eff)
        anorm_l.append(lp["attn_norm"].reshape(1, D_MODEL))
        fnorm_l.append(lp["ffn_norm"].reshape(1, D_MODEL))
    prep["wqkv3"] = jnp.stack(wqkv3_l).astype(BF16)                     # [NL,H,D,5hd]
    prep["wo3"] = jnp.stack(wo3_l).astype(BF16)                         # [NL,H,hd,D]
    prep["wgu"] = jnp.stack(wgu_l).astype(BF16)                         # [NL,D,2F]
    prep["wd"] = jnp.stack(wd_l).astype(BF16)                           # [NL,F,D]
    prep["anorm"] = jnp.stack(anorm_l)                                  # [NL,1,D]
    prep["fnorm"] = jnp.stack(fnorm_l)                                  # [NL,1,D]

    # ---- fused cls/time/flow heads, padded to 128 lanes ----
    head_w = jnp.concatenate([p["cls_w"], p["time_w"], p["flow_w"]], axis=1)
    head_b = jnp.concatenate([p["cls_b"], p["time_b"], p["flow_b"]], axis=0)
    pad = HEAD_OUT_PAD - head_w.shape[1]
    prep["head_w"] = jnp.pad(head_w, ((0, 0), (0, pad))).astype(BF16)   # [D, 128]
    prep["head_b"] = jnp.pad(head_b, (0, pad)).reshape(1, HEAD_OUT_PAD)
    prep["final_norm"] = p["final_norm"].reshape(1, D_MODEL)
    return prep


# ------------------------------ model (JAX glue) -----------------------------
def model_forward(prep, x_id, x_mark):
    # ---------- ST_Tokenizer (one fused kernel) ----------
    tok_kernel = functools.partial(_st_tokenizer_kernel, nheads=GATTN_HEADS)
    road = _call(tok_kernel, (ROAD_NUM, EMB_DIM),
                 prep["static_emb"], prep["dyn_flat"], prep["conv_w"],
                 prep["conv_b"], prep["g_wqkv3"], prep["g_wo3"])
    road_emb = jnp.concatenate([road, prep["special"]], axis=0)        # [N+4, d]

    # ---------- token lookup + TrajDataEmbedding ----------
    x_enc = jnp.take(road_emb, x_id, axis=0)                           # [B, L, 128]
    B, L, _ = x_enc.shape
    M = B * L
    h0 = _call(_embed_kernel, (M, D_MODEL),
               x_enc.reshape(M, EMB_DIM), x_mark.reshape(M, N_TIME_FEAT),
               prep["val_w"], prep["mark_w"], prep["emb_b"])

    # ---------- ALL decoder layers in one grid-iterated pallas_call ----------
    h = _run_layers(h0, prep)
    h = h.reshape(B, L, D_MODEL)

    # ---------- get_match_hidden (single gather for all 3 specials) ----------
    specials = jnp.array([ROAD_NUM + 1, ROAD_NUM + 2, ROAD_NUM + 3], dtype=x_id.dtype)
    hits = x_id[:, :, None] == specials[None, None, :]                 # [B, L, 3]
    pos_idx = jnp.argmax(hits, axis=1)                                 # [B, 3]
    hs = h[jnp.arange(B)[:, None], pos_idx]                            # [B, 3, D]

    # ---------- fused classify / time / flow heads (lane-dense padded) -------
    out = _call(_head_kernel, (B * 3, HEAD_OUT_PAD),
                hs.reshape(B * 3, D_MODEL), prep["final_norm"],
                prep["head_w"], prep["head_b"])
    out = out[:, :ROAD_NUM + 2].reshape(B, 3, ROAD_NUM + 2)

    out_roads = out[:, 0:1, :ROAD_NUM]          # [B, 1, road_num]
    out_time = out[:, 1:2, ROAD_NUM]            # [B, 1]
    out_flow = out[:, 2:3, ROAD_NUM + 1]        # [B, 1]
    return out_roads, out_time, out_flow


# ------------------------------ param init -----------------------------------
def init_params(key):
    keys = iter(jax.random.split(key, 64))

    def nrm(shape, s=0.02):
        return jax.random.normal(next(keys), shape, F32) * s

    p = {}
    # ST_Tokenizer
    p["static_emb"] = nrm((ROAD_NUM, EMB_DIM), 1.0)
    p["dynamic_emb"] = nrm((ROAD_NUM, T_DYN, EMB_DIM), 1.0)
    p["conv_w"] = nrm((EMB_DIM, EMB_DIM, T_DYN))         # [out_ch, in_ch, kernel]
    p["conv_b"] = nrm((EMB_DIM,))
    dg = 2 * EMB_DIM
    p["gattn"] = dict(wq=nrm((dg, dg)), wk=nrm((dg, dg)),
                      wv=nrm((dg, dg)), wo=nrm((dg, EMB_DIM)))
    # TrajDataEmbedding
    p["val_w"] = nrm((EMB_DIM, D_MODEL))
    p["val_b"] = jnp.zeros((D_MODEL,), F32)
    p["mark_w"] = nrm((N_TIME_FEAT, D_MODEL))
    p["mark_b"] = jnp.zeros((D_MODEL,), F32)
    # LLaMA-style layers with LoRA (frozen base, lora_B zero-init like peft)
    layers = []
    for _ in range(N_LAYERS):
        layers.append(dict(
            attn_norm=jnp.ones((D_MODEL,), F32),
            wq=nrm((D_MODEL, D_MODEL)), wk=nrm((D_MODEL, D_MODEL)),
            wv=nrm((D_MODEL, D_MODEL)), wo=nrm((D_MODEL, D_MODEL)),
            ffn_norm=jnp.ones((D_MODEL,), F32),
            wg=nrm((D_MODEL, D_FF)), wu=nrm((D_MODEL, D_FF)), wd=nrm((D_FF, D_MODEL)),
            ag=nrm((D_MODEL, LORA_R)), bg=jnp.zeros((LORA_R, D_FF), F32),
            au=nrm((D_MODEL, LORA_R)), bu=jnp.zeros((LORA_R, D_FF), F32),
            ad=nrm((D_FF, LORA_R)), bd=jnp.zeros((LORA_R, D_MODEL), F32),
        ))
    p["layers"] = layers
    p["final_norm"] = jnp.ones((D_MODEL,), F32)
    # Pretrain heads
    p["cls_w"] = nrm((D_MODEL, ROAD_NUM))
    p["cls_b"] = jnp.zeros((ROAD_NUM,), F32)
    p["time_w"] = nrm((D_MODEL, 1))
    p["time_b"] = jnp.zeros((1,), F32)
    p["flow_w"] = nrm((D_MODEL, 1))
    p["flow_b"] = jnp.zeros((1,), F32)
    return p


# ------------------------------ main ------------------------------------------
if __name__ == "__main__":
    key = jax.random.PRNGKey(0)
    pk, idk, mk = jax.random.split(key, 3)
    params = init_params(pk)
    prep = prepare_params(params)   # one-shot weight preprocessing (hoisted)

    # x_id: road ids in [0, ROAD_NUM); one of each special token
    # (road_num+1, +2, +3) per sequence so get_match_hidden reshapes cleanly.
    x_id = jax.random.randint(idk, (BATCH, SEQ_LEN), 0, ROAD_NUM)
    x_id = x_id.at[:, 2].set(ROAD_NUM + 1)
    x_id = x_id.at[:, 4].set(ROAD_NUM + 2)
    x_id = x_id.at[:, 6].set(ROAD_NUM + 3)
    x_mark_enc = jax.random.normal(mk, (BATCH, SEQ_LEN, N_TIME_FEAT), F32)

    fwd = jax.jit(model_forward)
    out_roads, out_time, out_flow = fwd(prep, x_id, x_mark_enc)
    jax.block_until_ready((out_roads, out_time, out_flow))

    assert out_roads.shape == (BATCH, 1, ROAD_NUM)
    assert out_time.shape == (BATCH, 1)
    assert out_flow.shape == (BATCH, 1)
    print("KERNEL_OK")
</pallas_src>

<mosaic_0001>
module attributes {stable_mosaic.version = 11 : i64} {
  func.func @_st_tokenizer_kernel(%arg0: i32, %arg1: memref<16x128xf32, #tpu.memory_space<vmem>>, %arg2: memref<16x512xf32, #tpu.memory_space<vmem>>, %arg3: memref<512x128xbf16, #tpu.memory_space<vmem>>, %arg4: memref<1x128xf32, #tpu.memory_space<vmem>>, %arg5: memref<8x256x96xbf16, #tpu.memory_space<vmem>>, %arg6: memref<8x32x128xbf16, #tpu.memory_space<vmem>>, %arg7: memref<16x128xf32, #tpu.memory_space<vmem>>) attributes {dimension_semantics = [#tpu.dimension_semantics<arbitrary>], iteration_bounds = array<i64: 1>, scalar_prefetch = 0 : i64, scratch_operands = 0 : i64, tpu.core_type = #tpu.core_type<tc>, window_params = [{pipeline_mode = #tpu.pipeline_mode<synchronous>, transform_indices = @transform_0, window_bounds = array<i64: 16, 128>}, {pipeline_mode = #tpu.pipeline_mode<synchronous>, transform_indices = @transform_1, window_bounds = array<i64: 16, 512>}, {pipeline_mode = #tpu.pipeline_mode<synchronous>, transform_indices = @transform_2, window_bounds = array<i64: 512, 128>}, {pipeline_mode = #tpu.pipeline_mode<synchronous>, transform_indices = @transform_3, window_bounds = array<i64: 1, 128>}, {pipeline_mode = #tpu.pipeline_mode<synchronous>, transform_indices = @transform_4, window_bounds = array<i64: 8, 256, 96>}, {pipeline_mode = #tpu.pipeline_mode<synchronous>, transform_indices = @transform_5, window_bounds = array<i64: 8, 32, 128>}, {pipeline_mode = #tpu.pipeline_mode<synchronous>, transform_indices = @transform_6, window_bounds = array<i64: 16, 128>}]} {
    %c0 = arith.constant 0 : index
    %c0_0 = arith.constant 0 : index
    %0 = vector.load %arg2[%c0, %c0_0] : memref<16x512xf32, #tpu.memory_space<vmem>>, vector<16x512xf32>
    %1 = arith.truncf %0 : vector<16x512xf32> to vector<16x512xbf16>
    %c0_1 = arith.constant 0 : index
    %c0_2 = arith.constant 0 : index
    %2 = vector.load %arg3[%c0_1, %c0_2] : memref<512x128xbf16, #tpu.memory_space<vmem>>, vector<512x128xbf16>
    %cst = arith.constant dense<0.000000e+00> : vector<16x128xf32>
    %3 = tpu.matmul %1, %2, %cst {dimension_numbers = #tpu.dot_dimension_numbers<[1], [0], [0], [1], [0, 0, 1, 1], [], []>} : vector<16x512xbf16>, vector<512x128xbf16>, vector<16x128xf32> -> vector<16x128xf32>
    %c0_3 = arith.constant 0 : index
    %c0_4 = arith.constant 0 : index
    %4 = vector.load %arg4[%c0_3, %c0_4] : memref<1x128xf32, #tpu.memory_space<vmem>>, vector<1x128xf32>
    %5 = vector.broadcast %4 : vector<1x128xf32> to vector<16x128xf32>
    %6 = arith.addf %3, %5 : vector<16x128xf32>
    %c0_5 = arith.constant 0 : index
    %c0_6 = arith.constant 0 : index
    %7 = vector.load %arg1[%c0_5, %c0_6] : memref<16x128xf32, #tpu.memory_space<vmem>>, vector<16x128xf32>
    %8 = tpu.concatenate %7, %6 in 1 : vector<16x128xf32>, vector<16x128xf32> -> vector<16x256xf32>
    %9 = arith.truncf %8 : vector<16x256xf32> to vector<16x256xbf16>
    %10 = vector.shape_cast %9 : vector<16x256xbf16> to vector<1x16x256xbf16>
    %11 = vector.shape_cast %10 : vector<1x16x256xbf16> to vector<1x16x256xbf16>
    %12 = vector.broadcast %11 : vector<1x16x256xbf16> to vector<8x16x256xbf16>
    %c0_7 = arith.constant 0 : index
    %c0_8 = arith.constant 0 : index
    %c0_9 = arith.constant 0 : index
    %13 = vector.load %arg5[%c0_7, %c0_8, %c0_9] : memref<8x256x96xbf16, #tpu.memory_space<vmem>>, vector<8x256x96xbf16>
    "tpu.trace_start"() <{level = 10 : i32, message = "hnd,hdc->hnc"}> : () -> ()
    %cst_10 = arith.constant dense<0.000000e+00> : vector<8x16x96xf32>
    %14 = tpu.matmul %12, %13, %cst_10 {dimension_numbers = #tpu.dot_dimension_numbers<[2], [1], [1], [2], [0, 0, 0, 1, 1, 2], [0], [0]>} : vector<8x16x256xbf16>, vector<8x256x96xbf16>, vector<8x16x96xf32> -> vector<8x16x96xf32>
    "tpu.trace_stop"() : () -> ()
    %15 = vector.extract_strided_slice %14 {offsets = [0, 0, 0], sizes = [8, 16, 32], strides = [1, 1, 1]} : vector<8x16x96xf32> to vector<8x16x32xf32>
    %16 = vector.extract_strided_slice %14 {offsets = [0, 0, 32], sizes = [8, 16, 32], strides = [1, 1, 1]} : vector<8x16x96xf32> to vector<8x16x32xf32>
    %17 = vector.extract_strided_slice %14 {offsets = [0, 0, 64], sizes = [8, 16, 32], strides = [1, 1, 1]} : vector<8x16x96xf32> to vector<8x16x32xf32>
    %18 = arith.truncf %15 : vector<8x16x32xf32> to vector<8x16x32xbf16>
    %19 = arith.truncf %16 : vector<8x16x32xf32> to vector<8x16x32xbf16>
    "tpu.trace_start"() <{level = 10 : i32, message = "hmd,hnd->hmn"}> : () -> ()
    %cst_11 = arith.constant dense<0.000000e+00> : vector<8x16x16xf32>
    %20 = tpu.matmul %18, %19, %cst_11 {dimension_numbers = #tpu.dot_dimension_numbers<[2], [2], [1], [1], [0, 0, 0, 1, 1, 1], [0], [0]>} : vector<8x16x32xbf16>, vector<8x16x32xbf16>, vector<8x16x16xf32> -> vector<8x16x16xf32>
    "tpu.trace_stop"() : () -> ()
    %cst_12 = arith.constant 0.176776692 : f32
    %21 = vector.broadcast %cst_12 : f32 to vector<8x16x16xf32>
    %22 = arith.mulf %20, %21 : vector<8x16x16xf32>
    %cst_13 = arith.constant dense<0xFF800000> : vector<8x16xf32>
    %23 = vector.multi_reduction <maximumf>, %22, %cst_13 [2] : vector<8x16x16xf32> to vector<8x16xf32>
    %24 = vector.shape_cast %23 : vector<8x16xf32> to vector<8x16x1xf32>
    %25 = vector.broadcast %24 : vector<8x16x1xf32> to vector<8x16x16xf32>
    %26 = arith.subf %22, %25 : vector<8x16x16xf32>
    %27 = math.exp %26 : vector<8x16x16xf32>
    %cst_14 = arith.constant dense<0.000000e+00> : vector<8x16xf32>
    %28 = vector.multi_reduction <add>, %27, %cst_14 [2] : vector<8x16x16xf32> to vector<8x16xf32>
    %29 = vector.shape_cast %28 : vector<8x16xf32> to vector<8x16x1xf32>
    %30 = tpu.reciprocal %29 {approx = true} : vector<8x16x1xf32> -> vector<8x16x1xf32>
    %31 = vector.broadcast %30 : vector<8x16x1xf32> to vector<8x16x16xf32>
    %32 = arith.mulf %27, %31 : vector<8x16x16xf32>
    %33 = arith.truncf %32 : vector<8x16x16xf32> to vector<8x16x16xbf16>
    %34 = arith.truncf %17 : vector<8x16x32xf32> to vector<8x16x32xbf16>
    "tpu.trace_start"() <{level = 10 : i32, message = "hmn,hnd->hmd"}> : () -> ()
    %cst_15 = arith.constant dense<0.000000e+00> : vector<8x16x32xf32>
    %35 = tpu.matmul %33, %34, %cst_15 {dimension_numbers = #tpu.dot_dimension_numbers<[2], [1], [1], [2], [0, 0, 0, 1, 1, 2], [0], [0]>} : vector<8x16x16xbf16>, vector<8x16x32xbf16>, vector<8x16x32xf32> -> vector<8x16x32xf32>
    "tpu.trace_stop"() : () -> ()
    %36 = arith.truncf %35 : vector<8x16x32xf32> to vector<8x16x32xbf16>
    %c0_16 = arith.constant 0 : index
    %c0_17 = arith.constant 0 : index
    %c0_18 = arith.constant 0 : index
    %37 = vector.load %arg6[%c0_16, %c0_17, %c0_18] : memref<8x32x128xbf16, #tpu.memory_space<vmem>>, vector<8x32x128xbf16>
    "tpu.trace_start"() <{level = 10 : i32, message = "hmd,hdk->hmk"}> : () -> ()
    %cst_19 = arith.constant dense<0.000000e+00> : vector<8x16x128xf32>
    %38 = tpu.matmul %36, %37, %cst_19 {dimension_numbers = #tpu.dot_dimension_numbers<[2], [1], [1], [2], [0, 0, 0, 1, 1, 2], [0], [0]>} : vector<8x16x32xbf16>, vector<8x32x128xbf16>, vector<8x16x128xf32> -> vector<8x16x128xf32>
    "tpu.trace_stop"() : () -> ()
    %cst_20 = arith.constant dense<0.000000e+00> : vector<16x128xf32>
    %39 = vector.multi_reduction <add>, %38, %cst_20 [0] : vector<8x16x128xf32> to vector<16x128xf32>
    %c0_21 = arith.constant 0 : index
    %c0_22 = arith.constant 0 : index
    %40 = vector.load %arg7[%c0_21, %c0_22] : memref<16x128xf32, #tpu.memory_space<vmem>>, vector<16x128xf32>
    tpu.vector_store %arg7[%c0_21, %c0_22], %39 {strides = array<i32>} : memref<16x128xf32, #tpu.memory_space<vmem>>, vector<16x128xf32>,
    return
  }
  func.func @transform_0(%arg0: i32) -> (i32, i32) {
    %c0_i32 = arith.constant 0 : i32
    %c0_i32_0 = arith.constant 0 : i32
    %c0_i32_1 = arith.constant 0 : i32
    return %c0_i32, %c0_i32_0 : i32, i32
  }
  func.func @transform_1(%arg0: i32) -> (i32, i32) {
    %c0_i32 = arith.constant 0 : i32
    %c0_i32_0 = arith.constant 0 : i32
    %c0_i32_1 = arith.constant 0 : i32
    return %c0_i32, %c0_i32_0 : i32, i32
  }
  func.func @transform_2(%arg0: i32) -> (i32, i32) {
    %c0_i32 = arith.constant 0 : i32
    %c0_i32_0 = arith.constant 0 : i32
    %c0_i32_1 = arith.constant 0 : i32
    return %c0_i32, %c0_i32_0 : i32, i32
  }
  func.func @transform_3(%arg0: i32) -> (i32, i32) {
    %c0_i32 = arith.constant 0 : i32
    %c0_i32_0 = arith.constant 0 : i32
    %c0_i32_1 = arith.constant 0 : i32
    return %c0_i32, %c0_i32_0 : i32, i32
  }
  func.func @transform_4(%arg0: i32) -> (i32, i32, i32) {
    %c0_i32 = arith.constant 0 : i32
    %c0_i32_0 = arith.constant 0 : i32
    %c0_i32_1 = arith.constant 0 : i32
    %c0_i32_2 = arith.constant 0 : i32
    return %c0_i32, %c0_i32_0, %c0_i32_1 : i32, i32, i32
  }
  func.func @transform_5(%arg0: i32) -> (i32, i32, i32) {
    %c0_i32 = arith.constant 0 : i32
    %c0_i32_0 = arith.constant 0 : i32
    %c0_i32_1 = arith.constant 0 : i32
    %c0_i32_2 = arith.constant 0 : i32
    return %c0_i32, %c0_i32_0, %c0_i32_1 : i32, i32, i32
  }
  func.func @transform_6(%arg0: i32) -> (i32, i32) {
    %c0_i32 = arith.constant 0 : i32
    %c0_i32_0 = arith.constant 0 : i32
    %c0_i32_1 = arith.constant 0 : i32
    return %c0_i32, %c0_i32_0 : i32, i32
  }
}

module attributes {stable_mosaic.version = 11 : i64} {
  func.func @_embed_kernel(%arg0: i32, %arg1: memref<16x128xf32, #tpu.memory_space<vmem>>, %arg2: memref<16x4xf32, #tpu.memory_space<vmem>>, %arg3: memref<128x64xbf16, #tpu.memory_space<vmem>>, %arg4: memref<4x64xbf16, #tpu.memory_space<vmem>>, %arg5: memref<1x64xf32, #tpu.memory_space<vmem>>, %arg6: memref<16x64xf32, #tpu.memory_space<vmem>>) attributes {dimension_semantics = [#tpu.dimension_semantics<arbitrary>], iteration_bounds = array<i64: 1>, scalar_prefetch = 0 : i64, scratch_operands = 0 : i64, tpu.core_type = #tpu.core_type<tc>, window_params = [{pipeline_mode = #tpu.pipeline_mode<synchronous>, transform_indices = @transform_0, window_bounds = array<i64: 16, 128>}, {pipeline_mode = #tpu.pipeline_mode<synchronous>, transform_indices = @transform_1, window_bounds = array<i64: 16, 4>}, {pipeline_mode = #tpu.pipeline_mode<synchronous>, transform_indices = @transform_2, window_bounds = array<i64: 128, 64>}, {pipeline_mode = #tpu.pipeline_mode<synchronous>, transform_indices = @transform_3, window_bounds = array<i64: 4, 64>}, {pipeline_mode = #tpu.pipeline_mode<synchronous>, transform_indices = @transform_4, window_bounds = array<i64: 1, 64>}, {pipeline_mode = #tpu.pipeline_mode<synchronous>, transform_indices = @transform_5, window_bounds = array<i64: 16, 64>}]} {
    %c0 = arith.constant 0 : index
    %c0_0 = arith.constant 0 : index
    %0 = vector.load %arg1[%c0, %c0_0] : memref<16x128xf32, #tpu.memory_space<vmem>>, vector<16x128xf32>
    %1 = arith.truncf %0 : vector<16x128xf32> to vector<16x128xbf16>
    %c0_1 = arith.constant 0 : index
    %c0_2 = arith.constant 0 : index
    %2 = vector.load %arg3[%c0_1, %c0_2] : memref<128x64xbf16, #tpu.memory_space<vmem>>, vector<128x64xbf16>
    %cst = arith.constant dense<0.000000e+00> : vector<16x64xf32>
    %3 = tpu.matmul %1, %2, %cst {dimension_numbers = #tpu.dot_dimension_numbers<[1], [0], [0], [1], [0, 0, 1, 1], [], []>} : vector<16x128xbf16>, vector<128x64xbf16>, vector<16x64xf32> -> vector<16x64xf32>
    %c0_3 = arith.constant 0 : index
    %c0_4 = arith.constant 0 : index
    %4 = vector.load %arg2[%c0_3, %c0_4] : memref<16x4xf32, #tpu.memory_space<vmem>>, vector<16x4xf32>
    %5 = arith.truncf %4 : vector<16x4xf32> to vector<16x4xbf16>
    %c0_5 = arith.constant 0 : index
    %c0_6 = arith.constant 0 : index
    %6 = vector.load %arg4[%c0_5, %c0_6] : memref<4x64xbf16, #tpu.memory_space<vmem>>, vector<4x64xbf16>
    %cst_7 = arith.constant dense<0.000000e+00> : vector<16x64xf32>
    %7 = tpu.matmul %5, %6, %cst_7 {dimension_numbers = #tpu.dot_dimension_numbers<[1], [0], [0], [1], [0, 0, 1, 1], [], []>} : vector<16x4xbf16>, vector<4x64xbf16>, vector<16x64xf32> -> vector<16x64xf32>
    %8 = arith.addf %3, %7 : vector<16x64xf32>
    %c0_8 = arith.constant 0 : index
    %c0_9 = arith.constant 0 : index
    %9 = vector.load %arg5[%c0_8, %c0_9] : memref<1x64xf32, #tpu.memory_space<vmem>>, vector<1x64xf32>
    %10 = vector.broadcast %9 : vector<1x64xf32> to vector<16x64xf32>
    %11 = arith.addf %8, %10 : vector<16x64xf32>
    %c0_10 = arith.constant 0 : index
    %c0_11 = arith.constant 0 : index
    %12 = vector.load %arg6[%c0_10, %c0_11] : memref<16x64xf32, #tpu.memory_space<vmem>>, vector<16x64xf32>
    tpu.vector_store %arg6[%c0_10, %c0_11], %11 {strides = array<i32>} : memref<16x64xf32, #tpu.memory_space<vmem>>, vector<16x64xf32>,
    return
  }
  func.func @transform_0(%arg0: i32) -> (i32, i32) {
    %c0_i32 = arith.constant 0 : i32
    %c0_i32_0 = arith.constant 0 : i32
    %c0_i32_1 = arith.constant 0 : i32
    return %c0_i32, %c0_i32_0 : i32, i32
  }
  func.func @transform_1(%arg0: i32) -> (i32, i32) {
    %c0_i32 = arith.constant 0 : i32
    %c0_i32_0 = arith.constant 0 : i32
    %c0_i32_1 = arith.constant 0 : i32
    return %c0_i32, %c0_i32_0 : i32, i32
  }
  func.func @transform_2(%arg0: i32) -> (i32, i32) {
    %c0_i32 = arith.constant 0 : i32
    %c0_i32_0 = arith.constant 0 : i32
    %c0_i32_1 = arith.constant 0 : i32
    return %c0_i32, %c0_i32_0 : i32, i32
  }
  func.func @transform_3(%arg0: i32) -> (i32, i32) {
    %c0_i32 = arith.constant 0 : i32
    %c0_i32_0 = arith.constant 0 : i32
    %c0_i32_1 = arith.constant 0 : i32
    return %c0_i32, %c0_i32_0 : i32, i32
  }
  func.func @transform_4(%arg0: i32) -> (i32, i32) {
    %c0_i32 = arith.constant 0 : i32
    %c0_i32_0 = arith.constant 0 : i32
    %c0_i32_1 = arith.constant 0 : i32
    return %c0_i32, %c0_i32_0 : i32, i32
  }
  func.func @transform_5(%arg0: i32) -> (i32, i32) {
    %c0_i32 = arith.constant 0 : i32
    %c0_i32_0 = arith.constant 0 : i32
    %c0_i32_1 = arith.constant 0 : i32
    return %c0_i32, %c0_i32_0 : i32, i32
  }
}

module attributes {stable_mosaic.version = 11 : i64} {
  func.func @_layers_kernel(%arg0: i32, %arg1: memref<16x64xf32, #tpu.memory_space<vmem>>, %arg2: memref<16x16xf32, #tpu.memory_space<vmem>>, %arg3: memref<16x16xf32, #tpu.memory_space<vmem>>, %arg4: memref<16x16xf32, #tpu.memory_space<vmem>>, %arg5: memref<1x1x64xf32, #tpu.memory_space<vmem>>, %arg6: memref<1x4x64x80xbf16, #tpu.memory_space<vmem>>, %arg7: memref<1x4x16x64xbf16, #tpu.memory_space<vmem>>, %arg8: memref<1x1x64xf32, #tpu.memory_space<vmem>>, %arg9: memref<1x64x256xbf16, #tpu.memory_space<vmem>>, %arg10: memref<1x128x64xbf16, #tpu.memory_space<vmem>>, %arg11: memref<16x64xf32, #tpu.memory_space<vmem>>) attributes {dimension_semantics = [#tpu.dimension_semantics<arbitrary>], iteration_bounds = array<i64: 2>, scalar_prefetch = 0 : i64, scratch_operands = 0 : i64, tpu.core_type = #tpu.core_type<tc>, window_params = [{pipeline_mode = #tpu.pipeline_mode<synchronous>, transform_indices = @transform_0, window_bounds = array<i64: 16, 64>}, {pipeline_mode = #tpu.pipeline_mode<synchronous>, transform_indices = @transform_1, window_bounds = array<i64: 16, 16>}, {pipeline_mode = #tpu.pipeline_mode<synchronous>, transform_indices = @transform_2, window_bounds = array<i64: 16, 16>}, {pipeline_mode = #tpu.pipeline_mode<synchronous>, transform_indices = @transform_3, window_bounds = array<i64: 16, 16>}, {transform_indices = @transform_4, window_bounds = array<i64: 1, 1, 64>}, {transform_indices = @transform_5, window_bounds = array<i64: 1, 4, 64, 80>}, {transform_indices = @transform_6, window_bounds = array<i64: 1, 4, 16, 64>}, {transform_indices = @transform_7, window_bounds = array<i64: 1, 1, 64>}, {transform_indices = @transform_8, window_bounds = array<i64: 1, 64, 256>}, {transform_indices = @transform_9, window_bounds = array<i64: 1, 128, 64>}, {pipeline_mode = #tpu.pipeline_mode<synchronous>, transform_indices = @transform_10, window_bounds = array<i64: 16, 64>}]} {
    %c0_i32 = arith.constant 0 : i32
    %0 = arith.cmpi eq, %arg0, %c0_i32 : i32
    %1 = arith.extui %0 : i1 to i32
    %c0_i32_0 = arith.constant 0 : i32
    %2 = arith.cmpi ne, %1, %c0_i32_0 : i32
    scf.if %2 {
      %c0_46 = arith.constant 0 : index
      %c0_47 = arith.constant 0 : index
      %105 = vector.load %arg1[%c0_46, %c0_47] : memref<16x64xf32, #tpu.memory_space<vmem>>, vector<16x64xf32>
      %c0_48 = arith.constant 0 : index
      %c0_49 = arith.constant 0 : index
      %106 = vector.load %arg11[%c0_48, %c0_49] : memref<16x64xf32, #tpu.memory_space<vmem>>, vector<16x64xf32>
      tpu.vector_store %arg11[%c0_48, %c0_49], %105 {strides = array<i32>} : memref<16x64xf32, #tpu.memory_space<vmem>>, vector<16x64xf32>,
    } else {
    }
    %c0 = arith.constant 0 : index
    %c0_1 = arith.constant 0 : index
    %3 = vector.load %arg11[%c0, %c0_1] : memref<16x64xf32, #tpu.memory_space<vmem>>, vector<16x64xf32>
    %c0_2 = arith.constant 0 : index
    %c0_3 = arith.constant 0 : index
    %c0_4 = arith.constant 0 : index
    %4 = vector.load %arg5[%c0_2, %c0_3, %c0_4] : memref<1x1x64xf32, #tpu.memory_space<vmem>>, vector<1x1x64xf32>
    %5 = vector.shape_cast %4 : vector<1x1x64xf32> to vector<1x64xf32>
    %6 = arith.mulf %3, %3 : vector<16x64xf32>
    %cst = arith.constant dense<0.000000e+00> : vector<16xf32>
    %7 = vector.multi_reduction <add>, %6, %cst [1] : vector<16x64xf32> to vector<16xf32>
    %8 = vector.shape_cast %7 : vector<16xf32> to vector<16x1xf32>
    %cst_5 = arith.constant 6.400000e+01 : f32
    %9 = vector.broadcast %cst_5 : f32 to vector<16x1xf32>
    %10 = arith.divf %8, %9 : vector<16x1xf32>
    %cst_6 = arith.constant 9.99999974E-6 : f32
    %11 = vector.broadcast %cst_6 : f32 to vector<16x1xf32>
    %12 = arith.addf %10, %11 : vector<16x1xf32>
    %13 = math.rsqrt %12 : vector<16x1xf32>
    %14 = vector.broadcast %13 : vector<16x1xf32> to vector<16x64xf32>
    %15 = arith.mulf %3, %14 : vector<16x64xf32>
    %16 = vector.broadcast %5 : vector<1x64xf32> to vector<16x64xf32>
    %17 = arith.mulf %15, %16 : vector<16x64xf32>
    %18 = arith.truncf %17 : vector<16x64xf32> to vector<16x64xbf16>
    %19 = vector.shape_cast %18 : vector<16x64xbf16> to vector<1x16x64xbf16>
    %20 = vector.shape_cast %19 : vector<1x16x64xbf16> to vector<1x16x64xbf16>
    %21 = vector.broadcast %20 : vector<1x16x64xbf16> to vector<4x16x64xbf16>
    %c0_7 = arith.constant 0 : index
    %c0_8 = arith.constant 0 : index
    %c0_9 = arith.constant 0 : index
    %c0_10 = arith.constant 0 : index
    %22 = vector.load %arg6[%c0_7, %c0_8, %c0_9, %c0_10] : memref<1x4x64x80xbf16, #tpu.memory_space<vmem>>, vector<1x4x64x80xbf16>
    %23 = vector.shape_cast %22 : vector<1x4x64x80xbf16> to vector<4x64x80xbf16>
    "tpu.trace_start"() <{level = 10 : i32, message = "hmd,hdc->hmc"}> : () -> ()
    %cst_11 = arith.constant dense<0.000000e+00> : vector<4x16x80xf32>
    %24 = tpu.matmul %21, %23, %cst_11 {dimension_numbers = #tpu.dot_dimension_numbers<[2], [1], [1], [2], [0, 0, 0, 1, 1, 2], [0], [0]>} : vector<4x16x64xbf16>, vector<4x64x80xbf16>, vector<4x16x80xf32> -> vector<4x16x80xf32>
    "tpu.trace_stop"() : () -> ()
    %c0_12 = arith.constant 0 : index
    %c0_13 = arith.constant 0 : index
    %25 = vector.load %arg2[%c0_12, %c0_13] : memref<16x16xf32, #tpu.memory_space<vmem>>, vector<16x16xf32>
    %26 = vector.shape_cast %25 : vector<16x16xf32> to vector<1x16x16xf32>
    %c0_14 = arith.constant 0 : index
    %c0_15 = arith.constant 0 : index
    %27 = vector.load %arg3[%c0_14, %c0_15] : memref<16x16xf32, #tpu.memory_space<vmem>>, vector<16x16xf32>
    %28 = vector.shape_cast %27 : vector<16x16xf32> to vector<1x16x16xf32>
    %29 = vector.extract_strided_slice %24 {offsets = [0, 0, 0], sizes = [4, 16, 16], strides = [1, 1, 1]} : vector<4x16x80xf32> to vector<4x16x16xf32>
    %30 = vector.broadcast %26 : vector<1x16x16xf32> to vector<4x16x16xf32>
    %31 = arith.mulf %29, %30 : vector<4x16x16xf32>
    %32 = vector.extract_strided_slice %24 {offsets = [0, 0, 48], sizes = [4, 16, 16], strides = [1, 1, 1]} : vector<4x16x80xf32> to vector<4x16x16xf32>
    %33 = vector.broadcast %28 : vector<1x16x16xf32> to vector<4x16x16xf32>
    %34 = arith.mulf %32, %33 : vector<4x16x16xf32>
    %35 = arith.addf %31, %34 : vector<4x16x16xf32>
    %cst_16 = arith.constant 2.500000e-01 : f32
    %36 = vector.broadcast %cst_16 : f32 to vector<4x16x16xf32>
    %37 = arith.mulf %35, %36 : vector<4x16x16xf32>
    %38 = vector.extract_strided_slice %24 {offsets = [0, 0, 16], sizes = [4, 16, 16], strides = [1, 1, 1]} : vector<4x16x80xf32> to vector<4x16x16xf32>
    %39 = vector.broadcast %26 : vector<1x16x16xf32> to vector<4x16x16xf32>
    %40 = arith.mulf %38, %39 : vector<4x16x16xf32>
    %41 = vector.extract_strided_slice %24 {offsets = [0, 0, 64], sizes = [4, 16, 16], strides = [1, 1, 1]} : vector<4x16x80xf32> to vector<4x16x16xf32>
    %42 = vector.broadcast %28 : vector<1x16x16xf32> to vector<4x16x16xf32>
    %43 = arith.mulf %41, %42 : vector<4x16x16xf32>
    %44 = arith.addf %40, %43 : vector<4x16x16xf32>
    %45 = vector.extract_strided_slice %24 {offsets = [0, 0, 32], sizes = [4, 16, 16], strides = [1, 1, 1]} : vector<4x16x80xf32> to vector<4x16x16xf32>
    %46 = arith.truncf %37 : vector<4x16x16xf32> to vector<4x16x16xbf16>
    %47 = arith.truncf %44 : vector<4x16x16xf32> to vector<4x16x16xbf16>
    "tpu.trace_start"() <{level = 10 : i32, message = "hmd,hnd->hmn"}> : () -> ()
    %cst_17 = arith.constant dense<0.000000e+00> : vector<4x16x16xf32>
    %48 = tpu.matmul %46, %47, %cst_17 {dimension_numbers = #tpu.dot_dimension_numbers<[2], [2], [1], [1], [0, 0, 0, 1, 1, 1], [0], [0]>} : vector<4x16x16xbf16>, vector<4x16x16xbf16>, vector<4x16x16xf32> -> vector<4x16x16xf32>
    "tpu.trace_stop"() : () -> ()
    %c0_18 = arith.constant 0 : index
    %c0_19 = arith.constant 0 : index
    %49 = vector.load %arg4[%c0_18, %c0_19] : memref<16x16xf32, #tpu.memory_space<vmem>>, vector<16x16xf32>
    %50 = vector.shape_cast %49 : vector<16x16xf32> to vector<1x16x16xf32>
    %51 = vector.broadcast %50 : vector<1x16x16xf32> to vector<4x16x16xf32>
    %52 = arith.addf %48, %51 : vector<4x16x16xf32>
    %cst_20 = arith.constant dense<0xFF800000> : vector<4x16xf32>
    %53 = vector.multi_reduction <maximumf>, %52, %cst_20 [2] : vector<4x16x16xf32> to vector<4x16xf32>
    %54 = vector.shape_cast %53 : vector<4x16xf32> to vector<4x16x1xf32>
    %55 = vector.broadcast %54 : vector<4x16x1xf32> to vector<4x16x16xf32>
    %56 = arith.subf %52, %55 : vector<4x16x16xf32>
    %57 = math.exp %56 : vector<4x16x16xf32>
    %cst_21 = arith.constant dense<0.000000e+00> : vector<4x16xf32>
    %58 = vector.multi_reduction <add>, %57, %cst_21 [2] : vector<4x16x16xf32> to vector<4x16xf32>
    %59 = vector.shape_cast %58 : vector<4x16xf32> to vector<4x16x1xf32>
    %60 = tpu.reciprocal %59 {approx = true} : vector<4x16x1xf32> -> vector<4x16x1xf32>
    %61 = vector.broadcast %60 : vector<4x16x1xf32> to vector<4x16x16xf32>
    %62 = arith.mulf %57, %61 : vector<4x16x16xf32>
    %63 = arith.truncf %62 : vector<4x16x16xf32> to vector<4x16x16xbf16>
    %64 = arith.truncf %45 : vector<4x16x16xf32> to vector<4x16x16xbf16>
    "tpu.trace_start"() <{level = 10 : i32, message = "hmn,hnd->hmd"}> : () -> ()
    %cst_22 = arith.constant dense<0.000000e+00> : vector<4x16x16xf32>
    %65 = tpu.matmul %63, %64, %cst_22 {dimension_numbers = #tpu.dot_dimension_numbers<[2], [1], [1], [2], [0, 0, 0, 1, 1, 2], [0], [0]>} : vector<4x16x16xbf16>, vector<4x16x16xbf16>, vector<4x16x16xf32> -> vector<4x16x16xf32>
    "tpu.trace_stop"() : () -> ()
    %66 = arith.truncf %65 : vector<4x16x16xf32> to vector<4x16x16xbf16>
    %c0_23 = arith.constant 0 : index
    %c0_24 = arith.constant 0 : index
    %c0_25 = arith.constant 0 : index
    %c0_26 = arith.constant 0 : index
    %67 = vector.load %arg7[%c0_23, %c0_24, %c0_25, %c0_26] : memref<1x4x16x64xbf16, #tpu.memory_space<vmem>>, vector<1x4x16x64xbf16>
    %68 = vector.shape_cast %67 : vector<1x4x16x64xbf16> to vector<4x16x64xbf16>
    "tpu.trace_start"() <{level = 10 : i32, message = "hmd,hdn->hmn"}> : () -> ()
    %cst_27 = arith.constant dense<0.000000e+00> : vector<4x16x64xf32>
    %69 = tpu.matmul %66, %68, %cst_27 {dimension_numbers = #tpu.dot_dimension_numbers<[2], [1], [1], [2], [0, 0, 0, 1, 1, 2], [0], [0]>} : vector<4x16x16xbf16>, vector<4x16x64xbf16>, vector<4x16x64xf32> -> vector<4x16x64xf32>
    "tpu.trace_stop"() : () -> ()
    %cst_28 = arith.constant dense<0.000000e+00> : vector<16x64xf32>
    %70 = vector.multi_reduction <add>, %69, %cst_28 [0] : vector<4x16x64xf32> to vector<16x64xf32>
    %71 = arith.addf %3, %70 : vector<16x64xf32>
    %c0_29 = arith.constant 0 : index
    %c0_30 = arith.constant 0 : index
    %c0_31 = arith.constant 0 : index
    %72 = vector.load %arg8[%c0_29, %c0_30, %c0_31] : memref<1x1x64xf32, #tpu.memory_space<vmem>>, vector<1x1x64xf32>
    %73 = vector.shape_cast %72 : vector<1x1x64xf32> to vector<1x64xf32>
    %74 = arith.mulf %71, %71 : vector<16x64xf32>
    %cst_32 = arith.constant dense<0.000000e+00> : vector<16xf32>
    %75 = vector.multi_reduction <add>, %74, %cst_32 [1] : vector<16x64xf32> to vector<16xf32>
    %76 = vector.shape_cast %75 : vector<16xf32> to vector<16x1xf32>
    %cst_33 = arith.constant 6.400000e+01 : f32
    %77 = vector.broadcast %cst_33 : f32 to vector<16x1xf32>
    %78 = arith.divf %76, %77 : vector<16x1xf32>
    %cst_34 = arith.constant 9.99999974E-6 : f32
    %79 = vector.broadcast %cst_34 : f32 to vector<16x1xf32>
    %80 = arith.addf %78, %79 : vector<16x1xf32>
    %81 = math.rsqrt %80 : vector<16x1xf32>
    %82 = vector.broadcast %81 : vector<16x1xf32> to vector<16x64xf32>
    %83 = arith.mulf %71, %82 : vector<16x64xf32>
    %84 = vector.broadcast %73 : vector<1x64xf32> to vector<16x64xf32>
    %85 = arith.mulf %83, %84 : vector<16x64xf32>
    %86 = arith.truncf %85 : vector<16x64xf32> to vector<16x64xbf16>
    %c0_35 = arith.constant 0 : index
    %c0_36 = arith.constant 0 : index
    %c0_37 = arith.constant 0 : index
    %87 = vector.load %arg9[%c0_35, %c0_36, %c0_37] : memref<1x64x256xbf16, #tpu.memory_space<vmem>>, vector<1x64x256xbf16>
    %88 = vector.shape_cast %87 : vector<1x64x256xbf16> to vector<64x256xbf16>
    %cst_38 = arith.constant dense<0.000000e+00> : vector<16x256xf32>
    %89 = tpu.matmul %86, %88, %cst_38 {dimension_numbers = #tpu.dot_dimension_numbers<[1], [0], [0], [1], [0, 0, 1, 1], [], []>} : vector<16x64xbf16>, vector<64x256xbf16>, vector<16x256xf32> -> vector<16x256xf32>
    %90 = vector.extract_strided_slice %89 {offsets = [0, 0], sizes = [16, 128], strides = [1, 1]} : vector<16x256xf32> to vector<16x128xf32>
    %91 = vector.extract_strided_slice %89 {offsets = [0, 128], sizes = [16, 128], strides = [1, 1]} : vector<16x256xf32> to vector<16x128xf32>
    %92 = arith.negf %90 : vector<16x128xf32>
    %93 = math.exp %92 : vector<16x128xf32>
    %cst_39 = arith.constant 1.000000e+00 : f32
    %94 = vector.broadcast %cst_39 : f32 to vector<16x128xf32>
    %95 = arith.addf %94, %93 : vector<16x128xf32>
    %96 = arith.divf %94, %95 : vector<16x128xf32>
    %97 = arith.mulf %90, %96 : vector<16x128xf32>
    %98 = arith.mulf %97, %91 : vector<16x128xf32>
    %99 = arith.truncf %98 : vector<16x128xf32> to vector<16x128xbf16>
    %c0_40 = arith.constant 0 : index
    %c0_41 = arith.constant 0 : index
    %c0_42 = arith.constant 0 : index
    %100 = vector.load %arg10[%c0_40, %c0_41, %c0_42] : memref<1x128x64xbf16, #tpu.memory_space<vmem>>, vector<1x128x64xbf16>
    %101 = vector.shape_cast %100 : vector<1x128x64xbf16> to vector<128x64xbf16>
    %cst_43 = arith.constant dense<0.000000e+00> : vector<16x64xf32>
    %102 = tpu.matmul %99, %101, %cst_43 {dimension_numbers = #tpu.dot_dimension_numbers<[1], [0], [0], [1], [0, 0, 1, 1], [], []>} : vector<16x128xbf16>, vector<128x64xbf16>, vector<16x64xf32> -> vector<16x64xf32>
    %103 = arith.addf %71, %102 : vector<16x64xf32>
    %c0_44 = arith.constant 0 : index
    %c0_45 = arith.constant 0 : index
    %104 = vector.load %arg11[%c0_44, %c0_45] : memref<16x64xf32, #tpu.memory_space<vmem>>, vector<16x64xf32>
    tpu.vector_store %arg11[%c0_44, %c0_45], %103 {strides = array<i32>} : memref<16x64xf32, #tpu.memory_space<vmem>>, vector<16x64xf32>,
    return
  }
  func.func @transform_0(%arg0: i32) -> (i32, i32) {
    %c0_i32 = arith.constant 0 : i32
    %c0_i32_0 = arith.constant 0 : i32
    %c0_i32_1 = arith.constant 0 : i32
    return %c0_i32, %c0_i32_0 : i32, i32
  }
  func.func @transform_1(%arg0: i32) -> (i32, i32) {
    %c0_i32 = arith.constant 0 : i32
    %c0_i32_0 = arith.constant 0 : i32
    %c0_i32_1 = arith.constant 0 : i32
    return %c0_i32, %c0_i32_0 : i32, i32
  }
  func.func @transform_2(%arg0: i32) -> (i32, i32) {
    %c0_i32 = arith.constant 0 : i32
    %c0_i32_0 = arith.constant 0 : i32
    %c0_i32_1 = arith.constant 0 : i32
    return %c0_i32, %c0_i32_0 : i32, i32
  }
  func.func @transform_3(%arg0: i32) -> (i32, i32) {
    %c0_i32 = arith.constant 0 : i32
    %c0_i32_0 = arith.constant 0 : i32
    %c0_i32_1 = arith.constant 0 : i32
    return %c0_i32, %c0_i32_0 : i32, i32
  }
  func.func @transform_4(%arg0: i32) -> (i32, i32, i32) {
    %c0_i32 = arith.constant 0 : i32
    %c0_i32_0 = arith.constant 0 : i32
    %c0_i32_1 = arith.constant 0 : i32
    return %arg0, %c0_i32, %c0_i32_0 : i32, i32, i32
  }
  func.func @transform_5(%arg0: i32) -> (i32, i32, i32, i32) {
    %c0_i32 = arith.constant 0 : i32
    %c0_i32_0 = arith.constant 0 : i32
    %c0_i32_1 = arith.constant 0 : i32
    %c0_i32_2 = arith.constant 0 : i32
    return %arg0, %c0_i32, %c0_i32_0, %c0_i32_1 : i32, i32, i32, i32
  }
  func.func @transform_6(%arg0: i32) -> (i32, i32, i32, i32) {
    %c0_i32 = arith.constant 0 : i32
    %c0_i32_0 = arith.constant 0 : i32
    %c0_i32_1 = arith.constant 0 : i32
    %c0_i32_2 = arith.constant 0 : i32
    return %arg0, %c0_i32, %c0_i32_0, %c0_i32_1 : i32, i32, i32, i32
  }
  func.func @transform_7(%arg0: i32) -> (i32, i32, i32) {
    %c0_i32 = arith.constant 0 : i32
    %c0_i32_0 = arith.constant 0 : i32
    %c0_i32_1 = arith.constant 0 : i32
    return %arg0, %c0_i32, %c0_i32_0 : i32, i32, i32
  }
  func.func @transform_8(%arg0: i32) -> (i32, i32, i32) {
    %c0_i32 = arith.constant 0 : i32
    %c0_i32_0 = arith.constant 0 : i32
    %c0_i32_1 = arith.constant 0 : i32
    return %arg0, %c0_i32, %c0_i32_0 : i32, i32, i32
  }
  func.func @transform_9(%arg0: i32) -> (i32, i32, i32) {
    %c0_i32 = arith.constant 0 : i32
    %c0_i32_0 = arith.constant 0 : i32
    %c0_i32_1 = arith.constant 0 : i32
    return %arg0, %c0_i32, %c0_i32_0 : i32, i32, i32
  }
  func.func @transform_10(%arg0: i32) -> (i32, i32) {
    %c0_i32 = arith.constant 0 : i32
    %c0_i32_0 = arith.constant 0 : i32
    %c0_i32_1 = arith.constant 0 : i32
    return %c0_i32, %c0_i32_0 : i32, i32
  }
}

module attributes {stable_mosaic.version = 11 : i64} {
  func.func @_head_kernel(%arg0: i32, %arg1: memref<6x64xf32, #tpu.memory_space<vmem>>, %arg2: memref<1x64xf32, #tpu.memory_space<vmem>>, %arg3: memref<64x128xbf16, #tpu.memory_space<vmem>>, %arg4: memref<1x128xf32, #tpu.memory_space<vmem>>, %arg5: memref<6x128xf32, #tpu.memory_space<vmem>>) attributes {dimension_semantics = [#tpu.dimension_semantics<arbitrary>], iteration_bounds = array<i64: 1>, scalar_prefetch = 0 : i64, scratch_operands = 0 : i64, tpu.core_type = #tpu.core_type<tc>, window_params = [{pipeline_mode = #tpu.pipeline_mode<synchronous>, transform_indices = @transform_0, window_bounds = array<i64: 6, 64>}, {pipeline_mode = #tpu.pipeline_mode<synchronous>, transform_indices = @transform_1, window_bounds = array<i64: 1, 64>}, {pipeline_mode = #tpu.pipeline_mode<synchronous>, transform_indices = @transform_2, window_bounds = array<i64: 64, 128>}, {pipeline_mode = #tpu.pipeline_mode<synchronous>, transform_indices = @transform_3, window_bounds = array<i64: 1, 128>}, {pipeline_mode = #tpu.pipeline_mode<synchronous>, transform_indices = @transform_4, window_bounds = array<i64: 6, 128>}]} {
    %c0 = arith.constant 0 : index
    %c0_0 = arith.constant 0 : index
    %0 = vector.load %arg1[%c0, %c0_0] : memref<6x64xf32, #tpu.memory_space<vmem>>, vector<6x64xf32>
    %c0_1 = arith.constant 0 : index
    %c0_2 = arith.constant 0 : index
    %1 = vector.load %arg2[%c0_1, %c0_2] : memref<1x64xf32, #tpu.memory_space<vmem>>, vector<1x64xf32>
    %2 = arith.mulf %0, %0 : vector<6x64xf32>
    %cst = arith.constant dense<0.000000e+00> : vector<6xf32>
    %3 = vector.multi_reduction <add>, %2, %cst [1] : vector<6x64xf32> to vector<6xf32>
    %4 = vector.shape_cast %3 : vector<6xf32> to vector<6x1xf32>
    %cst_3 = arith.constant 6.400000e+01 : f32
    %5 = vector.broadcast %cst_3 : f32 to vector<6x1xf32>
    %6 = arith.divf %4, %5 : vector<6x1xf32>
    %cst_4 = arith.constant 9.99999974E-6 : f32
    %7 = vector.broadcast %cst_4 : f32 to vector<6x1xf32>
    %8 = arith.addf %6, %7 : vector<6x1xf32>
    %9 = math.rsqrt %8 : vector<6x1xf32>
    %10 = vector.broadcast %9 : vector<6x1xf32> to vector<6x64xf32>
    %11 = arith.mulf %0, %10 : vector<6x64xf32>
    %12 = vector.broadcast %1 : vector<1x64xf32> to vector<6x64xf32>
    %13 = arith.mulf %11, %12 : vector<6x64xf32>
    %14 = arith.truncf %13 : vector<6x64xf32> to vector<6x64xbf16>
    %c0_5 = arith.constant 0 : index
    %c0_6 = arith.constant 0 : index
    %15 = vector.load %arg3[%c0_5, %c0_6] : memref<64x128xbf16, #tpu.memory_space<vmem>>, vector<64x128xbf16>
    %cst_7 = arith.constant dense<0.000000e+00> : vector<6x128xf32>
    %16 = tpu.matmul %14, %15, %cst_7 {dimension_numbers = #tpu.dot_dimension_numbers<[1], [0], [0], [1], [0, 0, 1, 1], [], []>} : vector<6x64xbf16>, vector<64x128xbf16>, vector<6x128xf32> -> vector<6x128xf32>
    %c0_8 = arith.constant 0 : index
    %c0_9 = arith.constant 0 : index
    %17 = vector.load %arg4[%c0_8, %c0_9] : memref<1x128xf32, #tpu.memory_space<vmem>>, vector<1x128xf32>
    %18 = vector.broadcast %17 : vector<1x128xf32> to vector<6x128xf32>
    %19 = arith.addf %16, %18 : vector<6x128xf32>
    %c0_10 = arith.constant 0 : index
    %c0_11 = arith.constant 0 : index
    %20 = vector.load %arg5[%c0_10, %c0_11] : memref<6x128xf32, #tpu.memory_space<vmem>>, vector<6x128xf32>
    tpu.vector_store %arg5[%c0_10, %c0_11], %19 {strides = array<i32>} : memref<6x128xf32, #tpu.memory_space<vmem>>, vector<6x128xf32>,
    return
  }
  func.func @transform_0(%arg0: i32) -> (i32, i32) {
    %c0_i32 = arith.constant 0 : i32
    %c0_i32_0 = arith.constant 0 : i32
    %c0_i32_1 = arith.constant 0 : i32
    return %c0_i32, %c0_i32_0 : i32, i32
  }
  func.func @transform_1(%arg0: i32) -> (i32, i32) {
    %c0_i32 = arith.constant 0 : i32
    %c0_i32_0 = arith.constant 0 : i32
    %c0_i32_1 = arith.constant 0 : i32
    return %c0_i32, %c0_i32_0 : i32, i32
  }
  func.func @transform_2(%arg0: i32) -> (i32, i32) {
    %c0_i32 = arith.constant 0 : i32
    %c0_i32_0 = arith.constant 0 : i32
    %c0_i32_1 = arith.constant 0 : i32
    return %c0_i32, %c0_i32_0 : i32, i32
  }
  func.func @transform_3(%arg0: i32) -> (i32, i32) {
    %c0_i32 = arith.constant 0 : i32
    %c0_i32_0 = arith.constant 0 : i32
    %c0_i32_1 = arith.constant 0 : i32
    return %c0_i32, %c0_i32_0 : i32, i32
  }
  func.func @transform_4(%arg0: i32) -> (i32, i32) {
    %c0_i32 = arith.constant 0 : i32
    %c0_i32_0 = arith.constant 0 : i32
    %c0_i32_1 = arith.constant 0 : i32
    return %c0_i32, %c0_i32_0 : i32, i32
  }
}

</mosaic_0001>

<llo_original>
// kernel: model_forward.5
$region0: #{model_forward.5}
  #allocation0 [shape = 'u32[]', space=smem, size = 0x4, offset = 0x4, fixed_abs, tag = 'smem constant byte address 0x4 - core index']
  #allocation1 [shape = 'u32[144,128]{1,0:T(1,128)}', space=vmem, size = 0x12000, scoped, tag = 'internal scratch']
  %s0 = inlined_call_operand.vmem [shape: f32[16,128], index: 0, kind: input, shape index: {}]
  %s1 = inlined_call_operand.vmem [shape: f32[16,4], index: 1, kind: input, shape index: {}]
  %s2 = inlined_call_operand.vmem [shape: bf16[128,64], index: 2, kind: input, shape index: {}]
  %s3 = inlined_call_operand.vmem [shape: bf16[4,64], index: 3, kind: input, shape index: {}]
  %s4 = inlined_call_operand.vmem [shape: f32[1,64], index: 4, kind: input, shape index: {}]
  %s5 = inlined_call_operand.vmem [shape: f32[16,64], index: 5, kind: output, shape index: {}]
  %s6 = sld [smem:[#allocation0]]
  $region30: #{model_forward.5} parent=0
    _
  %s8 = ssub.s32 1, %s6
  %s9 = scalar_select 0, %s8, %s6
  // Predicated region
  $region2: #{model_forward.5} parent=0 // pred_check
    _
  $region3: #{model_forward.5} parent=0 // pred_check_branch
    %11 = sbr.rel (0) target = $region5
  $region4: #{model_forward.5} parent=0 // pred_region
    _
  $region5: #{model_forward.5} parent=0 // pred_fallthru
    _
  // Predicated region
  $region6: #{model_forward.5} parent=0 // pred_check
    _
  $region7: #{model_forward.5} parent=0 // pred_check_branch
    %13 = sbr.rel (0) target = $region9
  $region8: #{model_forward.5} parent=0 // pred_region
    _
  $region9: #{model_forward.5} parent=0 // pred_fallthru
    _
  // Predicated region
  $region10: #{model_forward.5} parent=0 // pred_check
    _
  $region11: #{model_forward.5} parent=0 // pred_check_branch
    %15 = sbr.rel (0) target = $region13
  $region12: #{model_forward.5} parent=0 // pred_region
    _
  $region13: #{model_forward.5} parent=0 // pred_fallthru
    _
  // Predicated region
  $region14: #{model_forward.5} parent=0 // pred_check
    _
  $region15: #{model_forward.5} parent=0 // pred_check_branch
    %17 = sbr.rel (0) target = $region17
  $region16: #{model_forward.5} parent=0 // pred_region
    _
  $region17: #{model_forward.5} parent=0 // pred_fallthru
    _
  // Predicated region
  $region18: #{model_forward.5} parent=0 // pred_check
    _
  $region19: #{model_forward.5} parent=0 // pred_check_branch
    %19 = sbr.rel (0) target = $region21
  $region20: #{model_forward.5} parent=0 // pred_region
    _
  $region21: #{model_forward.5} parent=0 // pred_fallthru
    _
  %v21 = vld [vmem:[%s0] sm:$0xff]
  %v22 = vld [vmem:[%s0 + $0x8] sm:$0xff]
  %v23 = vpack.c.bf16 %v22, %v21
  %v24 = vld [vmem:[%s2] sm:$0xf]
  %v25 = vld [vmem:[%s2 + $0x4] sm:$0xf]
  %v26 = vld [vmem:[%s2 + $0x8] sm:$0xf]
  %v27 = vld [vmem:[%s2 + $0xc] sm:$0xf]
  %v28 = vld [vmem:[%s2 + $0x10] sm:$0xf]
  %v29 = vld [vmem:[%s2 + $0x14] sm:$0xf]
  %v30 = vld [vmem:[%s2 + $0x18] sm:$0xf]
  %v31 = vld [vmem:[%s2 + $0x1c] sm:$0xf]
  %v32 = vld [vmem:[%s2 + $0x20] sm:$0xf]
  %v33 = vld [vmem:[%s2 + $0x24] sm:$0xf]
  %v34 = vld [vmem:[%s2 + $0x28] sm:$0xf]
  %v35 = vld [vmem:[%s2 + $0x2c] sm:$0xf]
  %v36 = vld [vmem:[%s2 + $0x30] sm:$0xf]
  %v37 = vld [vmem:[%s2 + $0x34] sm:$0xf]
  %v38 = vld [vmem:[%s2 + $0x38] sm:$0xf]
  %v39 = vld [vmem:[%s2 + $0x3c] sm:$0xf]
  %v40 = vld [vmem:[%s1] sm:$0xff]
  %v41 = vld [vmem:[%s1 + $0x8] sm:$0xff]
  %v42 = vpack.c.bf16 %v41, %v40
  %v43 = vld [vmem:[%s3] sm:$0x3]
  %vm44 = vcmask 31744
  %v46 = vsel %vm44, %v42, 0
  %vm48 = vcmask 1041408
  %v50 = vsel %vm48, %v43, 0
  %52 = vmatprep.subr.bf16.mxu0 0
  %53 = vmatpush1.bf16.msra.mxu0 0
  %54 = vmatprep.subr.bf16.mxu0 0
  %55 = vmatpush1.bf16.msra.mxu0 0
  %56 = vmatprep.subr.bf16.mxu0 0
  %57 = vmatpush1.bf16.msra.mxu0 0
  %58 = vmatprep.subr.bf16.mxu0 0
  %59 = vmatpush1.bf16.msra.mxu0 0
  %60 = vmatprep.subr.bf16.mxu0 0
  %61 = vmatpush1.bf16.msra.mxu0 0
  %62 = vmatprep.subr.bf16.mxu0 0
  %63 = vmatpush1.bf16.msra.mxu0 0
  %64 = vmatprep.subr.bf16.mxu0 0
  %65 = vmatpush1.bf16.msra.mxu0 0
  %66 = vmatprep.subr.bf16.mxu0 0
  %67 = vmatpush1.bf16.msra.mxu0 %v50
  %68 = vmatprep.subr.bf16.mxu0 0
  %69 = vmatpush2.bf16.msra.mxu0 0
  %70 = vmatprep.subr.bf16.mxu0 0
  %71 = vmatpush2.bf16.msra.mxu0 0
  %72 = vmatprep.subr.bf16.mxu0 0
  %73 = vmatpush2.bf16.msra.mxu0 0
  %74 = vmatprep.subr.bf16.mxu0 0
  %75 = vmatpush2.bf16.msra.mxu0 0
  %76 = vmatprep.subr.bf16.mxu0 0
  %77 = vmatpush2.bf16.msra.mxu0 0
  %78 = vmatprep.subr.bf16.mxu0 0
  %79 = vmatpush2.bf16.msra.mxu0 0
  %80 = vmatprep.subr.bf16.mxu0 0
  %81 = vmatpush2.bf16.msra.mxu0 0
  %82 = vmatprep.subr.bf16.mxu0 0
  %83 = vmatpush2.bf16.msra.mxu0 0
  %84 = vmatprep.mubr.bf16.mxu0 0
  %85 = vmatmul.mubr.bf16.gmra.mxu0 %v46
  %v86 = vpop.f32.mrf.mxu0
  %v87 = vadd.f32 0.0, %v86
  %v88 = vpop.f32.mrf.mxu0
  %v89 = vpop.f32.mrf.mxu0
  %v90 = vadd.f32 0.0, %v89
  %v91 = vpop.f32.mrf.mxu0
  %92 = vdwg.mxu0
  %v109 = vunpack.c.l.b16 %v24
  %v110 = vunpack.c.l.b16 %v25
  %v111 = vunpack.c.l.b16 %v26
  %v112 = vunpack.c.l.b16 %v27
  %v113 = vunpack.c.l.b16 %v28
  %v114 = vunpack.c.l.b16 %v29
  %v115 = vunpack.c.l.b16 %v30
  %v116 = vunpack.c.l.b16 %v31
  %v117 = vunpack.c.l.b16 %v32
  %v118 = vunpack.c.l.b16 %v33
  %v119 = vunpack.c.l.b16 %v34
  %v120 = vunpack.c.l.b16 %v35
  %v121 = vunpack.c.l.b16 %v36
  %v122 = vunpack.c.l.b16 %v37
  %v123 = vunpack.c.l.b16 %v38
  %v124 = vunpack.c.l.b16 %v39
  %v125 = vpack.c.b16 %v110, %v109
  %v126 = vpack.c.b16 %v112, %v111
  %v127 = vpack.c.b16 %v114, %v113
  %v128 = vpack.c.b16 %v116, %v115
  %v129 = vpack.c.b16 %v118, %v117
  %v130 = vpack.c.b16 %v120, %v119
  %v131 = vpack.c.b16 %v122, %v121
  %v132 = vpack.c.b16 %v124, %v123
  %141 = vmatprep.subr.bf16.mxu0 0
  %142 = vmatpush1.bf16.msra.mxu0 %v132
  %143 = vmatprep.subr.bf16.mxu0 0
  %144 = vmatpush1.bf16.msra.mxu0 %v131
  %145 = vmatprep.subr.bf16.mxu0 0
  %146 = vmatpush1.bf16.msra.mxu0 %v130
  %147 = vmatprep.subr.bf16.mxu0 0
  %148 = vmatpush1.bf16.msra.mxu0 %v129
  %149 = vmatprep.subr.bf16.mxu0 0
  %150 = vmatpush1.bf16.msra.mxu0 %v128
  %151 = vmatprep.subr.bf16.mxu0 0
  %152 = vmatpush1.bf16.msra.mxu0 %v127
  %153 = vmatprep.subr.bf16.mxu0 0
  %154 = vmatpush1.bf16.msra.mxu0 %v126
  %155 = vmatprep.subr.bf16.mxu0 0
  %156 = vmatpush1.bf16.msra.mxu0 %v125
  %157 = vmatprep.subr.bf16.mxu0 0
  %158 = vmatpush2.bf16.msra.mxu0 0
  %159 = vmatprep.subr.bf16.mxu0 0
  %160 = vmatpush2.bf16.msra.mxu0 0
  %161 = vmatprep.subr.bf16.mxu0 0
  %162 = vmatpush2.bf16.msra.mxu0 0
  %163 = vmatprep.subr.bf16.mxu0 0
  %164 = vmatpush2.bf16.msra.mxu0 0
  %165 = vmatprep.subr.bf16.mxu0 0
  %166 = vmatpush2.bf16.msra.mxu0 0
  %167 = vmatprep.subr.bf16.mxu0 0
  %168 = vmatpush2.bf16.msra.mxu0 0
  %169 = vmatprep.subr.bf16.mxu0 0
  %170 = vmatpush2.bf16.msra.mxu0 0
  %171 = vmatprep.subr.bf16.mxu0 0
  %172 = vmatpush2.bf16.msra.mxu0 0
  %173 = vmatprep.mubr.bf16.mxu0 0
  %174 = vmatmul.mubr.bf16.gmra.mxu0 %v23
  %v175 = vpop.f32.mrf.mxu0
  %v176 = vadd.f32 %v87, %v175
  %v177 = vpop.f32.mrf.mxu0
  %v178 = vpop.f32.mrf.mxu0
  %v179 = vadd.f32 %v90, %v178
  %v180 = vpop.f32.mrf.mxu0
  %181 = vdwg.mxu0
  %v182 = vld [vmem:[%s4] sm:$0x1]
  %v184 = vlaneseq
  %v185 = vshrl.u32 %v184, 7
  %v186 = vsub.s32 0, %v185
  %v187 = vrot.slane %v182, %v186
  %v189 = vadd.f32 %v176, %v187
  %v190 = vadd.f32 %v179, %v187
  %vm191 = vcmask 523264
  %192 = vst.msk [vmem:[%s5] sm:$0xff] %vm191, %v189
  %193 = vst.msk [vmem:[%s5 + $0x8] sm:$0xff] %vm191, %v190
  // Predicated region
  $region22: #{model_forward.5} parent=0 // pred_check
    _
  $region23: #{model_forward.5} parent=0 // pred_check_branch
    %195 = sbr.rel (0) target = $region25
  $region24: #{model_forward.5} parent=0 // pred_region
    _
  $region25: #{model_forward.5} parent=0 // pred_fallthru
    _
  // Predicated region
  $region26: #{model_forward.5} parent=0 // pred_check
    _
  $region27: #{model_forward.5} parent=0 // pred_check_branch
    %197 = sbr.rel (0) target = $region29
  $region28: #{model_forward.5} parent=0 // pred_region
    _
  $region29: #{model_forward.5} parent=0 // pred_fallthru
    _

// kernel: model_forward.7
$region0: #{model_forward.7}
  #allocation0 [shape = 'u32[]', space=smem, size = 0x4, offset = 0x4, fixed_abs, tag = 'smem constant byte address 0x4 - core index']
  #allocation1 [shape = 'u32[144,128]{1,0:T(1,128)}', space=vmem, size = 0x12000, scoped, tag = 'internal scratch']
  %s0 = inlined_call_operand.vmem [shape: f32[6,64], index: 0, kind: input, shape index: {}]
  %s1 = inlined_call_operand.vmem [shape: f32[1,64], index: 1, kind: input, shape index: {}]
  %s2 = inlined_call_operand.vmem [shape: bf16[64,128], index: 2, kind: input, shape index: {}]
  %s3 = inlined_call_operand.vmem [shape: f32[1,128], index: 3, kind: input, shape index: {}]
  %s4 = inlined_call_operand.vmem [shape: f32[6,128], index: 4, kind: output, shape index: {}]
  %s5 = sld [smem:[#allocation0]]
  $region26: #{model_forward.7} parent=0
    _
  %s7 = ssub.s32 1, %s5
  %s8 = scalar_select 0, %s7, %s5
  // Predicated region
  $region2: #{model_forward.7} parent=0 // pred_check
    _
  $region3: #{model_forward.7} parent=0 // pred_check_branch
    %10 = sbr.rel (0) target = $region5
  $region4: #{model_forward.7} parent=0 // pred_region
    _
  $region5: #{model_forward.7} parent=0 // pred_fallthru
    _
  // Predicated region
  $region6: #{model_forward.7} parent=0 // pred_check
    _
  $region7: #{model_forward.7} parent=0 // pred_check_branch
    %12 = sbr.rel (0) target = $region9
  $region8: #{model_forward.7} parent=0 // pred_region
    _
  $region9: #{model_forward.7} parent=0 // pred_fallthru
    _
  // Predicated region
  $region10: #{model_forward.7} parent=0 // pred_check
    _
  $region11: #{model_forward.7} parent=0 // pred_check_branch
    %14 = sbr.rel (0) target = $region13
  $region12: #{model_forward.7} parent=0 // pred_region
    _
  $region13: #{model_forward.7} parent=0 // pred_fallthru
    _
  // Predicated region
  $region14: #{model_forward.7} parent=0 // pred_check
    _
  $region15: #{model_forward.7} parent=0 // pred_check_branch
    %16 = sbr.rel (0) target = $region17
  $region16: #{model_forward.7} parent=0 // pred_region
    _
  $region17: #{model_forward.7} parent=0 // pred_fallthru
    _
  %v18 = vld [vmem:[%s0] sm:$0x3f]
  %v19 = vld [vmem:[%s1] sm:$0x1]
  %v20 = vmul.f32 %v18, %v18
  %vm21 = vcmask 521216
  %v22 = vsel %vm21, %v20, 0.0
  %23 = vadd.xlane.f32.xlu0 %v22
  %v24 = vpop.xlane.xlu0 %23
  %v25 = vrcp.pop 64.0
  %v26 = vmul.f32 %v24, %v25
  %v27 = vadd.f32 %v26, 1e-05
  %v28 = vrsqrt.pop %v27
  %v29 = vmul.f32 %v18, %v28
  %v31 = vlaneseq
  %v32 = vshrl.u32 %v31, 7
  %v33 = vsub.s32 0, %v32
  %v34 = vrot.slane %v19, %v33
  %v36 = vmul.f32 %v29, %v34
  %v37 = vpack.c.bf16 %v36, %v36
  %v38 = vld [vmem:[%s2] sm:$0xf]
  %v39 = vld [vmem:[%s2 + $0x4] sm:$0xf]
  %v40 = vld [vmem:[%s2 + $0x8] sm:$0xf]
  %v41 = vld [vmem:[%s2 + $0xc] sm:$0xf]
  %v42 = vld [vmem:[%s2 + $0x10] sm:$0xf]
  %v43 = vld [vmem:[%s2 + $0x14] sm:$0xf]
  %v44 = vld [vmem:[%s2 + $0x18] sm:$0xf]
  %v45 = vld [vmem:[%s2 + $0x1c] sm:$0xf]
  %v46 = vld [vmem:[%s3] sm:$0x1]
  %v48 = vlaneseq
  %v49 = vshrl.u32 %v48, 7
  %v50 = vsub.s32 0, %v49
  %v51 = vrot.slane %v46, %v50
  %v61 = vunpack.c.l.b16 %v38
  %v62 = vunpack.c.l.b16 %v39
  %v63 = vunpack.c.l.b16 %v40
  %v64 = vunpack.c.l.b16 %v41
  %v65 = vunpack.c.l.b16 %v42
  %v66 = vunpack.c.l.b16 %v43
  %v67 = vunpack.c.l.b16 %v44
  %v68 = vunpack.c.l.b16 %v45
  %v69 = vpack.c.b16 %v62, %v61
  %v70 = vpack.c.b16 %v64, %v63
  %v71 = vpack.c.b16 %v66, %v65
  %v72 = vpack.c.b16 %v68, %v67
  %vm77 = vcmask 523264
  %v79 = vsel %vm77, %v37, 0
  %81 = vmatprep.subr.bf16.mxu0 0
  %82 = vmatpush1.bf16.msra.mxu0 0
  %83 = vmatprep.subr.bf16.mxu0 0
  %84 = vmatpush1.bf16.msra.mxu0 0
  %85 = vmatprep.subr.bf16.mxu0 0
  %86 = vmatpush1.bf16.msra.mxu0 0
  %87 = vmatprep.subr.bf16.mxu0 0
  %88 = vmatpush1.bf16.msra.mxu0 0
  %89 = vmatprep.subr.bf16.mxu0 0
  %90 = vmatpush1.bf16.msra.mxu0 %v72
  %91 = vmatprep.subr.bf16.mxu0 0
  %92 = vmatpush1.bf16.msra.mxu0 %v71
  %93 = vmatprep.subr.bf16.mxu0 0
  %94 = vmatpush1.bf16.msra.mxu0 %v70
  %95 = vmatprep.subr.bf16.mxu0 0
  %96 = vmatpush1.bf16.msra.mxu0 %v69
  %97 = vmatprep.subr.bf16.mxu0 0
  %98 = vmatpush2.bf16.msra.mxu0 0
  %99 = vmatprep.subr.bf16.mxu0 0
  %100 = vmatpush2.bf16.msra.mxu0 0
  %101 = vmatprep.subr.bf16.mxu0 0
  %102 = vmatpush2.bf16.msra.mxu0 0
  %103 = vmatprep.subr.bf16.mxu0 0
  %104 = vmatpush2.bf16.msra.mxu0 0
  %105 = vmatprep.subr.bf16.mxu0 0
  %106 = vmatpush2.bf16.msra.mxu0 0
  %107 = vmatprep.subr.bf16.mxu0 0
  %108 = vmatpush2.bf16.msra.mxu0 0
  %109 = vmatprep.subr.bf16.mxu0 0
  %110 = vmatpush2.bf16.msra.mxu0 0
  %111 = vmatprep.subr.bf16.mxu0 0
  %112 = vmatpush2.bf16.msra.mxu0 0
  %113 = vmatprep.mubr.bf16.mxu0 0
  %114 = vmatmul.mubr.bf16.gmra.mxu0 %v79
  %v115 = vpop.f32.mrf.mxu0
  %v116 = vadd.f32 %v51, %v115
  %v117 = vpop.f32.mrf.mxu0
  %v118 = vpop.f32.mrf.mxu0
  %v119 = vpop.f32.mrf.mxu0
  %120 = vdwg.mxu0
  %121 = vst [vmem:[%s4] sm:$0x3f] %v116
  // Predicated region
  $region18: #{model_forward.7} parent=0 // pred_check
    _
  $region19: #{model_forward.7} parent=0 // pred_check_branch
    %123 = sbr.rel (0) target = $region21
  $region20: #{model_forward.7} parent=0 // pred_region
    _
  $region21: #{model_forward.7} parent=0 // pred_fallthru
    _
  // Predicated region
  $region22: #{model_forward.7} parent=0 // pred_check
    _
  $region23: #{model_forward.7} parent=0 // pred_check_branch
    %125 = sbr.rel (0) target = $region25
  $region24: #{model_forward.7} parent=0 // pred_region
    _
  $region25: #{model_forward.7} parent=0 // pred_fallthru
    _

// kernel: model_forward.6
$region0: #{model_forward.6}
  #allocation0 [shape = 'u32[]', space=smem, size = 0x4, offset = 0x4, fixed_abs, tag = 'smem constant byte address 0x4 - core index']
  #allocation1 [shape = 'u32[144,128]{1,0:T(1,128)}', space=vmem, size = 0x12000, scoped, tag = 'internal scratch']
  %s0 = inlined_call_operand.vmem [shape: f32[16,64], index: 0, kind: input, shape index: {}]
  %s1 = inlined_call_operand.vmem [shape: f32[16,16], index: 1, kind: input, shape index: {}]
  %s2 = inlined_call_operand.vmem [shape: f32[16,16], index: 2, kind: input, shape index: {}]
  %s3 = inlined_call_operand.vmem [shape: f32[16,16], index: 3, kind: input, shape index: {}]
  %s4 = inlined_call_operand.vmem [shape: f32[2,1,64], index: 4, kind: input, shape index: {}]
  %s5 = inlined_call_operand.vmem [shape: bf16[2,4,64,80], index: 5, kind: input, shape index: {}]
  %s6 = inlined_call_operand.vmem [shape: bf16[2,4,16,64], index: 6, kind: input, shape index: {}]
  %s7 = inlined_call_operand.vmem [shape: f32[2,1,64], index: 7, kind: input, shape index: {}]
  %s8 = inlined_call_operand.vmem [shape: bf16[2,64,256], index: 8, kind: input, shape index: {}]
  %s9 = inlined_call_operand.vmem [shape: bf16[2,128,64], index: 9, kind: input, shape index: {}]
  %s10 = inlined_call_operand.vmem [shape: f32[16,64], index: 10, kind: output, shape index: {}]
  %s11 = sld [smem:[#allocation0]]
  $region77: #{model_forward.6} parent=0
    _
  %s13 = ssub.s32 1, %s11
  %s14 = scalar_select 0, %s13, %s11
  loop: start=0, step=1, limit=4
  $region2: #{model_forward.6} parent=0 // loop_pre_header
    _
  $region3: #{model_forward.6} parent=0 // loop_header
    %s16 = sphi 0, %s20
    %p17 = scmp.ge.s32.totalorder %s16, 4
    %s24 = sphi 0, %s24
    %s26 = sphi 0, %s24
    %s27 = sphi 0, %s26
    %s41 = sphi 0, %s27
    %s45 = sphi 0, %s45
    %s47 = sphi 0, %s45
    %s48 = sphi 0, %s47
    %s62 = sphi 0, %s48
    %s66 = sphi 0, %s66
    %s68 = sphi 0, %s66
    %s69 = sphi 0, %s68
    %s83 = sphi 0, %s69
    %s87 = sphi 0, %s87
    %s89 = sphi 0, %s87
    %s90 = sphi 0, %s89
    %s104 = sphi 0, %s90
    %s110 = sphi 0, %s112
    %s113 = sphi 0, %s110
    %s114 = sphi 0, %s113
    %s130 = sphi 0, %s114
    %s136 = sphi 0, %s138
    %s139 = sphi 0, %s136
    %s140 = sphi 0, %s139
    %s156 = sphi 0, %s140
    %s162 = sphi 0, %s164
    %s165 = sphi 0, %s162
    %s166 = sphi 0, %s165
    %s182 = sphi 0, %s166
    %s188 = sphi 0, %s190
    %s191 = sphi 0, %s188
    %s192 = sphi 0, %s191
    %s208 = sphi 0, %s192
    %s214 = sphi 0, %s216
    %s217 = sphi 0, %s214
    %s218 = sphi 0, %s217
    %s234 = sphi 0, %s218
    %s240 = sphi 0, %s242
    %s243 = sphi 0, %s240
    %s244 = sphi 0, %s243
    %s260 = sphi 0, %s244
    %s264 = sphi 0, %s264
    %s266 = sphi 0, %s264
    %s267 = sphi 0, %s266
    %s281 = sphi 0, %s267
  $region4: #{model_forward.6} parent=0 // loop_header_branch
    %19 = sbr.rel (%p17) target = $region8
  $region5: #{model_forward.6} parent=0 // loop_body
    %s21 = ssub.s32 %s16, 1
    %s22 = ssub.s32 %s16, 2
    %s23 = sadd.s32 %s16, 1
    %s25 = sadd.s32 %s24, 1
    %p28 = scmp.eq.s32.totalorder %s16, 1
    %p29 = scmp.ne.s32.totalorder %s24, %s26
    %p30 = scmp.eq.s32.totalorder %s16, 0
    %p31 = por %p29, %p30
    %p32 = scmp.ne.s32.totalorder %s24, %s26
    %p33 = scmp.eq.s32.totalorder %s21, 1
    %p34 = por %p32, %p33
    %p35 = scmp.ne.s32.totalorder %s26, %s27
    %p36 = scmp.eq.s32.totalorder %s21, 0
    %p37 = por %p35, %p36
    %p38 = scmp.ne.s32.totalorder %s26, %s27
    %p39 = scmp.eq.s32.totalorder %s22, 1
    %p40 = por %p38, %p39
    %p42 = scmp.ne.s32.totalorder %s27, %s41
    %p43 = scmp.eq.s32.totalorder %s22, 0
    %p44 = por %p42, %p43
    %s46 = sadd.s32 %s45, 1
    %p49 = scmp.eq.s32.totalorder %s16, 1
    %p50 = scmp.ne.s32.totalorder %s45, %s47
    %p51 = scmp.eq.s32.totalorder %s16, 0
    %p52 = por %p50, %p51
    %p53 = scmp.ne.s32.totalorder %s45, %s47
    %p54 = scmp.eq.s32.totalorder %s21, 1
    %p55 = por %p53, %p54
    %p56 = scmp.ne.s32.totalorder %s47, %s48
    %p57 = scmp.eq.s32.totalorder %s21, 0
    %p58 = por %p56, %p57
    %p59 = scmp.ne.s32.totalorder %s47, %s48
    %p60 = scmp.eq.s32.totalorder %s22, 1
    %p61 = por %p59, %p60
    %p63 = scmp.ne.s32.totalorder %s48, %s62
    %p64 = scmp.eq.s32.totalorder %s22, 0
    %p65 = por %p63, %p64
    %s67 = sadd.s32 %s66, 1
    %p70 = scmp.eq.s32.totalorder %s16, 1
    %p71 = scmp.ne.s32.totalorder %s66, %s68
    %p72 = scmp.eq.s32.totalorder %s16, 0
    %p73 = por %p71, %p72
    %p74 = scmp.ne.s32.totalorder %s66, %s68
    %p75 = scmp.eq.s32.totalorder %s21, 1
    %p76 = por %p74, %p75
    %p77 = scmp.ne.s32.totalorder %s68, %s69
    %p78 = scmp.eq.s32.totalorder %s21, 0
    %p79 = por %p77, %p78
    %p80 = scmp.ne.s32.totalorder %s68, %s69
    %p81 = scmp.eq.s32.totalorder %s22, 1
    %p82 = por %p80, %p81
    %p84 = scmp.ne.s32.totalorder %s69, %s83
    %p85 = scmp.eq.s32.totalorder %s22, 0
    %p86 = por %p84, %p85
    %s88 = sadd.s32 %s87, 1
    %p91 = scmp.eq.s32.totalorder %s16, 1
    %p92 = scmp.ne.s32.totalorder %s87, %s89
    %p93 = scmp.eq.s32.totalorder %s16, 0
    %p94 = por %p92, %p93
    %p95 = scmp.ne.s32.totalorder %s87, %s89
    %p96 = scmp.eq.s32.totalorder %s21, 1
    %p97 = por %p95, %p96
    %p98 = scmp.ne.s32.totalorder %s89, %s90
    %p99 = scmp.eq.s32.totalorder %s21, 0
    %p100 = por %p98, %p99
    %p101 = scmp.ne.s32.totalorder %s89, %s90
    %p102 = scmp.eq.s32.totalorder %s22, 1
    %p103 = por %p101, %p102
    %p105 = scmp.ne.s32.totalorder %s90, %s104
    %p106 = scmp.eq.s32.totalorder %s22, 0
    %p107 = por %p105, %p106
    %s108 = ssub.s32 %s16, %s23
    %p109 = scmp.eq.s32.totalorder %s108, 0
    %s111 = sadd.s32 %s110, 1
    %s112 = scalar_select %p109, %s110, %s111
    %p115 = pneg %p109
    %p116 = scmp.eq.s32.totalorder %s16, 1
    %p117 = por %p115, %p116
    %p118 = scmp.ne.s32.totalorder %s110, %s113
    %p119 = scmp.eq.s32.totalorder %s16, 0
    %p120 = por %p118, %p119
    %p121 = scmp.ne.s32.totalorder %s110, %s113
    %p122 = scmp.eq.s32.totalorder %s21, 1
    %p123 = por %p121, %p122
    %p124 = scmp.ne.s32.totalorder %s113, %s114
    %p125 = scmp.eq.s32.totalorder %s21, 0
    %p126 = por %p124, %p125
    %p127 = scmp.ne.s32.totalorder %s113, %s114
    %p128 = scmp.eq.s32.totalorder %s22, 1
    %p129 = por %p127, %p128
    %p131 = scmp.ne.s32.totalorder %s114, %s130
    %p132 = scmp.eq.s32.totalorder %s22, 0
    %p133 = por %p131, %p132
    %s134 = ssub.s32 %s16, %s23
    %p135 = scmp.eq.s32.totalorder %s134, 0
    %s137 = sadd.s32 %s136, 1
    %s138 = scalar_select %p135, %s136, %s137
    %p141 = pneg %p135
    %p142 = scmp.eq.s32.totalorder %s16, 1
    %p143 = por %p141, %p142
    %p144 = scmp.ne.s32.totalorder %s136, %s139
    %p145 = scmp.eq.s32.totalorder %s16, 0
    %p146 = por %p144, %p145
    %p147 = scmp.ne.s32.totalorder %s136, %s139
    %p148 = scmp.eq.s32.totalorder %s21, 1
    %p149 = por %p147, %p148
    %p150 = scmp.ne.s32.totalorder %s139, %s140
    %p151 = scmp.eq.s32.totalorder %s21, 0
    %p152 = por %p150, %p151
    %p153 = scmp.ne.s32.totalorder %s139, %s140
    %p154 = scmp.eq.s32.totalorder %s22, 1
    %p155 = por %p153, %p154
    %p157 = scmp.ne.s32.totalorder %s140, %s156
    %p158 = scmp.eq.s32.totalorder %s22, 0
    %p159 = por %p157, %p158
    %s160 = ssub.s32 %s16, %s23
    %p161 = scmp.eq.s32.totalorder %s160, 0
    %s163 = sadd.s32 %s162, 1
    %s164 = scalar_select %p161, %s162, %s163
    %p167 = pneg %p161
    %p168 = scmp.eq.s32.totalorder %s16, 1
    %p169 = por %p167, %p168
    %p170 = scmp.ne.s32.totalorder %s162, %s165
    %p171 = scmp.eq.s32.totalorder %s16, 0
    %p172 = por %p170, %p171
    %p173 = scmp.ne.s32.totalorder %s162, %s165
    %p174 = scmp.eq.s32.totalorder %s21, 1
    %p175 = por %p173, %p174
    %p176 = scmp.ne.s32.totalorder %s165, %s166
    %p177 = scmp.eq.s32.totalorder %s21, 0
    %p178 = por %p176, %p177
    %p179 = scmp.ne.s32.totalorder %s165, %s166
    %p180 = scmp.eq.s32.totalorder %s22, 1
    %p181 = por %p179, %p180
    %p183 = scmp.ne.s32.totalorder %s166, %s182
    %p184 = scmp.eq.s32.totalorder %s22, 0
    %p185 = por %p183, %p184
    %s186 = ssub.s32 %s16, %s23
    %p187 = scmp.eq.s32.totalorder %s186, 0
    %s189 = sadd.s32 %s188, 1
    %s190 = scalar_select %p187, %s188, %s189
    %p193 = pneg %p187
    %p194 = scmp.eq.s32.totalorder %s16, 1
    %p195 = por %p193, %p194
    %p196 = scmp.ne.s32.totalorder %s188, %s191
    %p197 = scmp.eq.s32.totalorder %s16, 0
    %p198 = por %p196, %p197
    %p199 = scmp.ne.s32.totalorder %s188, %s191
    %p200 = scmp.eq.s32.totalorder %s21, 1
    %p201 = por %p199, %p200
    %p202 = scmp.ne.s32.totalorder %s191, %s192
    %p203 = scmp.eq.s32.totalorder %s21, 0
    %p204 = por %p202, %p203
    %p205 = scmp.ne.s32.totalorder %s191, %s192
    %p206 = scmp.eq.s32.totalorder %s22, 1
    %p207 = por %p205, %p206
    %p209 = scmp.ne.s32.totalorder %s192, %s208
    %p210 = scmp.eq.s32.totalorder %s22, 0
    %p211 = por %p209, %p210
    %s212 = ssub.s32 %s16, %s23
    %p213 = scmp.eq.s32.totalorder %s212, 0
    %s215 = sadd.s32 %s214, 1
    %s216 = scalar_select %p213, %s214, %s215
    %p219 = pneg %p213
    %p220 = scmp.eq.s32.totalorder %s16, 1
    %p221 = por %p219, %p220
    %p222 = scmp.ne.s32.totalorder %s214, %s217
    %p223 = scmp.eq.s32.totalorder %s16, 0
    %p224 = por %p222, %p223
    %p225 = scmp.ne.s32.totalorder %s214, %s217
    %p226 = scmp.eq.s32.totalorder %s21, 1
    %p227 = por %p225, %p226
    %p228 = scmp.ne.s32.totalorder %s217, %s218
    %p229 = scmp.eq.s32.totalorder %s21, 0
    %p230 = por %p228, %p229
    %p231 = scmp.ne.s32.totalorder %s217, %s218
    %p232 = scmp.eq.s32.totalorder %s22, 1
    %p233 = por %p231, %p232
    %p235 = scmp.ne.s32.totalorder %s218, %s234
    %p236 = scmp.eq.s32.totalorder %s22, 0
    %p237 = por %p235, %p236
    %s238 = ssub.s32 %s16, %s23
    %p239 = scmp.eq.s32.totalorder %s238, 0
    %s241 = sadd.s32 %s240, 1
    %s242 = scalar_select %p239, %s240, %s241
    %p245 = pneg %p239
    %p246 = scmp.eq.s32.totalorder %s16, 1
    %p247 = por %p245, %p246
    %p248 = scmp.ne.s32.totalorder %s240, %s243
    %p249 = scmp.eq.s32.totalorder %s16, 0
    %p250 = por %p248, %p249
    %p251 = scmp.ne.s32.totalorder %s240, %s243
    %p252 = scmp.eq.s32.totalorder %s21, 1
    %p253 = por %p251, %p252
    %p254 = scmp.ne.s32.totalorder %s243, %s244
    %p255 = scmp.eq.s32.totalorder %s21, 0
    %p256 = por %p254, %p255
    %p257 = scmp.ne.s32.totalorder %s243, %s244
    %p258 = scmp.eq.s32.totalorder %s22, 1
    %p259 = por %p257, %p258
    %p261 = scmp.ne.s32.totalorder %s244, %s260
    %p262 = scmp.eq.s32.totalorder %s22, 0
    %p263 = por %p261, %p262
    %s265 = sadd.s32 %s264, 1
    %p268 = scmp.eq.s32.totalorder %s16, 1
    %p269 = scmp.ne.s32.totalorder %s264, %s266
    %p270 = scmp.eq.s32.totalorder %s16, 0
    %p271 = por %p269, %p270
    %p272 = scmp.ne.s32.totalorder %s264, %s266
    %p273 = scmp.eq.s32.totalorder %s21, 1
    %p274 = por %p272, %p273
    %p275 = scmp.ne.s32.totalorder %s266, %s267
    %p276 = scmp.eq.s32.totalorder %s21, 0
    %p277 = por %p275, %p276
    %p278 = scmp.ne.s32.totalorder %s266, %s267
    %p279 = scmp.eq.s32.totalorder %s22, 1
    %p280 = por %p278, %p279
    %p282 = scmp.ne.s32.totalorder %s267, %s281
    %p283 = scmp.eq.s32.totalorder %s22, 0
    %p284 = por %p282, %p283
    %p285 = scmp.le.s32.totalorder 1, %s16
    %p286 = scmp.lt.s32.totalorder %s16, 3
    %p287 = pnand %p285, %p286
    %p288 = pneg %p287
    // Predicated region
    $region9: #{model_forward.6} parent=5 // pred_check
      _
    $region10: #{model_forward.6} parent=5 // pred_check_branch
      %290 = sbr.rel (%p287) target = $region12
    $region11: #{model_forward.6} parent=5 // pred_region
      %s291 = ssub.s32 %s16, 1
      // Predicated region
      $region13: #{model_forward.6} parent=11 // pred_check
        %p292 = pneg %p37
      $region14: #{model_forward.6} parent=11 // pred_check_branch
        %294 = sbr.rel (%p292) target = $region16
      $region15: #{model_forward.6} parent=11 // pred_region
        _
      $region16: #{model_forward.6} parent=11 // pred_fallthru
        _
      // Predicated region
      $region17: #{model_forward.6} parent=11 // pred_check
        %p295 = pneg %p58
      $region18: #{model_forward.6} parent=11 // pred_check_branch
        %297 = sbr.rel (%p295) target = $region20
      $region19: #{model_forward.6} parent=11 // pred_region
        _
      $region20: #{model_forward.6} parent=11 // pred_fallthru
        _
      // Predicated region
      $region21: #{model_forward.6} parent=11 // pred_check
        %p298 = pneg %p79
      $region22: #{model_forward.6} parent=11 // pred_check_branch
        %300 = sbr.rel (%p298) target = $region24
      $region23: #{model_forward.6} parent=11 // pred_region
        _
      $region24: #{model_forward.6} parent=11 // pred_fallthru
        _
      // Predicated region
      $region25: #{model_forward.6} parent=11 // pred_check
        %p301 = pneg %p100
      $region26: #{model_forward.6} parent=11 // pred_check_branch
        %303 = sbr.rel (%p301) target = $region28
      $region27: #{model_forward.6} parent=11 // pred_region
        _
      $region28: #{model_forward.6} parent=11 // pred_fallthru
        _
    $region12: #{model_forward.6} parent=5 // pred_fallthru
      _
    %p304 = scmp.lt.s32.totalorder %s16, 2
    // Predicated region
    $region29: #{model_forward.6} parent=5 // pred_check
      %p305 = pneg %p304
    $region30: #{model_forward.6} parent=5 // pred_check_branch
      %307 = sbr.rel (%p305) target = $region32
    $region31: #{model_forward.6} parent=5 // pred_region
      // Predicated region
      $region33: #{model_forward.6} parent=31 // pred_check
        %p308 = pneg %p120
      $region34: #{model_forward.6} parent=31 // pred_check_branch
        %310 = sbr.rel (%p308) target = $region36
      $region35: #{model_forward.6} parent=31 // pred_region
        %p311 = scmp.lt.s32.totalorder %s16, 1
        %s312 = scalar_select %p311, %s16, 1
        %s313 = scalar_lea.vmem %s4, %s312
      $region36: #{model_forward.6} parent=31 // pred_fallthru
        _
      // Predicated region
      $region37: #{model_forward.6} parent=31 // pred_check
        %p314 = pneg %p146
      $region38: #{model_forward.6} parent=31 // pred_check_branch
        %316 = sbr.rel (%p314) target = $region40
      $region39: #{model_forward.6} parent=31 // pred_region
        %p317 = scmp.lt.s32.totalorder %s16, 1
        %s318 = scalar_select %p317, %s16, 1
        %s319 = smul.addr %s318, 32
        %s320 = smul.addr %s319, 4
        %s321 = scalar_lea.vmem %s5, %s320
      $region40: #{model_forward.6} parent=31 // pred_fallthru
        _
      // Predicated region
      $region41: #{model_forward.6} parent=31 // pred_check
        %p322 = pneg %p172
      $region42: #{model_forward.6} parent=31 // pred_check_branch
        %324 = sbr.rel (%p322) target = $region44
      $region43: #{model_forward.6} parent=31 // pred_region
        %p325 = scmp.lt.s32.totalorder %s16, 1
        %s326 = scalar_select %p325, %s16, 1
        %s327 = smul.addr %s326, 8
        %s328 = smul.addr %s327, 4
        %s329 = scalar_lea.vmem %s6, %s328
      $region44: #{model_forward.6} parent=31 // pred_fallthru
        _
      // Predicated region
      $region45: #{model_forward.6} parent=31 // pred_check
        %p330 = pneg %p198
      $region46: #{model_forward.6} parent=31 // pred_check_branch
        %332 = sbr.rel (%p330) target = $region48
      $region47: #{model_forward.6} parent=31 // pred_region
        %p333 = scmp.lt.s32.totalorder %s16, 1
        %s334 = scalar_select %p333, %s16, 1
        %s335 = scalar_lea.vmem %s7, %s334
      $region48: #{model_forward.6} parent=31 // pred_fallthru
        _
      // Predicated region
      $region49: #{model_forward.6} parent=31 // pred_check
        %p336 = pneg %p224
      $region50: #{model_forward.6} parent=31 // pred_check_branch
        %338 = sbr.rel (%p336) target = $region52
      $region51: #{model_forward.6} parent=31 // pred_region
        %p339 = scmp.lt.s32.totalorder %s16, 1
        %s340 = scalar_select %p339, %s16, 1
        %s341 = smul.addr %s340, 16
        %s342 = smul.addr %s341, 4
        %s343 = scalar_lea.vmem %s8, %s342
      $region52: #{model_forward.6} parent=31 // pred_fallthru
        _
      // Predicated region
      $region53: #{model_forward.6} parent=31 // pred_check
        %p344 = pneg %p250
      $region54: #{model_forward.6} parent=31 // pred_check_branch
        %346 = sbr.rel (%p344) target = $region56
      $region55: #{model_forward.6} parent=31 // pred_region
        %p347 = scmp.lt.s32.totalorder %s16, 1
        %s348 = scalar_select %p347, %s16, 1
        %s349 = smul.addr %s348, 16
        %s350 = smul.addr %s349, 4
        %s351 = scalar_lea.vmem %s9, %s350
      $region56: #{model_forward.6} parent=31 // pred_fallthru
        _
    $region32: #{model_forward.6} parent=5 // pred_fallthru
      _
    %p352 = scmp.le.s32.totalorder 1, %s16
    %p353 = scmp.lt.s32.totalorder %s16, 3
    %p354 = pnand %p352, %p353
    %p355 = pneg %p354
    // Predicated region
    $region57: #{model_forward.6} parent=5 // pred_check
      _
    $region58: #{model_forward.6} parent=5 // pred_check_branch
      %357 = sbr.rel (%p354) target = $region60
    $region59: #{model_forward.6} parent=5 // pred_region
      %s358 = ssub.s32 %s16, 1
      %p359 = pneg %p37
      %p360 = pneg %p34
      %p361 = pneg %p58
      %p362 = pneg %p55
      %p363 = pneg %p79
      %p364 = pneg %p76
      %p365 = pneg %p100
      %p366 = pneg %p97
      %p367 = scmp.lt.s32.totalorder %s21, 1
      %s368 = scalar_select %p367, %s21, 1
      %s369 = scalar_lea.vmem %s4, %s368
      %p370 = pneg %p126
      %p371 = pneg %p123
      %p372 = scmp.lt.s32.totalorder %s21, 1
      %s373 = scalar_select %p372, %s21, 1
      %s374 = smul.addr %s373, 32
      %s375 = smul.addr %s374, 4
      %s376 = scalar_lea.vmem %s5, %s375
      %p377 = pneg %p152
      %p378 = pneg %p149
      %p379 = scmp.lt.s32.totalorder %s21, 1
      %s380 = scalar_select %p379, %s21, 1
      %s381 = smul.addr %s380, 8
      %s382 = smul.addr %s381, 4
      %s383 = scalar_lea.vmem %s6, %s382
      %p384 = pneg %p178
      %p385 = pneg %p175
      %p386 = scmp.lt.s32.totalorder %s21, 1
      %s387 = scalar_select %p386, %s21, 1
      %s388 = scalar_lea.vmem %s7, %s387
      %p389 = pneg %p204
      %p390 = pneg %p201
      %p391 = scmp.lt.s32.totalorder %s21, 1
      %s392 = scalar_select %p391, %s21, 1
      %s393 = smul.addr %s392, 16
      %s394 = smul.addr %s393, 4
      %s395 = scalar_lea.vmem %s8, %s394
      %p396 = pneg %p230
      %p397 = pneg %p227
      %p398 = scmp.lt.s32.totalorder %s21, 1
      %s399 = scalar_select %p398, %s21, 1
      %s400 = smul.addr %s399, 16
      %s401 = smul.addr %s400, 4
      %s402 = scalar_lea.vmem %s9, %s401
      %p403 = pneg %p256
      %p404 = pneg %p253
      %p405 = pneg %p277
      %p406 = pneg %p274
      %p407 = scmp.lt.s32.totalorder %s21, 1
      %s408 = scalar_select %p407, %s21, 1
      %s409 = scalar_lea.vmem %s4, %s408
      %p410 = scmp.lt.s32.totalorder %s21, 1
      %s411 = scalar_select %p410, %s21, 1
      %s412 = smul.addr %s411, 32
      %s413 = smul.addr %s412, 4
      %s414 = scalar_lea.vmem %s5, %s413
      %p415 = scmp.lt.s32.totalorder %s21, 1
      %s416 = scalar_select %p415, %s21, 1
      %s417 = smul.addr %s416, 8
      %s418 = smul.addr %s417, 4
      %s419 = scalar_lea.vmem %s6, %s418
      %p420 = scmp.lt.s32.totalorder %s21, 1
      %s421 = scalar_select %p420, %s21, 1
      %s422 = scalar_lea.vmem %s7, %s421
      %p423 = scmp.lt.s32.totalorder %s21, 1
      %s424 = scalar_select %p423, %s21, 1
      %s425 = smul.addr %s424, 16
      %s426 = smul.addr %s425, 4
      %s427 = scalar_lea.vmem %s8, %s426
      %p428 = scmp.lt.s32.totalorder %s21, 1
      %s429 = scalar_select %p428, %s21, 1
      %s430 = smul.addr %s429, 16
      %s431 = smul.addr %s430, 4
      %s432 = scalar_lea.vmem %s9, %s431
      %p434 = scmp.eq.s32.totalorder %s21, 0
      // Predicated region
      $region61: #{model_forward.6} parent=59 // pred_check
        %p435 = pneg %p434
      $region62: #{model_forward.6} parent=59 // pred_check_branch
        %437 = sbr.rel (%p435) target = $region64
      $region63: #{model_forward.6} parent=59 // pred_region
        %v438 = vld [vmem:[%s0] sm:$0xff]
        %v439 = vld [vmem:[%s0 + $0x8] sm:$0xff]
        %vm440 = vcmask 523264
        %441 = vst.msk [vmem:[%s10] sm:$0xff] %vm440, %v438
        %442 = vst.msk [vmem:[%s10 + $0x8] sm:$0xff] %vm440, %v439
      $region64: #{model_forward.6} parent=59 // pred_fallthru
        _
      %v443 = vld [vmem:[%s10] sm:$0xff]
      %v444 = vld [vmem:[%s10 + $0x8] sm:$0xff]
      %v445 = vld [vmem:[%s409] sm:$0x1]
      %v446 = vmul.f32 %v443, %v443
      %v447 = vmul.f32 %v444, %v444
      %vm448 = vcmask 523264
      %v449 = vsel %vm448, %v446, 0.0
      %450 = vadd.xlane.f32.xlu0 %v449
      %v451 = vpop.xlane.xlu0 %450
      %v452 = vsel %vm448, %v447, 0.0
      %453 = vadd.xlane.f32.xlu0 %v452
      %v454 = vpop.xlane.xlu0 %453
      %v455 = vrcp.pop 64.0
      %v456 = vmul.f32 %v451, %v455
      %v457 = vmul.f32 %v454, %v455
      %v458 = vadd.f32 %v456, 1e-05
      %v459 = vadd.f32 %v457, 1e-05
      %v460 = vrsqrt.pop %v458
      %v461 = vrsqrt.pop %v459
      %v462 = vmul.f32 %v443, %v460
      %v463 = vmul.f32 %v444, %v461
      %v465 = vlaneseq
      %v466 = vshrl.u32 %v465, 7
      %v467 = vsub.s32 0, %v466
      %v468 = vrot.slane %v445, %v467
      %v470 = vmul.f32 %v462, %v468
      %v471 = vmul.f32 %v463, %v468
      %v472 = vpack.c.bf16 %v471, %v470
      %v473 = vld [vmem:[%s414] sm:$0xf]
      %v474 = vld [vmem:[%s414 + $0x4] sm:$0xf]
      %v475 = vld [vmem:[%s414 + $0x8] sm:$0xf]
      %v476 = vld [vmem:[%s414 + $0xc] sm:$0xf]
      %v477 = vld [vmem:[%s414 + $0x10] sm:$0xf]
      %v478 = vld [vmem:[%s414 + $0x14] sm:$0xf]
      %v479 = vld [vmem:[%s414 + $0x18] sm:$0xf]
      %v480 = vld [vmem:[%s414 + $0x1c] sm:$0xf]
      %v481 = vld [vmem:[%s414 + $0x20] sm:$0xf]
      %v482 = vld [vmem:[%s414 + $0x24] sm:$0xf]
      %v483 = vld [vmem:[%s414 + $0x28] sm:$0xf]
      %v484 = vld [vmem:[%s414 + $0x2c] sm:$0xf]
      %v485 = vld [vmem:[%s414 + $0x30] sm:$0xf]
      %v486 = vld [vmem:[%s414 + $0x34] sm:$0xf]
      %v487 = vld [vmem:[%s414 + $0x38] sm:$0xf]
      %v488 = vld [vmem:[%s414 + $0x3c] sm:$0xf]
      %v489 = vld [vmem:[%s414 + $0x40] sm:$0xf]
      %v490 = vld [vmem:[%s414 + $0x44] sm:$0xf]
      %v491 = vld [vmem:[%s414 + $0x48] sm:$0xf]
      %v492 = vld [vmem:[%s414 + $0x4c] sm:$0xf]
      %v493 = vld [vmem:[%s414 + $0x50] sm:$0xf]
      %v494 = vld [vmem:[%s414 + $0x54] sm:$0xf]
      %v495 = vld [vmem:[%s414 + $0x58] sm:$0xf]
      %v496 = vld [vmem:[%s414 + $0x5c] sm:$0xf]
      %v497 = vld [vmem:[%s414 + $0x60] sm:$0xf]
      %v498 = vld [vmem:[%s414 + $0x64] sm:$0xf]
      %v499 = vld [vmem:[%s414 + $0x68] sm:$0xf]
      %v500 = vld [vmem:[%s414 + $0x6c] sm:$0xf]
      %v501 = vld [vmem:[%s414 + $0x70] sm:$0xf]
      %v502 = vld [vmem:[%s414 + $0x74] sm:$0xf]
      %v503 = vld [vmem:[%s414 + $0x78] sm:$0xf]
      %v504 = vld [vmem:[%s414 + $0x7c] sm:$0xf]
      %v513 = vunpack.c.l.b16 %v473
      %v514 = vunpack.c.l.b16 %v474
      %v515 = vunpack.c.l.b16 %v475
      %v516 = vunpack.c.l.b16 %v476
      %v517 = vunpack.c.l.b16 %v477
      %v518 = vunpack.c.l.b16 %v478
      %v519 = vunpack.c.l.b16 %v479
      %v520 = vunpack.c.l.b16 %v480
      %v521 = vpack.c.b16 %v514, %v513
      %v522 = vpack.c.b16 %v516, %v515
      %v523 = vpack.c.b16 %v518, %v517
      %v524 = vpack.c.b16 %v520, %v519
      %v530 = vsel %vm448, %v472, 0
      %532 = vmatprep.subr.bf16.mxu0 0
      %533 = vmatpush1.bf16.msra.mxu0 0
      %534 = vmatprep.subr.bf16.mxu0 0
      %535 = vmatpush1.bf16.msra.mxu0 0
      %536 = vmatprep.subr.bf16.mxu0 0
      %537 = vmatpush1.bf16.msra.mxu0 0
      %538 = vmatprep.subr.bf16.mxu0 0
      %539 = vmatpush1.bf16.msra.mxu0 0
      %540 = vmatprep.subr.bf16.mxu0 0
      %541 = vmatpush1.bf16.msra.mxu0 %v524
      %542 = vmatprep.subr.bf16.mxu0 0
      %543 = vmatpush1.bf16.msra.mxu0 %v523
      %544 = vmatprep.subr.bf16.mxu0 0
      %545 = vmatpush1.bf16.msra.mxu0 %v522
      %546 = vmatprep.subr.bf16.mxu0 0
      %547 = vmatpush1.bf16.msra.mxu0 %v521
      %548 = vmatprep.subr.bf16.mxu0 0
      %549 = vmatpush2.bf16.msra.mxu0 0
      %550 = vmatprep.subr.bf16.mxu0 0
      %551 = vmatpush2.bf16.msra.mxu0 0
      %552 = vmatprep.subr.bf16.mxu0 0
      %553 = vmatpush2.bf16.msra.mxu0 0
      %554 = vmatprep.subr.bf16.mxu0 0
      %555 = vmatpush2.bf16.msra.mxu0 0
      %556 = vmatprep.subr.bf16.mxu0 0
      %557 = vmatpush2.bf16.msra.mxu0 0
      %558 = vmatprep.subr.bf16.mxu0 0
      %559 = vmatpush2.bf16.msra.mxu0 0
      %560 = vmatprep.subr.bf16.mxu0 0
      %561 = vmatpush2.bf16.msra.mxu0 0
      %562 = vmatprep.subr.bf16.mxu0 0
      %563 = vmatpush2.bf16.msra.mxu0 0
      %564 = vmatprep.mubr.bf16.mxu0 0
      %565 = vmatmul.mubr.bf16.gmra.mxu0 %v530
      %v566 = vpop.f32.mrf.mxu0
      %v567 = vadd.f32 0.0, %v566
      %v568 = vpop.f32.mrf.mxu0
      %v569 = vpop.f32.mrf.mxu0
      %v570 = vadd.f32 0.0, %v569
      %v571 = vpop.f32.mrf.mxu0
      %572 = vdwg.mxu0
      %v581 = vunpack.c.l.b16 %v481
      %v582 = vunpack.c.l.b16 %v482
      %v583 = vunpack.c.l.b16 %v483
      %v584 = vunpack.c.l.b16 %v484
      %v585 = vunpack.c.l.b16 %v485
      %v586 = vunpack.c.l.b16 %v486
      %v587 = vunpack.c.l.b16 %v487
      %v588 = vunpack.c.l.b16 %v488
      %v589 = vpack.c.b16 %v582, %v581
      %v590 = vpack.c.b16 %v584, %v583
      %v591 = vpack.c.b16 %v586, %v585
      %v592 = vpack.c.b16 %v588, %v587
      %597 = vmatprep.subr.bf16.mxu0 0
      %598 = vmatpush1.bf16.msra.mxu0 0
      %599 = vmatprep.subr.bf16.mxu0 0
      %600 = vmatpush1.bf16.msra.mxu0 0
      %601 = vmatprep.subr.bf16.mxu0 0
      %602 = vmatpush1.bf16.msra.mxu0 0
      %603 = vmatprep.subr.bf16.mxu0 0
      %604 = vmatpush1.bf16.msra.mxu0 0
      %605 = vmatprep.subr.bf16.mxu0 0
      %606 = vmatpush1.bf16.msra.mxu0 %v592
      %607 = vmatprep.subr.bf16.mxu0 0
      %608 = vmatpush1.bf16.msra.mxu0 %v591
      %609 = vmatprep.subr.bf16.mxu0 0
      %610 = vmatpush1.bf16.msra.mxu0 %v590
      %611 = vmatprep.subr.bf16.mxu0 0
      %612 = vmatpush1.bf16.msra.mxu0 %v589
      %613 = vmatprep.subr.bf16.mxu0 0
      %614 = vmatpush2.bf16.msra.mxu0 0
      %615 = vmatprep.subr.bf16.mxu0 0
      %616 = vmatpush2.bf16.msra.mxu0 0
      %617 = vmatprep.subr.bf16.mxu0 0
      %618 = vmatpush2.bf16.msra.mxu0 0
      %619 = vmatprep.subr.bf16.mxu0 0
      %620 = vmatpush2.bf16.msra.mxu0 0
      %621 = vmatprep.subr.bf16.mxu0 0
      %622 = vmatpush2.bf16.msra.mxu0 0
      %623 = vmatprep.subr.bf16.mxu0 0
      %624 = vmatpush2.bf16.msra.mxu0 0
      %625 = vmatprep.subr.bf16.mxu0 0
      %626 = vmatpush2.bf16.msra.mxu0 0
      %627 = vmatprep.subr.bf16.mxu0 0
      %628 = vmatpush2.bf16.msra.mxu0 0
      %629 = vmatprep.mubr.bf16.mxu0 0
      %630 = vmatmul.mubr.bf16.gmra.mxu0 %v530
      %v631 = vpop.f32.mrf.mxu0
      %v632 = vadd.f32 0.0, %v631
      %v633 = vpop.f32.mrf.mxu0
      %v634 = vpop.f32.mrf.mxu0
      %v635 = vadd.f32 0.0, %v634
      %v636 = vpop.f32.mrf.mxu0
      %637 = vdwg.mxu0
      %v646 = vunpack.c.l.b16 %v489
      %v647 = vunpack.c.l.b16 %v490
      %v648 = vunpack.c.l.b16 %v491
      %v649 = vunpack.c.l.b16 %v492
      %v650 = vunpack.c.l.b16 %v493
      %v651 = vunpack.c.l.b16 %v494
      %v652 = vunpack.c.l.b16 %v495
      %v653 = vunpack.c.l.b16 %v496
      %v654 = vpack.c.b16 %v647, %v646
      %v655 = vpack.c.b16 %v649, %v648
      %v656 = vpack.c.b16 %v651, %v650
      %v657 = vpack.c.b16 %v653, %v652
      %662 = vmatprep.subr.bf16.mxu0 0
      %663 = vmatpush1.bf16.msra.mxu0 0
      %664 = vmatprep.subr.bf16.mxu0 0
      %665 = vmatpush1.bf16.msra.mxu0 0
      %666 = vmatprep.subr.bf16.mxu0 0
      %667 = vmatpush1.bf16.msra.mxu0 0
      %668 = vmatprep.subr.bf16.mxu0 0
      %669 = vmatpush1.bf16.msra.mxu0 0
      %670 = vmatprep.subr.bf16.mxu0 0
      %671 = vmatpush1.bf16.msra.mxu0 %v657
      %672 = vmatprep.subr.bf16.mxu0 0
      %673 = vmatpush1.bf16.msra.mxu0 %v656
      %674 = vmatprep.subr.bf16.mxu0 0
      %675 = vmatpush1.bf16.msra.mxu0 %v655
      %676 = vmatprep.subr.bf16.mxu0 0
      %677 = vmatpush1.bf16.msra.mxu0 %v654
      %678 = vmatprep.subr.bf16.mxu0 0
      %679 = vmatpush2.bf16.msra.mxu0 0
      %680 = vmatprep.subr.bf16.mxu0 0
      %681 = vmatpush2.bf16.msra.mxu0 0
      %682 = vmatprep.subr.bf16.mxu0 0
      %683 = vmatpush2.bf16.msra.mxu0 0
      %684 = vmatprep.subr.bf16.mxu0 0
      %685 = vmatpush2.bf16.msra.mxu0 0
      %686 = vmatprep.subr.bf16.mxu0 0
      %687 = vmatpush2.bf16.msra.mxu0 0
      %688 = vmatprep.subr.bf16.mxu0 0
      %689 = vmatpush2.bf16.msra.mxu0 0
      %690 = vmatprep.subr.bf16.mxu0 0
      %691 = vmatpush2.bf16.msra.mxu0 0
      %692 = vmatprep.subr.bf16.mxu0 0
      %693 = vmatpush2.bf16.msra.mxu0 0
      %694 = vmatprep.mubr.bf16.mxu0 0
      %695 = vmatmul.mubr.bf16.gmra.mxu0 %v530
      %v696 = vpop.f32.mrf.mxu0
      %v697 = vadd.f32 0.0, %v696
      %v698 = vpop.f32.mrf.mxu0
      %v699 = vpop.f32.mrf.mxu0
      %v700 = vadd.f32 0.0, %v699
      %v701 = vpop.f32.mrf.mxu0
      %702 = vdwg.mxu0
      %v711 = vunpack.c.l.b16 %v497
      %v712 = vunpack.c.l.b16 %v498
      %v713 = vunpack.c.l.b16 %v499
      %v714 = vunpack.c.l.b16 %v500
      %v715 = vunpack.c.l.b16 %v501
      %v716 = vunpack.c.l.b16 %v502
      %v717 = vunpack.c.l.b16 %v503
      %v718 = vunpack.c.l.b16 %v504
      %v719 = vpack.c.b16 %v712, %v711
      %v720 = vpack.c.b16 %v714, %v713
      %v721 = vpack.c.b16 %v716, %v715
      %v722 = vpack.c.b16 %v718, %v717
      %727 = vmatprep.subr.bf16.mxu0 0
      %728 = vmatpush1.bf16.msra.mxu0 0
      %729 = vmatprep.subr.bf16.mxu0 0
      %730 = vmatpush1.bf16.msra.mxu0 0
      %731 = vmatprep.subr.bf16.mxu0 0
      %732 = vmatpush1.bf16.msra.mxu0 0
      %733 = vmatprep.subr.bf16.mxu0 0
      %734 = vmatpush1.bf16.msra.mxu0 0
      %735 = vmatprep.subr.bf16.mxu0 0
      %736 = vmatpush1.bf16.msra.mxu0 %v722
      %737 = vmatprep.subr.bf16.mxu0 0
      %738 = vmatpush1.bf16.msra.mxu0 %v721
      %739 = vmatprep.subr.bf16.mxu0 0
      %740 = vmatpush1.bf16.msra.mxu0 %v720
      %741 = vmatprep.subr.bf16.mxu0 0
      %742 = vmatpush1.bf16.msra.mxu0 %v719
      %743 = vmatprep.subr.bf16.mxu0 0
      %744 = vmatpush2.bf16.msra.mxu0 0
      %745 = vmatprep.subr.bf16.mxu0 0
      %746 = vmatpush2.bf16.msra.mxu0 0
      %747 = vmatprep.subr.bf16.mxu0 0
      %748 = vmatpush2.bf16.msra.mxu0 0
      %749 = vmatprep.subr.bf16.mxu0 0
      %750 = vmatpush2.bf16.msra.mxu0 0
      %751 = vmatprep.subr.bf16.mxu0 0
      %752 = vmatpush2.bf16.msra.mxu0 0
      %753 = vmatprep.subr.bf16.mxu0 0
      %754 = vmatpush2.bf16.msra.mxu0 0
      %755 = vmatprep.subr.bf16.mxu0 0
      %756 = vmatpush2.bf16.msra.mxu0 0
      %757 = vmatprep.subr.bf16.mxu0 0
      %758 = vmatpush2.bf16.msra.mxu0 0
      %759 = vmatprep.mubr.bf16.mxu0 0
      %760 = vmatmul.mubr.bf16.gmra.mxu0 %v530
      %v761 = vpop.f32.mrf.mxu0
      %v762 = vadd.f32 0.0, %v761
      %v763 = vpop.f32.mrf.mxu0
      %v764 = vpop.f32.mrf.mxu0
      %v765 = vadd.f32 0.0, %v764
      %v766 = vpop.f32.mrf.mxu0
      %767 = vdwg.mxu0
      %v768 = vld [vmem:[%s1] sm:$0xff]
      %v769 = vld [vmem:[%s1 + $0x8] sm:$0xff]
      %v770 = vld [vmem:[%s2] sm:$0xff]
      %v771 = vld [vmem:[%s2 + $0x8] sm:$0xff]
      %v772 = vmul.f32 %v567, %v768
      %v773 = vmul.f32 %v570, %v769
      %v774 = vmul.f32 %v632, %v768
      %v775 = vmul.f32 %v635, %v769
      %v776 = vmul.f32 %v697, %v768
      %v777 = vmul.f32 %v700, %v769
      %v778 = vmul.f32 %v762, %v768
      %v779 = vmul.f32 %v765, %v769
      %782 = vrot.lane.b32.xlu0 %v770, 48
      %v783 = vpop.permute.xlu0 %782
      %784 = vrot.lane.b32.xlu0 %v771, 48
      %v785 = vpop.permute.xlu0 %784
      %v788 = vmul.f32 %v567, %v783
      %v789 = vmul.f32 %v570, %v785
      %v790 = vmul.f32 %v632, %v783
      %v791 = vmul.f32 %v635, %v785
      %v792 = vmul.f32 %v697, %v783
      %v793 = vmul.f32 %v700, %v785
      %v794 = vmul.f32 %v762, %v783
      %v795 = vmul.f32 %v765, %v785
      %804 = vrot.lane.b32.xlu0 %v788, 80
      %v805 = vpop.permute.xlu0 %804
      %806 = vrot.lane.b32.xlu0 %v789, 80
      %v807 = vpop.permute.xlu0 %806
      %808 = vrot.lane.b32.xlu0 %v790, 80
      %v809 = vpop.permute.xlu0 %808
      %810 = vrot.lane.b32.xlu0 %v791, 80
      %v811 = vpop.permute.xlu0 %810
      %812 = vrot.lane.b32.xlu0 %v792, 80
      %v813 = vpop.permute.xlu0 %812
      %814 = vrot.lane.b32.xlu0 %v793, 80
      %v815 = vpop.permute.xlu0 %814
      %816 = vrot.lane.b32.xlu0 %v794, 80
      %v817 = vpop.permute.xlu0 %816
      %818 = vrot.lane.b32.xlu0 %v795, 80
      %v819 = vpop.permute.xlu0 %818
      %v828 = vadd.f32 %v772, %v805
      %v829 = vadd.f32 %v773, %v807
      %v830 = vadd.f32 %v774, %v809
      %v831 = vadd.f32 %v775, %v811
      %v832 = vadd.f32 %v776, %v813
      %v833 = vadd.f32 %v777, %v815
      %v834 = vadd.f32 %v778, %v817
      %v835 = vadd.f32 %v779, %v819
      %v836 = vmul.f32 %v828, 0.25
      %v837 = vmul.f32 %v829, 0.25
      %v838 = vmul.f32 %v830, 0.25
      %v839 = vmul.f32 %v831, 0.25
      %v840 = vmul.f32 %v832, 0.25
      %v841 = vmul.f32 %v833, 0.25
      %v842 = vmul.f32 %v834, 0.25
      %v843 = vmul.f32 %v835, 0.25
      %846 = vrot.lane.b32.xlu0 %v768, 16
      %v847 = vpop.permute.xlu0 %846
      %848 = vrot.lane.b32.xlu0 %v769, 16
      %v849 = vpop.permute.xlu0 %848
      %v852 = vmul.f32 %v567, %v847
      %v853 = vmul.f32 %v570, %v849
      %v854 = vmul.f32 %v632, %v847
      %v855 = vmul.f32 %v635, %v849
      %v856 = vmul.f32 %v697, %v847
      %v857 = vmul.f32 %v700, %v849
      %v858 = vmul.f32 %v762, %v847
      %v859 = vmul.f32 %v765, %v849
      %860 = vrot.lane.b32.xlu0 %v770, 64
      %v861 = vpop.permute.xlu0 %860
      %862 = vrot.lane.b32.xlu0 %v771, 64
      %v863 = vpop.permute.xlu0 %862
      %v866 = vmul.f32 %v567, %v861
      %v867 = vmul.f32 %v570, %v863
      %v868 = vmul.f32 %v632, %v861
      %v869 = vmul.f32 %v635, %v863
      %v870 = vmul.f32 %v697, %v861
      %v871 = vmul.f32 %v700, %v863
      %v872 = vmul.f32 %v762, %v861
      %v873 = vmul.f32 %v765, %v863
      %882 = vrot.lane.b32.xlu0 %v866, 80
      %v883 = vpop.permute.xlu0 %882
      %884 = vrot.lane.b32.xlu0 %v867, 80
      %v885 = vpop.permute.xlu0 %884
      %886 = vrot.lane.b32.xlu0 %v868, 80
      %v887 = vpop.permute.xlu0 %886
      %888 = vrot.lane.b32.xlu0 %v869, 80
      %v889 = vpop.permute.xlu0 %888
      %890 = vrot.lane.b32.xlu0 %v870, 80
      %v891 = vpop.permute.xlu0 %890
      %892 = vrot.lane.b32.xlu0 %v871, 80
      %v893 = vpop.permute.xlu0 %892
      %894 = vrot.lane.b32.xlu0 %v872, 80
      %v895 = vpop.permute.xlu0 %894
      %896 = vrot.lane.b32.xlu0 %v873, 80
      %v897 = vpop.permute.xlu0 %896
      %v906 = vadd.f32 %v852, %v883
      %v907 = vadd.f32 %v853, %v885
      %v908 = vadd.f32 %v854, %v887
      %v909 = vadd.f32 %v855, %v889
      %v910 = vadd.f32 %v856, %v891
      %v911 = vadd.f32 %v857, %v893
      %v912 = vadd.f32 %v858, %v895
      %v913 = vadd.f32 %v859, %v897
      %v914 = vpack.c.bf16 %v837, %v836
      %v915 = vpack.c.bf16 %v839, %v838
      %v916 = vpack.c.bf16 %v841, %v840
      %v917 = vpack.c.bf16 %v843, %v842
      %v918 = vpack.c.bf16 %v907, %v906
      %v919 = vpack.c.bf16 %v909, %v908
      %v920 = vpack.c.bf16 %v911, %v910
      %v921 = vpack.c.bf16 %v913, %v912
      %v922 = vld [vmem:[%s3] sm:$0xff]
      %v923 = vld [vmem:[%s3 + $0x8] sm:$0xff]
      %925 = vrot.lane.b32.xlu0 %v918, 112
      %v926 = vpop.permute.xlu0 %925
      %vm927 = vcmask 130048
      %v929 = vsel %vm927, %v914, 0
      %v932 = vsel %vm927, %v926, 0
      %934 = vmatprep.subr.bf16.mxu0 0
      %935 = vmatpush1.bf16.xpose.msra.mxu0 0
      %936 = vmatprep.subr.bf16.mxu0 0
      %937 = vmatpush1.bf16.xpose.msra.mxu0 0
      %938 = vmatprep.subr.bf16.mxu0 0
      %939 = vmatpush1.bf16.xpose.msra.mxu0 0
      %940 = vmatprep.subr.bf16.mxu0 0
      %941 = vmatpush1.bf16.xpose.msra.mxu0 0
      %942 = vmatprep.subr.bf16.mxu0 0
      %943 = vmatpush1.bf16.xpose.msra.mxu0 0
      %944 = vmatprep.subr.bf16.mxu0 0
      %945 = vmatpush1.bf16.xpose.msra.mxu0 0
      %946 = vmatprep.subr.bf16.mxu0 0
      %947 = vmatpush1.bf16.xpose.msra.mxu0 0
      %948 = vmatprep.subr.bf16.mxu0 0
      %949 = vmatpush1.bf16.xpose.msra.mxu0 %v932
      %950 = vmatprep.subr.bf16.mxu0 0
      %951 = vmatpush2.bf16.xpose.msra.mxu0 0
      %952 = vmatprep.subr.bf16.mxu0 0
      %953 = vmatpush2.bf16.xpose.msra.mxu0 0
      %954 = vmatprep.subr.bf16.mxu0 0
      %955 = vmatpush2.bf16.xpose.msra.mxu0 0
      %956 = vmatprep.subr.bf16.mxu0 0
      %957 = vmatpush2.bf16.xpose.msra.mxu0 0
      %958 = vmatprep.subr.bf16.mxu0 0
      %959 = vmatpush2.bf16.xpose.msra.mxu0 0
      %960 = vmatprep.subr.bf16.mxu0 0
      %961 = vmatpush2.bf16.xpose.msra.mxu0 0
      %962 = vmatprep.subr.bf16.mxu0 0
      %963 = vmatpush2.bf16.xpose.msra.mxu0 0
      %964 = vmatprep.subr.bf16.mxu0 0
      %965 = vmatpush2.bf16.xpose.msra.mxu0 0
      %966 = vmatprep.mubr.bf16.mxu0 0
      %967 = vmatmul.mubr.bf16.gmra.mxu0 %v929
      %v968 = vpop.f32.mrf.mxu0
      %v969 = vadd.f32 %v922, %v968
      %v970 = vpop.f32.mrf.mxu0
      %v971 = vpop.f32.mrf.mxu0
      %v972 = vadd.f32 %v923, %v971
      %v973 = vpop.f32.mrf.mxu0
      %974 = vdwg.mxu0
      %976 = vrot.lane.b32.xlu0 %v919, 112
      %v977 = vpop.permute.xlu0 %976
      %v979 = vsel %vm927, %v915, 0
      %v982 = vsel %vm927, %v977, 0
      %984 = vmatprep.subr.bf16.mxu0 0
      %985 = vmatpush1.bf16.xpose.msra.mxu0 0
      %986 = vmatprep.subr.bf16.mxu0 0
      %987 = vmatpush1.bf16.xpose.msra.mxu0 0
      %988 = vmatprep.subr.bf16.mxu0 0
      %989 = vmatpush1.bf16.xpose.msra.mxu0 0
      %990 = vmatprep.subr.bf16.mxu0 0
      %991 = vmatpush1.bf16.xpose.msra.mxu0 0
      %992 = vmatprep.subr.bf16.mxu0 0
      %993 = vmatpush1.bf16.xpose.msra.mxu0 0
      %994 = vmatprep.subr.bf16.mxu0 0
      %995 = vmatpush1.bf16.xpose.msra.mxu0 0
      %996 = vmatprep.subr.bf16.mxu0 0
      %997 = vmatpush1.bf16.xpose.msra.mxu0 0
      %998 = vmatprep.subr.bf16.mxu0 0
      %999 = vmatpush1.bf16.xpose.msra.mxu0 %v982
      %1000 = vmatprep.subr.bf16.mxu0 0
      %1001 = vmatpush2.bf16.xpose.msra.mxu0 0
      %1002 = vmatprep.subr.bf16.mxu0 0
      %1003 = vmatpush2.bf16.xpose.msra.mxu0 0
      %1004 = vmatprep.subr.bf16.mxu0 0
      %1005 = vmatpush2.bf16.xpose.msra.mxu0 0
      %1006 = vmatprep.subr.bf16.mxu0 0
      %1007 = vmatpush2.bf16.xpose.msra.mxu0 0
      %1008 = vmatprep.subr.bf16.mxu0 0
      %1009 = vmatpush2.bf16.xpose.msra.mxu0 0
      %1010 = vmatprep.subr.bf16.mxu0 0
      %1011 = vmatpush2.bf16.xpose.msra.mxu0 0
      %1012 = vmatprep.subr.bf16.mxu0 0
      %1013 = vmatpush2.bf16.xpose.msra.mxu0 0
      %1014 = vmatprep.subr.bf16.mxu0 0
      %1015 = vmatpush2.bf16.xpose.msra.mxu0 0
      %1016 = vmatprep.mubr.bf16.mxu0 0
      %1017 = vmatmul.mubr.bf16.gmra.mxu0 %v979
      %v1018 = vpop.f32.mrf.mxu0
      %v1019 = vadd.f32 %v922, %v1018
      %v1020 = vpop.f32.mrf.mxu0
      %v1021 = vpop.f32.mrf.mxu0
      %v1022 = vadd.f32 %v923, %v1021
      %v1023 = vpop.f32.mrf.mxu0
      %1024 = vdwg.mxu0
      %1026 = vrot.lane.b32.xlu0 %v920, 112
      %v1027 = vpop.permute.xlu0 %1026
      %v1029 = vsel %vm927, %v916, 0
      %v1032 = vsel %vm927, %v1027, 0
      %1034 = vmatprep.subr.bf16.mxu0 0
      %1035 = vmatpush1.bf16.xpose.msra.mxu0 0
      %1036 = vmatprep.subr.bf16.mxu0 0
      %1037 = vmatpush1.bf16.xpose.msra.mxu0 0
      %1038 = vmatprep.subr.bf16.mxu0 0
      %1039 = vmatpush1.bf16.xpose.msra.mxu0 0
      %1040 = vmatprep.subr.bf16.mxu0 0
      %1041 = vmatpush1.bf16.xpose.msra.mxu0 0
      %1042 = vmatprep.subr.bf16.mxu0 0
      %1043 = vmatpush1.bf16.xpose.msra.mxu0 0
      %1044 = vmatprep.subr.bf16.mxu0 0
      %1045 = vmatpush1.bf16.xpose.msra.mxu0 0
      %1046 = vmatprep.subr.bf16.mxu0 0
      %1047 = vmatpush1.bf16.xpose.msra.mxu0 0
      %1048 = vmatprep.subr.bf16.mxu0 0
      %1049 = vmatpush1.bf16.xpose.msra.mxu0 %v1032
      %1050 = vmatprep.subr.bf16.mxu0 0
      %1051 = vmatpush2.bf16.xpose.msra.mxu0 0
      %1052 = vmatprep.subr.bf16.mxu0 0
      %1053 = vmatpush2.bf16.xpose.msra.mxu0 0
      %1054 = vmatprep.subr.bf16.mxu0 0
      %1055 = vmatpush2.bf16.xpose.msra.mxu0 0
      %1056 = vmatprep.subr.bf16.mxu0 0
      %1057 = vmatpush2.bf16.xpose.msra.mxu0 0
      %1058 = vmatprep.subr.bf16.mxu0 0
      %1059 = vmatpush2.bf16.xpose.msra.mxu0 0
      %1060 = vmatprep.subr.bf16.mxu0 0
      %1061 = vmatpush2.bf16.xpose.msra.mxu0 0
      %1062 = vmatprep.subr.bf16.mxu0 0
      %1063 = vmatpush2.bf16.xpose.msra.mxu0 0
      %1064 = vmatprep.subr.bf16.mxu0 0
      %1065 = vmatpush2.bf16.xpose.msra.mxu0 0
      %1066 = vmatprep.mubr.bf16.mxu0 0
      %1067 = vmatmul.mubr.bf16.gmra.mxu0 %v1029
      %v1068 = vpop.f32.mrf.mxu0
      %v1069 = vadd.f32 %v922, %v1068
      %v1070 = vpop.f32.mrf.mxu0
      %v1071 = vpop.f32.mrf.mxu0
      %v1072 = vadd.f32 %v923, %v1071
      %v1073 = vpop.f32.mrf.mxu0
      %1074 = vdwg.mxu0
      %1076 = vrot.lane.b32.xlu0 %v921, 112
      %v1077 = vpop.permute.xlu0 %1076
      %v1079 = vsel %vm927, %v917, 0
      %v1082 = vsel %vm927, %v1077, 0
      %1084 = vmatprep.subr.bf16.mxu0 0
      %1085 = vmatpush1.bf16.xpose.msra.mxu0 0
      %1086 = vmatprep.subr.bf16.mxu0 0
      %1087 = vmatpush1.bf16.xpose.msra.mxu0 0
      %1088 = vmatprep.subr.bf16.mxu0 0
      %1089 = vmatpush1.bf16.xpose.msra.mxu0 0
      %1090 = vmatprep.subr.bf16.mxu0 0
      %1091 = vmatpush1.bf16.xpose.msra.mxu0 0
      %1092 = vmatprep.subr.bf16.mxu0 0
      %1093 = vmatpush1.bf16.xpose.msra.mxu0 0
      %1094 = vmatprep.subr.bf16.mxu0 0
      %1095 = vmatpush1.bf16.xpose.msra.mxu0 0
      %1096 = vmatprep.subr.bf16.mxu0 0
      %1097 = vmatpush1.bf16.xpose.msra.mxu0 0
      %1098 = vmatprep.subr.bf16.mxu0 0
      %1099 = vmatpush1.bf16.xpose.msra.mxu0 %v1082
      %1100 = vmatprep.subr.bf16.mxu0 0
      %1101 = vmatpush2.bf16.xpose.msra.mxu0 0
      %1102 = vmatprep.subr.bf16.mxu0 0
      %1103 = vmatpush2.bf16.xpose.msra.mxu0 0
      %1104 = vmatprep.subr.bf16.mxu0 0
      %1105 = vmatpush2.bf16.xpose.msra.mxu0 0
      %1106 = vmatprep.subr.bf16.mxu0 0
      %1107 = vmatpush2.bf16.xpose.msra.mxu0 0
      %1108 = vmatprep.subr.bf16.mxu0 0
      %1109 = vmatpush2.bf16.xpose.msra.mxu0 0
      %1110 = vmatprep.subr.bf16.mxu0 0
      %1111 = vmatpush2.bf16.xpose.msra.mxu0 0
      %1112 = vmatprep.subr.bf16.mxu0 0
      %1113 = vmatpush2.bf16.xpose.msra.mxu0 0
      %1114 = vmatprep.subr.bf16.mxu0 0
      %1115 = vmatpush2.bf16.xpose.msra.mxu0 0
      %1116 = vmatprep.mubr.bf16.mxu0 0
      %1117 = vmatmul.mubr.bf16.gmra.mxu0 %v1079
      %v1118 = vpop.f32.mrf.mxu0
      %v1119 = vadd.f32 %v922, %v1118
      %v1120 = vpop.f32.mrf.mxu0
      %v1121 = vpop.f32.mrf.mxu0
      %v1122 = vadd.f32 %v923, %v1121
      %v1123 = vpop.f32.mrf.mxu0
      %1124 = vdwg.mxu0
      %v1125 = vsel %vm927, %v969, -inf
      %1126 = vmax.xlane.f32.xlu0 %v1125
      %v1127 = vpop.xlane.xlu0 %1126
      %v1128 = vsel %vm927, %v972, -inf
      %1129 = vmax.xlane.f32.xlu0 %v1128
      %v1130 = vpop.xlane.xlu0 %1129
      %v1131 = vsel %vm927, %v1019, -inf
      %1132 = vmax.xlane.f32.xlu0 %v1131
      %v1133 = vpop.xlane.xlu0 %1132
      %v1134 = vsel %vm927, %v1022, -inf
      %1135 = vmax.xlane.f32.xlu0 %v1134
      %v1136 = vpop.xlane.xlu0 %1135
      %v1137 = vsel %vm927, %v1069, -inf
      %1138 = vmax.xlane.f32.xlu0 %v1137
      %v1139 = vpop.xlane.xlu0 %1138
      %v1140 = vsel %vm927, %v1072, -inf
      %1141 = vmax.xlane.f32.xlu0 %v1140
      %v1142 = vpop.xlane.xlu0 %1141
      %v1143 = vsel %vm927, %v1119, -inf
      %1144 = vmax.xlane.f32.xlu0 %v1143
      %v1145 = vpop.xlane.xlu0 %1144
      %v1146 = vsel %vm927, %v1122, -inf
      %1147 = vmax.xlane.f32.xlu0 %v1146
      %v1148 = vpop.xlane.xlu0 %1147
      %v1149 = vsub.f32 %v969, %v1127
      %v1150 = vsub.f32 %v972, %v1130
      %v1151 = vsub.f32 %v1019, %v1133
      %v1152 = vsub.f32 %v1022, %v1136
      %v1153 = vsub.f32 %v1069, %v1139
      %v1154 = vsub.f32 %v1072, %v1142
      %v1155 = vsub.f32 %v1119, %v1145
      %v1156 = vsub.f32 %v1122, %v1148
      %v1157 = vmul.f32 %v1149, 1.442695
      %v1158 = vpow.pop %v1157
      %v1159 = vmul.f32 %v1150, 1.442695
      %v1160 = vpow.pop %v1159
      %v1161 = vmul.f32 %v1151, 1.442695
      %v1162 = vpow.pop %v1161
      %v1163 = vmul.f32 %v1152, 1.442695
      %v1164 = vpow.pop %v1163
      %v1165 = vmul.f32 %v1153, 1.442695
      %v1166 = vpow.pop %v1165
      %v1167 = vmul.f32 %v1154, 1.442695
      %v1168 = vpow.pop %v1167
      %v1169 = vmul.f32 %v1155, 1.442695
      %v1170 = vpow.pop %v1169
      %v1171 = vmul.f32 %v1156, 1.442695
      %v1172 = vpow.pop %v1171
      %v1173 = vsel %vm927, %v1158, 0.0
      %1174 = vadd.xlane.f32.xlu0 %v1173
      %v1175 = vpop.xlane.xlu0 %1174
      %v1176 = vsel %vm927, %v1160, 0.0
      %1177 = vadd.xlane.f32.xlu0 %v1176
      %v1178 = vpop.xlane.xlu0 %1177
      %v1179 = vsel %vm927, %v1162, 0.0
      %1180 = vadd.xlane.f32.xlu0 %v1179
      %v1181 = vpop.xlane.xlu0 %1180
      %v1182 = vsel %vm927, %v1164, 0.0
      %1183 = vadd.xlane.f32.xlu0 %v1182
      %v1184 = vpop.xlane.xlu0 %1183
      %v1185 = vsel %vm927, %v1166, 0.0
      %1186 = vadd.xlane.f32.xlu0 %v1185
      %v1187 = vpop.xlane.xlu0 %1186
      %v1188 = vsel %vm927, %v1168, 0.0
      %1189 = vadd.xlane.f32.xlu0 %v1188
      %v1190 = vpop.xlane.xlu0 %1189
      %v1191 = vsel %vm927, %v1170, 0.0
      %1192 = vadd.xlane.f32.xlu0 %v1191
      %v1193 = vpop.xlane.xlu0 %1192
      %v1194 = vsel %vm927, %v1172, 0.0
      %1195 = vadd.xlane.f32.xlu0 %v1194
      %v1196 = vpop.xlane.xlu0 %1195
      %v1197 = vrcp.pop %v1175
      %v1198 = vrcp.pop %v1178
      %v1199 = vrcp.pop %v1181
      %v1200 = vrcp.pop %v1184
      %v1201 = vrcp.pop %v1187
      %v1202 = vrcp.pop %v1190
      %v1203 = vrcp.pop %v1193
      %v1204 = vrcp.pop %v1196
      %v1205 = vmul.f32 %v1158, %v1197
      %v1206 = vmul.f32 %v1160, %v1198
      %v1207 = vmul.f32 %v1162, %v1199
      %v1208 = vmul.f32 %v1164, %v1200
      %v1209 = vmul.f32 %v1166, %v1201
      %v1210 = vmul.f32 %v1168, %v1202
      %v1211 = vmul.f32 %v1170, %v1203
      %v1212 = vmul.f32 %v1172, %v1204
      %v1213 = vpack.c.bf16 %v1206, %v1205
      %v1214 = vpack.c.bf16 %v1208, %v1207
      %v1215 = vpack.c.bf16 %v1210, %v1209
      %v1216 = vpack.c.bf16 %v1212, %v1211
      %v1217 = vpack.c.bf16 %v570, %v567
      %v1218 = vpack.c.bf16 %v635, %v632
      %v1219 = vpack.c.bf16 %v700, %v697
      %v1220 = vpack.c.bf16 %v765, %v762
      %1222 = vrot.lane.b32.xlu0 %v1217, 96
      %v1223 = vpop.permute.xlu0 %1222
      %v1226 = vsel %vm927, %v1213, 0
      %1228 = vmatprep.subr.bf16.mxu0 0
      %1229 = vmatpush1.bf16.msra.mxu0 0
      %1230 = vmatprep.subr.bf16.mxu0 0
      %1231 = vmatpush1.bf16.msra.mxu0 0
      %1232 = vmatprep.subr.bf16.mxu0 0
      %1233 = vmatpush1.bf16.msra.mxu0 0
      %1234 = vmatprep.subr.bf16.mxu0 0
      %1235 = vmatpush1.bf16.msra.mxu0 0
      %1236 = vmatprep.subr.bf16.mxu0 0
      %1237 = vmatpush1.bf16.msra.mxu0 0
      %1238 = vmatprep.subr.bf16.mxu0 0
      %1239 = vmatpush1.bf16.msra.mxu0 0
      %1240 = vmatprep.subr.bf16.mxu0 0
      %1241 = vmatpush1.bf16.msra.mxu0 0
      %1242 = vmatprep.subr.bf16.mxu0 0
      %1243 = vmatpush1.bf16.msra.mxu0 %v1223
      %1244 = vmatprep.subr.bf16.mxu0 0
      %1245 = vmatpush2.bf16.msra.mxu0 0
      %1246 = vmatprep.subr.bf16.mxu0 0
      %1247 = vmatpush2.bf16.msra.mxu0 0
      %1248 = vmatprep.subr.bf16.mxu0 0
      %1249 = vmatpush2.bf16.msra.mxu0 0
      %1250 = vmatprep.subr.bf16.mxu0 0
      %1251 = vmatpush2.bf16.msra.mxu0 0
      %1252 = vmatprep.subr.bf16.mxu0 0
      %1253 = vmatpush2.bf16.msra.mxu0 0
      %1254 = vmatprep.subr.bf16.mxu0 0
      %1255 = vmatpush2.bf16.msra.mxu0 0
      %1256 = vmatprep.subr.bf16.mxu0 0
      %1257 = vmatpush2.bf16.msra.mxu0 0
      %1258 = vmatprep.subr.bf16.mxu0 0
      %1259 = vmatpush2.bf16.msra.mxu0 0
      %1260 = vmatprep.mubr.bf16.mxu0 0
      %1261 = vmatmul.mubr.bf16.gmra.mxu0 %v1226
      %v1262 = vpop.f32.mrf.mxu0
      %v1263 = vadd.f32 0.0, %v1262
      %v1264 = vpop.f32.mrf.mxu0
      %v1265 = vpop.f32.mrf.mxu0
      %v1266 = vadd.f32 0.0, %v1265
      %v1267 = vpop.f32.mrf.mxu0
      %1268 = vdwg.mxu0
      %1270 = vrot.lane.b32.xlu0 %v1218, 96
      %v1271 = vpop.permute.xlu0 %1270
      %v1274 = vsel %vm927, %v1214, 0
      %1276 = vmatprep.subr.bf16.mxu0 0
      %1277 = vmatpush1.bf16.msra.mxu0 0
      %1278 = vmatprep.subr.bf16.mxu0 0
      %1279 = vmatpush1.bf16.msra.mxu0 0
      %1280 = vmatprep.subr.bf16.mxu0 0
      %1281 = vmatpush1.bf16.msra.mxu0 0
      %1282 = vmatprep.subr.bf16.mxu0 0
      %1283 = vmatpush1.bf16.msra.mxu0 0
      %1284 = vmatprep.subr.bf16.mxu0 0
      %1285 = vmatpush1.bf16.msra.mxu0 0
      %1286 = vmatprep.subr.bf16.mxu0 0
      %1287 = vmatpush1.bf16.msra.mxu0 0
      %1288 = vmatprep.subr.bf16.mxu0 0
      %1289 = vmatpush1.bf16.msra.mxu0 0
      %1290 = vmatprep.subr.bf16.mxu0 0
      %1291 = vmatpush1.bf16.msra.mxu0 %v1271
      %1292 = vmatprep.subr.bf16.mxu0 0
      %1293 = vmatpush2.bf16.msra.mxu0 0
      %1294 = vmatprep.subr.bf16.mxu0 0
      %1295 = vmatpush2.bf16.msra.mxu0 0
      %1296 = vmatprep.subr.bf16.mxu0 0
      %1297 = vmatpush2.bf16.msra.mxu0 0
      %1298 = vmatprep.subr.bf16.mxu0 0
      %1299 = vmatpush2.bf16.msra.mxu0 0
      %1300 = vmatprep.subr.bf16.mxu0 0
      %1301 = vmatpush2.bf16.msra.mxu0 0
      %1302 = vmatprep.subr.bf16.mxu0 0
      %1303 = vmatpush2.bf16.msra.mxu0 0
      %1304 = vmatprep.subr.bf16.mxu0 0
      %1305 = vmatpush2.bf16.msra.mxu0 0
      %1306 = vmatprep.subr.bf16.mxu0 0
      %1307 = vmatpush2.bf16.msra.mxu0 0
      %1308 = vmatprep.mubr.bf16.mxu0 0
      %1309 = vmatmul.mubr.bf16.gmra.mxu0 %v1274
      %v1310 = vpop.f32.mrf.mxu0
      %v1311 = vadd.f32 0.0, %v1310
      %v1312 = vpop.f32.mrf.mxu0
      %v1313 = vpop.f32.mrf.mxu0
      %v1314 = vadd.f32 0.0, %v1313
      %v1315 = vpop.f32.mrf.mxu0
      %1316 = vdwg.mxu0
      %1318 = vrot.lane.b32.xlu0 %v1219, 96
      %v1319 = vpop.permute.xlu0 %1318
      %v1322 = vsel %vm927, %v1215, 0
      %1324 = vmatprep.subr.bf16.mxu0 0
      %1325 = vmatpush1.bf16.msra.mxu0 0
      %1326 = vmatprep.subr.bf16.mxu0 0
      %1327 = vmatpush1.bf16.msra.mxu0 0
      %1328 = vmatprep.subr.bf16.mxu0 0
      %1329 = vmatpush1.bf16.msra.mxu0 0
      %1330 = vmatprep.subr.bf16.mxu0 0
      %1331 = vmatpush1.bf16.msra.mxu0 0
      %1332 = vmatprep.subr.bf16.mxu0 0
      %1333 = vmatpush1.bf16.msra.mxu0 0
      %1334 = vmatprep.subr.bf16.mxu0 0
      %1335 = vmatpush1.bf16.msra.mxu0 0
      %1336 = vmatprep.subr.bf16.mxu0 0
      %1337 = vmatpush1.bf16.msra.mxu0 0
      %1338 = vmatprep.subr.bf16.mxu0 0
      %1339 = vmatpush1.bf16.msra.mxu0 %v1319
      %1340 = vmatprep.subr.bf16.mxu0 0
      %1341 = vmatpush2.bf16.msra.mxu0 0
      %1342 = vmatprep.subr.bf16.mxu0 0
      %1343 = vmatpush2.bf16.msra.mxu0 0
      %1344 = vmatprep.subr.bf16.mxu0 0
      %1345 = vmatpush2.bf16.msra.mxu0 0
      %1346 = vmatprep.subr.bf16.mxu0 0
      %1347 = vmatpush2.bf16.msra.mxu0 0
      %1348 = vmatprep.subr.bf16.mxu0 0
      %1349 = vmatpush2.bf16.msra.mxu0 0
      %1350 = vmatprep.subr.bf16.mxu0 0
      %1351 = vmatpush2.bf16.msra.mxu0 0
      %1352 = vmatprep.subr.bf16.mxu0 0
      %1353 = vmatpush2.bf16.msra.mxu0 0
      %1354 = vmatprep.subr.bf16.mxu0 0
      %1355 = vmatpush2.bf16.msra.mxu0 0
      %1356 = vmatprep.mubr.bf16.mxu0 0
      %1357 = vmatmul.mubr.bf16.gmra.mxu0 %v1322
      %v1358 = vpop.f32.mrf.mxu0
      %v1359 = vadd.f32 0.0, %v1358
      %v1360 = vpop.f32.mrf.mxu0
      %v1361 = vpop.f32.mrf.mxu0
      %v1362 = vadd.f32 0.0, %v1361
      %v1363 = vpop.f32.mrf.mxu0
      %1364 = vdwg.mxu0
      %1366 = vrot.lane.b32.xlu0 %v1220, 96
      %v1367 = vpop.permute.xlu0 %1366
      %v1370 = vsel %vm927, %v1216, 0
      %1372 = vmatprep.subr.bf16.mxu0 0
      %1373 = vmatpush1.bf16.msra.mxu0 0
      %1374 = vmatprep.subr.bf16.mxu0 0
      %1375 = vmatpush1.bf16.msra.mxu0 0
      %1376 = vmatprep.subr.bf16.mxu0 0
      %1377 = vmatpush1.bf16.msra.mxu0 0
      %1378 = vmatprep.subr.bf16.mxu0 0
      %1379 = vmatpush1.bf16.msra.mxu0 0
      %1380 = vmatprep.subr.bf16.mxu0 0
      %1381 = vmatpush1.bf16.msra.mxu0 0
      %1382 = vmatprep.subr.bf16.mxu0 0
      %1383 = vmatpush1.bf16.msra.mxu0 0
      %1384 = vmatprep.subr.bf16.mxu0 0
      %1385 = vmatpush1.bf16.msra.mxu0 0
      %1386 = vmatprep.subr.bf16.mxu0 0
      %1387 = vmatpush1.bf16.msra.mxu0 %v1367
      %1388 = vmatprep.subr.bf16.mxu0 0
      %1389 = vmatpush2.bf16.msra.mxu0 0
      %1390 = vmatprep.subr.bf16.mxu0 0
      %1391 = vmatpush2.bf16.msra.mxu0 0
      %1392 = vmatprep.subr.bf16.mxu0 0
      %1393 = vmatpush2.bf16.msra.mxu0 0
      %1394 = vmatprep.subr.bf16.mxu0 0
      %1395 = vmatpush2.bf16.msra.mxu0 0
      %1396 = vmatprep.subr.bf16.mxu0 0
      %1397 = vmatpush2.bf16.msra.mxu0 0
      %1398 = vmatprep.subr.bf16.mxu0 0
      %1399 = vmatpush2.bf16.msra.mxu0 0
      %1400 = vmatprep.subr.bf16.mxu0 0
      %1401 = vmatpush2.bf16.msra.mxu0 0
      %1402 = vmatprep.subr.bf16.mxu0 0
      %1403 = vmatpush2.bf16.msra.mxu0 0
      %1404 = vmatprep.mubr.bf16.mxu0 0
      %1405 = vmatmul.mubr.bf16.gmra.mxu0 %v1370
      %v1406 = vpop.f32.mrf.mxu0
      %v1407 = vadd.f32 0.0, %v1406
      %v1408 = vpop.f32.mrf.mxu0
      %v1409 = vpop.f32.mrf.mxu0
      %v1410 = vadd.f32 0.0, %v1409
      %v1411 = vpop.f32.mrf.mxu0
      %1412 = vdwg.mxu0
      %v1413 = vpack.c.bf16 %v1266, %v1263
      %v1414 = vpack.c.bf16 %v1314, %v1311
      %v1415 = vpack.c.bf16 %v1362, %v1359
      %v1416 = vpack.c.bf16 %v1410, %v1407
      %v1417 = vld [vmem:[%s419] sm:$0xf]
      %v1418 = vld [vmem:[%s419 + $0x4] sm:$0xf]
      %v1419 = vld [vmem:[%s419 + $0x8] sm:$0xf]
      %v1420 = vld [vmem:[%s419 + $0xc] sm:$0xf]
      %v1421 = vld [vmem:[%s419 + $0x10] sm:$0xf]
      %v1422 = vld [vmem:[%s419 + $0x14] sm:$0xf]
      %v1423 = vld [vmem:[%s419 + $0x18] sm:$0xf]
      %v1424 = vld [vmem:[%s419 + $0x1c] sm:$0xf]
      %v1427 = vunpack.c.l.b16 %v1417
      %v1428 = vunpack.c.l.b16 %v1418
      %v1429 = vpack.c.b16 %v1428, %v1427
      %v1432 = vsel %vm927, %v1413, 0
      %1434 = vmatprep.subr.bf16.mxu0 0
      %1435 = vmatpush1.bf16.msra.mxu0 0
      %1436 = vmatprep.subr.bf16.mxu0 0
      %1437 = vmatpush1.bf16.msra.mxu0 0
      %1438 = vmatprep.subr.bf16.mxu0 0
      %1439 = vmatpush1.bf16.msra.mxu0 0
      %1440 = vmatprep.subr.bf16.mxu0 0
      %1441 = vmatpush1.bf16.msra.mxu0 0
      %1442 = vmatprep.subr.bf16.mxu0 0
      %1443 = vmatpush1.bf16.msra.mxu0 0
      %1444 = vmatprep.subr.bf16.mxu0 0
      %1445 = vmatpush1.bf16.msra.mxu0 0
      %1446 = vmatprep.subr.bf16.mxu0 0
      %1447 = vmatpush1.bf16.msra.mxu0 0
      %1448 = vmatprep.subr.bf16.mxu0 0
      %1449 = vmatpush1.bf16.msra.mxu0 %v1429
      %1450 = vmatprep.subr.bf16.mxu0 0
      %1451 = vmatpush2.bf16.msra.mxu0 0
      %1452 = vmatprep.subr.bf16.mxu0 0
      %1453 = vmatpush2.bf16.msra.mxu0 0
      %1454 = vmatprep.subr.bf16.mxu0 0
      %1455 = vmatpush2.bf16.msra.mxu0 0
      %1456 = vmatprep.subr.bf16.mxu0 0
      %1457 = vmatpush2.bf16.msra.mxu0 0
      %1458 = vmatprep.subr.bf16.mxu0 0
      %1459 = vmatpush2.bf16.msra.mxu0 0
      %1460 = vmatprep.subr.bf16.mxu0 0
      %1461 = vmatpush2.bf16.msra.mxu0 0
      %1462 = vmatprep.subr.bf16.mxu0 0
      %1463 = vmatpush2.bf16.msra.mxu0 0
      %1464 = vmatprep.subr.bf16.mxu0 0
      %1465 = vmatpush2.bf16.msra.mxu0 0
      %1466 = vmatprep.mubr.bf16.mxu0 0
      %1467 = vmatmul.mubr.bf16.gmra.mxu0 %v1432
      %v1468 = vpop.f32.mrf.mxu0
      %v1469 = vadd.f32 0.0, %v1468
      %v1470 = vpop.f32.mrf.mxu0
      %v1471 = vpop.f32.mrf.mxu0
      %v1472 = vadd.f32 0.0, %v1471
      %v1473 = vpop.f32.mrf.mxu0
      %1474 = vdwg.mxu0
      %v1477 = vunpack.c.l.b16 %v1419
      %v1478 = vunpack.c.l.b16 %v1420
      %v1479 = vpack.c.b16 %v1478, %v1477
      %v1482 = vsel %vm927, %v1414, 0
      %1484 = vmatprep.subr.bf16.mxu0 0
      %1485 = vmatpush1.bf16.msra.mxu0 0
      %1486 = vmatprep.subr.bf16.mxu0 0
      %1487 = vmatpush1.bf16.msra.mxu0 0
      %1488 = vmatprep.subr.bf16.mxu0 0
      %1489 = vmatpush1.bf16.msra.mxu0 0
      %1490 = vmatprep.subr.bf16.mxu0 0
      %1491 = vmatpush1.bf16.msra.mxu0 0
      %1492 = vmatprep.subr.bf16.mxu0 0
      %1493 = vmatpush1.bf16.msra.mxu0 0
      %1494 = vmatprep.subr.bf16.mxu0 0
      %1495 = vmatpush1.bf16.msra.mxu0 0
      %1496 = vmatprep.subr.bf16.mxu0 0
      %1497 = vmatpush1.bf16.msra.mxu0 0
      %1498 = vmatprep.subr.bf16.mxu0 0
      %1499 = vmatpush1.bf16.msra.mxu0 %v1479
      %1500 = vmatprep.subr.bf16.mxu0 0
      %1501 = vmatpush2.bf16.msra.mxu0 0
      %1502 = vmatprep.subr.bf16.mxu0 0
      %1503 = vmatpush2.bf16.msra.mxu0 0
      %1504 = vmatprep.subr.bf16.mxu0 0
      %1505 = vmatpush2.bf16.msra.mxu0 0
      %1506 = vmatprep.subr.bf16.mxu0 0
      %1507 = vmatpush2.bf16.msra.mxu0 0
      %1508 = vmatprep.subr.bf16.mxu0 0
      %1509 = vmatpush2.bf16.msra.mxu0 0
      %1510 = vmatprep.subr.bf16.mxu0 0
      %1511 = vmatpush2.bf16.msra.mxu0 0
      %1512 = vmatprep.subr.bf16.mxu0 0
      %1513 = vmatpush2.bf16.msra.mxu0 0
      %1514 = vmatprep.subr.bf16.mxu0 0
      %1515 = vmatpush2.bf16.msra.mxu0 0
      %1516 = vmatprep.mubr.bf16.mxu0 0
      %1517 = vmatmul.mubr.bf16.gmra.mxu0 %v1482
      %v1518 = vpop.f32.mrf.mxu0
      %v1519 = vadd.f32 0.0, %v1518
      %v1520 = vpop.f32.mrf.mxu0
      %v1521 = vpop.f32.mrf.mxu0
      %v1522 = vadd.f32 0.0, %v1521
      %v1523 = vpop.f32.mrf.mxu0
      %1524 = vdwg.mxu0
      %v1527 = vunpack.c.l.b16 %v1421
      %v1528 = vunpack.c.l.b16 %v1422
      %v1529 = vpack.c.b16 %v1528, %v1527
      %v1532 = vsel %vm927, %v1415, 0
      %1534 = vmatprep.subr.bf16.mxu0 0
      %1535 = vmatpush1.bf16.msra.mxu0 0
      %1536 = vmatprep.subr.bf16.mxu0 0
      %1537 = vmatpush1.bf16.msra.mxu0 0
      %1538 = vmatprep.subr.bf16.mxu0 0
      %1539 = vmatpush1.bf16.msra.mxu0 0
      %1540 = vmatprep.subr.bf16.mxu0 0
      %1541 = vmatpush1.bf16.msra.mxu0 0
      %1542 = vmatprep.subr.bf16.mxu0 0
      %1543 = vmatpush1.bf16.msra.mxu0 0
      %1544 = vmatprep.subr.bf16.mxu0 0
      %1545 = vmatpush1.bf16.msra.mxu0 0
      %1546 = vmatprep.subr.bf16.mxu0 0
      %1547 = vmatpush1.bf16.msra.mxu0 0
      %1548 = vmatprep.subr.bf16.mxu0 0
      %1549 = vmatpush1.bf16.msra.mxu0 %v1529
      %1550 = vmatprep.subr.bf16.mxu0 0
      %1551 = vmatpush2.bf16.msra.mxu0 0
      %1552 = vmatprep.subr.bf16.mxu0 0
      %1553 = vmatpush2.bf16.msra.mxu0 0
      %1554 = vmatprep.subr.bf16.mxu0 0
      %1555 = vmatpush2.bf16.msra.mxu0 0
      %1556 = vmatprep.subr.bf16.mxu0 0
      %1557 = vmatpush2.bf16.msra.mxu0 0
      %1558 = vmatprep.subr.bf16.mxu0 0
      %1559 = vmatpush2.bf16.msra.mxu0 0
      %1560 = vmatprep.subr.bf16.mxu0 0
      %1561 = vmatpush2.bf16.msra.mxu0 0
      %1562 = vmatprep.subr.bf16.mxu0 0
      %1563 = vmatpush2.bf16.msra.mxu0 0
      %1564 = vmatprep.subr.bf16.mxu0 0
      %1565 = vmatpush2.bf16.msra.mxu0 0
      %1566 = vmatprep.mubr.bf16.mxu0 0
      %1567 = vmatmul.mubr.bf16.gmra.mxu0 %v1532
      %v1568 = vpop.f32.mrf.mxu0
      %v1569 = vadd.f32 0.0, %v1568
      %v1570 = vpop.f32.mrf.mxu0
      %v1571 = vpop.f32.mrf.mxu0
      %v1572 = vadd.f32 0.0, %v1571
      %v1573 = vpop.f32.mrf.mxu0
      %1574 = vdwg.mxu0
      %v1577 = vunpack.c.l.b16 %v1423
      %v1578 = vunpack.c.l.b16 %v1424
      %v1579 = vpack.c.b16 %v1578, %v1577
      %v1582 = vsel %vm927, %v1416, 0
      %1584 = vmatprep.subr.bf16.mxu0 0
      %1585 = vmatpush1.bf16.msra.mxu0 0
      %1586 = vmatprep.subr.bf16.mxu0 0
      %1587 = vmatpush1.bf16.msra.mxu0 0
      %1588 = vmatprep.subr.bf16.mxu0 0
      %1589 = vmatpush1.bf16.msra.mxu0 0
      %1590 = vmatprep.subr.bf16.mxu0 0
      %1591 = vmatpush1.bf16.msra.mxu0 0
      %1592 = vmatprep.subr.bf16.mxu0 0
      %1593 = vmatpush1.bf16.msra.mxu0 0
      %1594 = vmatprep.subr.bf16.mxu0 0
      %1595 = vmatpush1.bf16.msra.mxu0 0
      %1596 = vmatprep.subr.bf16.mxu0 0
      %1597 = vmatpush1.bf16.msra.mxu0 0
      %1598 = vmatprep.subr.bf16.mxu0 0
      %1599 = vmatpush1.bf16.msra.mxu0 %v1579
      %1600 = vmatprep.subr.bf16.mxu0 0
      %1601 = vmatpush2.bf16.msra.mxu0 0
      %1602 = vmatprep.subr.bf16.mxu0 0
      %1603 = vmatpush2.bf16.msra.mxu0 0
      %1604 = vmatprep.subr.bf16.mxu0 0
      %1605 = vmatpush2.bf16.msra.mxu0 0
      %1606 = vmatprep.subr.bf16.mxu0 0
      %1607 = vmatpush2.bf16.msra.mxu0 0
      %1608 = vmatprep.subr.bf16.mxu0 0
      %1609 = vmatpush2.bf16.msra.mxu0 0
      %1610 = vmatprep.subr.bf16.mxu0 0
      %1611 = vmatpush2.bf16.msra.mxu0 0
      %1612 = vmatprep.subr.bf16.mxu0 0
      %1613 = vmatpush2.bf16.msra.mxu0 0
      %1614 = vmatprep.subr.bf16.mxu0 0
      %1615 = vmatpush2.bf16.msra.mxu0 0
      %1616 = vmatprep.mubr.bf16.mxu0 0
      %1617 = vmatmul.mubr.bf16.gmra.mxu0 %v1582
      %v1618 = vpop.f32.mrf.mxu0
      %v1619 = vadd.f32 0.0, %v1618
      %v1620 = vpop.f32.mrf.mxu0
      %v1621 = vpop.f32.mrf.mxu0
      %v1622 = vadd.f32 0.0, %v1621
      %v1623 = vpop.f32.mrf.mxu0
      %1624 = vdwg.mxu0
      %v1625 = vsel %vm448, %v1469, 0.0
      %v1626 = vsel %vm448, %v1519, 0.0
      %v1627 = vadd.f32 %v1625, %v1626
      %v1628 = vsel %vm448, %v1569, 0.0
      %v1629 = vadd.f32 %v1627, %v1628
      %v1630 = vsel %vm448, %v1619, 0.0
      %v1631 = vadd.f32 %v1629, %v1630
      %v1632 = vsel %vm448, %v1472, 0.0
      %v1633 = vsel %vm448, %v1522, 0.0
      %v1634 = vadd.f32 %v1632, %v1633
      %v1635 = vsel %vm448, %v1572, 0.0
      %v1636 = vadd.f32 %v1634, %v1635
      %v1637 = vsel %vm448, %v1622, 0.0
      %v1638 = vadd.f32 %v1636, %v1637
      %v1639 = vadd.f32 %v443, %v1631
      %v1640 = vadd.f32 %v444, %v1638
      %v1641 = vld [vmem:[%s422] sm:$0x1]
      %v1642 = vmul.f32 %v1639, %v1639
      %v1643 = vmul.f32 %v1640, %v1640
      %v1644 = vsel %vm448, %v1642, 0.0
      %1645 = vadd.xlane.f32.xlu0 %v1644
      %v1646 = vpop.xlane.xlu0 %1645
      %v1647 = vsel %vm448, %v1643, 0.0
      %1648 = vadd.xlane.f32.xlu0 %v1647
      %v1649 = vpop.xlane.xlu0 %1648
      %v1650 = vmul.f32 %v1646, %v455
      %v1651 = vmul.f32 %v1649, %v455
      %v1652 = vadd.f32 %v1650, 1e-05
      %v1653 = vadd.f32 %v1651, 1e-05
      %v1654 = vrsqrt.pop %v1652
      %v1655 = vrsqrt.pop %v1653
      %v1656 = vmul.f32 %v1639, %v1654
      %v1657 = vmul.f32 %v1640, %v1655
      %v1659 = vlaneseq
      %v1660 = vshrl.u32 %v1659, 7
      %v1661 = vsub.s32 0, %v1660
      %v1662 = vrot.slane %v1641, %v1661
      %v1664 = vmul.f32 %v1656, %v1662
      %v1665 = vmul.f32 %v1657, %v1662
      %v1666 = vpack.c.bf16 %v1665, %v1664
      %v1667 = vld [vmem:[%s427] sm:$0xff]
      %v1668 = vld [vmem:[%s427 + $0x8] sm:$0xff]
      %v1669 = vld [vmem:[%s427 + $0x10] sm:$0xff]
      %v1670 = vld [vmem:[%s427 + $0x18] sm:$0xff]
      %v1671 = vld [vmem:[%s427 + $0x20] sm:$0xff]
      %v1672 = vld [vmem:[%s427 + $0x28] sm:$0xff]
      %v1673 = vld [vmem:[%s427 + $0x30] sm:$0xff]
      %v1674 = vld [vmem:[%s427 + $0x38] sm:$0xff]
      %v1683 = vunpack.c.l.b16 %v1667
      %v1684 = vunpack.c.h.b16 %v1667
      %v1685 = vunpack.c.l.b16 %v1668
      %v1686 = vunpack.c.h.b16 %v1668
      %v1687 = vunpack.c.l.b16 %v1669
      %v1688 = vunpack.c.h.b16 %v1669
      %v1689 = vunpack.c.l.b16 %v1670
      %v1690 = vunpack.c.h.b16 %v1670
      %v1691 = vunpack.c.l.b16 %v1671
      %v1692 = vunpack.c.h.b16 %v1671
      %v1693 = vunpack.c.l.b16 %v1672
      %v1694 = vunpack.c.h.b16 %v1672
      %v1695 = vunpack.c.l.b16 %v1673
      %v1696 = vunpack.c.h.b16 %v1673
      %v1697 = vunpack.c.l.b16 %v1674
      %v1698 = vunpack.c.h.b16 %v1674
      %v1699 = vpack.c.b16 %v1685, %v1683
      %v1700 = vpack.c.b16 %v1686, %v1684
      %v1701 = vpack.c.b16 %v1689, %v1687
      %v1702 = vpack.c.b16 %v1690, %v1688
      %v1703 = vpack.c.b16 %v1693, %v1691
      %v1704 = vpack.c.b16 %v1694, %v1692
      %v1705 = vpack.c.b16 %v1697, %v1695
      %v1706 = vpack.c.b16 %v1698, %v1696
      %v1716 = vsel %vm448, %v1666, 0
      %1718 = vmatprep.subr.bf16.mxu0 0
      %1719 = vmatpush1.bf16.msra.mxu0 0
      %1720 = vmatprep.subr.bf16.mxu0 0
      %1721 = vmatpush1.bf16.msra.mxu0 0
      %1722 = vmatprep.subr.bf16.mxu0 0
      %1723 = vmatpush1.bf16.msra.mxu0 0
      %1724 = vmatprep.subr.bf16.mxu0 0
      %1725 = vmatpush1.bf16.msra.mxu0 0
      %1726 = vmatprep.subr.bf16.mxu0 %v1706
      %1727 = vmatpush1.bf16.msra.mxu0 %v1705
      %1728 = vmatprep.subr.bf16.mxu0 %v1704
      %1729 = vmatpush1.bf16.msra.mxu0 %v1703
      %1730 = vmatprep.subr.bf16.mxu0 %v1702
      %1731 = vmatpush1.bf16.msra.mxu0 %v1701
      %1732 = vmatprep.subr.bf16.mxu0 %v1700
      %1733 = vmatpush1.bf16.msra.mxu0 %v1699
      %1734 = vmatprep.subr.bf16.mxu0 0
      %1735 = vmatpush2.bf16.msra.mxu0 0
      %1736 = vmatprep.subr.bf16.mxu0 0
      %1737 = vmatpush2.bf16.msra.mxu0 0
      %1738 = vmatprep.subr.bf16.mxu0 0
      %1739 = vmatpush2.bf16.msra.mxu0 0
      %1740 = vmatprep.subr.bf16.mxu0 0
      %1741 = vmatpush2.bf16.msra.mxu0 0
      %1742 = vmatprep.subr.bf16.mxu0 0
      %1743 = vmatpush2.bf16.msra.mxu0 0
      %1744 = vmatprep.subr.bf16.mxu0 0
      %1745 = vmatpush2.bf16.msra.mxu0 0
      %1746 = vmatprep.subr.bf16.mxu0 0
      %1747 = vmatpush2.bf16.msra.mxu0 0
      %1748 = vmatprep.subr.bf16.mxu0 0
      %1749 = vmatpush2.bf16.msra.mxu0 0
      %1750 = vmatprep.mubr.bf16.mxu0 0
      %1751 = vmatmul.mubr.bf16.gmra.mxu0 %v1716
      %v1752 = vpop.f32.mrf.mxu0
      %v1753 = vadd.f32 0.0, %v1752
      %v1754 = vpop.f32.mrf.mxu0
      %v1755 = vadd.f32 0.0, %v1754
      %v1756 = vpop.f32.mrf.mxu0
      %v1757 = vadd.f32 0.0, %v1756
      %v1758 = vpop.f32.mrf.mxu0
      %v1759 = vadd.f32 0.0, %v1758
      %1760 = vdwg.mxu0
      %v1761 = vxor.u32 %v1753, 2147483648
      %v1762 = vxor.u32 %v1757, 2147483648
      %v1763 = vmul.f32 %v1761, 1.442695
      %v1764 = vpow.pop %v1763
      %v1765 = vmul.f32 %v1762, 1.442695
      %v1766 = vpow.pop %v1765
      %v1767 = vadd.f32 %v1764, 1.0
      %v1768 = vadd.f32 %v1766, 1.0
      %v1769 = vrcp.pop %v1767
      %v1770 = vmul.f32 1.0, %v1769
      %v1771 = vrcp.pop %v1768
      %v1772 = vmul.f32 1.0, %v1771
      %v1773 = vmul.f32 %v1753, %v1770
      %v1774 = vmul.f32 %v1757, %v1772
      %v1775 = vmul.f32 %v1773, %v1755
      %v1776 = vmul.f32 %v1774, %v1759
      %v1777 = vpack.c.bf16 %v1776, %v1775
      %v1778 = vld [vmem:[%s432] sm:$0xf]
      %v1779 = vld [vmem:[%s432 + $0x4] sm:$0xf]
      %v1780 = vld [vmem:[%s432 + $0x8] sm:$0xf]
      %v1781 = vld [vmem:[%s432 + $0xc] sm:$0xf]
      %v1782 = vld [vmem:[%s432 + $0x10] sm:$0xf]
      %v1783 = vld [vmem:[%s432 + $0x14] sm:$0xf]
      %v1784 = vld [vmem:[%s432 + $0x18] sm:$0xf]
      %v1785 = vld [vmem:[%s432 + $0x1c] sm:$0xf]
      %v1786 = vld [vmem:[%s432 + $0x20] sm:$0xf]
      %v1787 = vld [vmem:[%s432 + $0x24] sm:$0xf]
      %v1788 = vld [vmem:[%s432 + $0x28] sm:$0xf]
      %v1789 = vld [vmem:[%s432 + $0x2c] sm:$0xf]
      %v1790 = vld [vmem:[%s432 + $0x30] sm:$0xf]
      %v1791 = vld [vmem:[%s432 + $0x34] sm:$0xf]
      %v1792 = vld [vmem:[%s432 + $0x38] sm:$0xf]
      %v1793 = vld [vmem:[%s432 + $0x3c] sm:$0xf]
      %v1810 = vunpack.c.l.b16 %v1778
      %v1811 = vunpack.c.l.b16 %v1779
      %v1812 = vunpack.c.l.b16 %v1780
      %v1813 = vunpack.c.l.b16 %v1781
      %v1814 = vunpack.c.l.b16 %v1782
      %v1815 = vunpack.c.l.b16 %v1783
      %v1816 = vunpack.c.l.b16 %v1784
      %v1817 = vunpack.c.l.b16 %v1785
      %v1818 = vunpack.c.l.b16 %v1786
      %v1819 = vunpack.c.l.b16 %v1787
      %v1820 = vunpack.c.l.b16 %v1788
      %v1821 = vunpack.c.l.b16 %v1789
      %v1822 = vunpack.c.l.b16 %v1790
      %v1823 = vunpack.c.l.b16 %v1791
      %v1824 = vunpack.c.l.b16 %v1792
      %v1825 = vunpack.c.l.b16 %v1793
      %v1826 = vpack.c.b16 %v1811, %v1810
      %v1827 = vpack.c.b16 %v1813, %v1812
      %v1828 = vpack.c.b16 %v1815, %v1814
      %v1829 = vpack.c.b16 %v1817, %v1816
      %v1830 = vpack.c.b16 %v1819, %v1818
      %v1831 = vpack.c.b16 %v1821, %v1820
      %v1832 = vpack.c.b16 %v1823, %v1822
      %v1833 = vpack.c.b16 %v1825, %v1824
      %1842 = vmatprep.subr.bf16.mxu0 0
      %1843 = vmatpush1.bf16.msra.mxu0 %v1833
      %1844 = vmatprep.subr.bf16.mxu0 0
      %1845 = vmatpush1.bf16.msra.mxu0 %v1832
      %1846 = vmatprep.subr.bf16.mxu0 0
      %1847 = vmatpush1.bf16.msra.mxu0 %v1831
      %1848 = vmatprep.subr.bf16.mxu0 0
      %1849 = vmatpush1.bf16.msra.mxu0 %v1830
      %1850 = vmatprep.subr.bf16.mxu0 0
      %1851 = vmatpush1.bf16.msra.mxu0 %v1829
      %1852 = vmatprep.subr.bf16.mxu0 0
      %1853 = vmatpush1.bf16.msra.mxu0 %v1828
      %1854 = vmatprep.subr.bf16.mxu0 0
      %1855 = vmatpush1.bf16.msra.mxu0 %v1827
      %1856 = vmatprep.subr.bf16.mxu0 0
      %1857 = vmatpush1.bf16.msra.mxu0 %v1826
      %1858 = vmatprep.subr.bf16.mxu0 0
      %1859 = vmatpush2.bf16.msra.mxu0 0
      %1860 = vmatprep.subr.bf16.mxu0 0
      %1861 = vmatpush2.bf16.msra.mxu0 0
      %1862 = vmatprep.subr.bf16.mxu0 0
      %1863 = vmatpush2.bf16.msra.mxu0 0
      %1864 = vmatprep.subr.bf16.mxu0 0
      %1865 = vmatpush2.bf16.msra.mxu0 0
      %1866 = vmatprep.subr.bf16.mxu0 0
      %1867 = vmatpush2.bf16.msra.mxu0 0
      %1868 = vmatprep.subr.bf16.mxu0 0
      %1869 = vmatpush2.bf16.msra.mxu0 0
      %1870 = vmatprep.subr.bf16.mxu0 0
      %1871 = vmatpush2.bf16.msra.mxu0 0
      %1872 = vmatprep.subr.bf16.mxu0 0
      %1873 = vmatpush2.bf16.msra.mxu0 0
      %1874 = vmatprep.mubr.bf16.mxu0 0
      %1875 = vmatmul.mubr.bf16.gmra.mxu0 %v1777
      %v1876 = vpop.f32.mrf.mxu0
      %v1877 = vadd.f32 0.0, %v1876
      %v1878 = vpop.f32.mrf.mxu0
      %v1879 = vpop.f32.mrf.mxu0
      %v1880 = vadd.f32 0.0, %v1879
      %v1881 = vpop.f32.mrf.mxu0
      %1882 = vdwg.mxu0
      %v1883 = vadd.f32 %v1639, %v1877
      %v1884 = vadd.f32 %v1640, %v1880
      %1885 = vst.msk [vmem:[%s10] sm:$0xff] %vm448, %v1883
      %1886 = vst.msk [vmem:[%s10 + $0x8] sm:$0xff] %vm448, %v1884
      // Predicated region
      $region65: #{model_forward.6} parent=59 // pred_check
        %p1887 = pneg %p274
      $region66: #{model_forward.6} parent=59 // pred_check_branch
        %1889 = sbr.rel (%p1887) target = $region68
      $region67: #{model_forward.6} parent=59 // pred_region
        _
      $region68: #{model_forward.6} parent=59 // pred_fallthru
        _
      // Predicated region
      $region69: #{model_forward.6} parent=59 // pred_check
        %p1890 = pneg %p274
      $region70: #{model_forward.6} parent=59 // pred_check_branch
        %1892 = sbr.rel (%p1890) target = $region72
      $region71: #{model_forward.6} parent=59 // pred_region
        _
      $region72: #{model_forward.6} parent=59 // pred_fallthru
        _
    $region60: #{model_forward.6} parent=5 // pred_fallthru
      _
    %p1893 = scmp.le.s32.totalorder 2, %s16
    // Predicated region
    $region73: #{model_forward.6} parent=5 // pred_check
      %p1894 = pneg %p1893
    $region74: #{model_forward.6} parent=5 // pred_check_branch
      %1896 = sbr.rel (%p1894) target = $region76
    $region75: #{model_forward.6} parent=5 // pred_region
      %s1897 = ssub.s32 %s16, 2
    $region76: #{model_forward.6} parent=5 // pred_fallthru
      _
  $region6: #{model_forward.6} parent=0 // loop_footer
    %s20 = sadd.s32 1, %s16
  $region7: #{model_forward.6} parent=0 // loop_footer_branch
    %15 = sbr.rel target = $region3
  $region8: #{model_forward.6} parent=0 // loop_exit
    _

// kernel: model_forward.4
$region0: #{model_forward.4}
  #allocation0 [shape = 'u32[]', space=smem, size = 0x4, offset = 0x4, fixed_abs, tag = 'smem constant byte address 0x4 - core index']
  #allocation1 [shape = 'u32[144,128]{1,0:T(1,128)}', space=vmem, size = 0x12000, scoped, tag = 'internal scratch']
  %s0 = inlined_call_operand.vmem [shape: f32[16,128], index: 0, kind: input, shape index: {}]
  %s1 = inlined_call_operand.vmem [shape: f32[16,512], index: 1, kind: input, shape index: {}]
  %s2 = inlined_call_operand.vmem [shape: bf16[512,128], index: 2, kind: input, shape index: {}]
  %s3 = inlined_call_operand.vmem [shape: f32[1,128], index: 3, kind: input, shape index: {}]
  %s4 = inlined_call_operand.vmem [shape: bf16[8,256,96], index: 4, kind: input, shape index: {}]
  %s5 = inlined_call_operand.vmem [shape: bf16[8,32,128], index: 5, kind: input, shape index: {}]
  %s6 = inlined_call_operand.vmem [shape: f32[16,128], index: 6, kind: output, shape index: {}]
  %s7 = sld [smem:[#allocation0]]
  $region34: #{model_forward.4} parent=0
    _
  %s9 = ssub.s32 1, %s7
  %s10 = scalar_select 0, %s9, %s7
  // Predicated region
  $region2: #{model_forward.4} parent=0 // pred_check
    _
  $region3: #{model_forward.4} parent=0 // pred_check_branch
    %12 = sbr.rel (0) target = $region5
  $region4: #{model_forward.4} parent=0 // pred_region
    _
  $region5: #{model_forward.4} parent=0 // pred_fallthru
    _
  // Predicated region
  $region6: #{model_forward.4} parent=0 // pred_check
    _
  $region7: #{model_forward.4} parent=0 // pred_check_branch
    %14 = sbr.rel (0) target = $region9
  $region8: #{model_forward.4} parent=0 // pred_region
    _
  $region9: #{model_forward.4} parent=0 // pred_fallthru
    _
  // Predicated region
  $region10: #{model_forward.4} parent=0 // pred_check
    _
  $region11: #{model_forward.4} parent=0 // pred_check_branch
    %16 = sbr.rel (0) target = $region13
  $region12: #{model_forward.4} parent=0 // pred_region
    _
  $region13: #{model_forward.4} parent=0 // pred_fallthru
    _
  // Predicated region
  $region14: #{model_forward.4} parent=0 // pred_check
    _
  $region15: #{model_forward.4} parent=0 // pred_check_branch
    %18 = sbr.rel (0) target = $region17
  $region16: #{model_forward.4} parent=0 // pred_region
    _
  $region17: #{model_forward.4} parent=0 // pred_fallthru
    _
  // Predicated region
  $region18: #{model_forward.4} parent=0 // pred_check
    _
  $region19: #{model_forward.4} parent=0 // pred_check_branch
    %20 = sbr.rel (0) target = $region21
  $region20: #{model_forward.4} parent=0 // pred_region
    _
  $region21: #{model_forward.4} parent=0 // pred_fallthru
    _
  // Predicated region
  $region22: #{model_forward.4} parent=0 // pred_check
    _
  $region23: #{model_forward.4} parent=0 // pred_check_branch
    %22 = sbr.rel (0) target = $region25
  $region24: #{model_forward.4} parent=0 // pred_region
    _
  $region25: #{model_forward.4} parent=0 // pred_fallthru
    _
  %v24 = vld [vmem:[%s1] sm:$0xff]
  %v25 = vld [vmem:[%s1 + $0x8] sm:$0xff]
  %v26 = vld [vmem:[%s1 + $0x10] sm:$0xff]
  %v27 = vld [vmem:[%s1 + $0x18] sm:$0xff]
  %v28 = vld [vmem:[%s1 + $0x20] sm:$0xff]
  %v29 = vld [vmem:[%s1 + $0x28] sm:$0xff]
  %v30 = vld [vmem:[%s1 + $0x30] sm:$0xff]
  %v31 = vld [vmem:[%s1 + $0x38] sm:$0xff]
  %v32 = vpack.c.bf16 %v28, %v24
  %v33 = vpack.c.bf16 %v29, %v25
  %v34 = vpack.c.bf16 %v30, %v26
  %v35 = vpack.c.bf16 %v31, %v27
  %v36 = vld [vmem:[%s2] sm:$0xf]
  %v37 = vld [vmem:[%s2 + $0x4] sm:$0xf]
  %v38 = vld [vmem:[%s2 + $0x8] sm:$0xf]
  %v39 = vld [vmem:[%s2 + $0xc] sm:$0xf]
  %v40 = vld [vmem:[%s2 + $0x10] sm:$0xf]
  %v41 = vld [vmem:[%s2 + $0x14] sm:$0xf]
  %v42 = vld [vmem:[%s2 + $0x18] sm:$0xf]
  %v43 = vld [vmem:[%s2 + $0x1c] sm:$0xf]
  %v44 = vld [vmem:[%s2 + $0x20] sm:$0xf]
  %v45 = vld [vmem:[%s2 + $0x24] sm:$0xf]
  %v46 = vld [vmem:[%s2 + $0x28] sm:$0xf]
  %v47 = vld [vmem:[%s2 + $0x2c] sm:$0xf]
  %v48 = vld [vmem:[%s2 + $0x30] sm:$0xf]
  %v49 = vld [vmem:[%s2 + $0x34] sm:$0xf]
  %v50 = vld [vmem:[%s2 + $0x38] sm:$0xf]
  %v51 = vld [vmem:[%s2 + $0x3c] sm:$0xf]
  %v52 = vld [vmem:[%s2 + $0x40] sm:$0xf]
  %v53 = vld [vmem:[%s2 + $0x44] sm:$0xf]
  %v54 = vld [vmem:[%s2 + $0x48] sm:$0xf]
  %v55 = vld [vmem:[%s2 + $0x4c] sm:$0xf]
  %v56 = vld [vmem:[%s2 + $0x50] sm:$0xf]
  %v57 = vld [vmem:[%s2 + $0x54] sm:$0xf]
  %v58 = vld [vmem:[%s2 + $0x58] sm:$0xf]
  %v59 = vld [vmem:[%s2 + $0x5c] sm:$0xf]
  %v60 = vld [vmem:[%s2 + $0x60] sm:$0xf]
  %v61 = vld [vmem:[%s2 + $0x64] sm:$0xf]
  %v62 = vld [vmem:[%s2 + $0x68] sm:$0xf]
  %v63 = vld [vmem:[%s2 + $0x6c] sm:$0xf]
  %v64 = vld [vmem:[%s2 + $0x70] sm:$0xf]
  %v65 = vld [vmem:[%s2 + $0x74] sm:$0xf]
  %v66 = vld [vmem:[%s2 + $0x78] sm:$0xf]
  %v67 = vld [vmem:[%s2 + $0x7c] sm:$0xf]
  %v68 = vld [vmem:[%s2 + $0x80] sm:$0xf]
  %v69 = vld [vmem:[%s2 + $0x84] sm:$0xf]
  %v70 = vld [vmem:[%s2 + $0x88] sm:$0xf]
  %v71 = vld [vmem:[%s2 + $0x8c] sm:$0xf]
  %v72 = vld [vmem:[%s2 + $0x90] sm:$0xf]
  %v73 = vld [vmem:[%s2 + $0x94] sm:$0xf]
  %v74 = vld [vmem:[%s2 + $0x98] sm:$0xf]
  %v75 = vld [vmem:[%s2 + $0x9c] sm:$0xf]
  %v76 = vld [vmem:[%s2 + $0xa0] sm:$0xf]
  %v77 = vld [vmem:[%s2 + $0xa4] sm:$0xf]
  %v78 = vld [vmem:[%s2 + $0xa8] sm:$0xf]
  %v79 = vld [vmem:[%s2 + $0xac] sm:$0xf]
  %v80 = vld [vmem:[%s2 + $0xb0] sm:$0xf]
  %v81 = vld [vmem:[%s2 + $0xb4] sm:$0xf]
  %v82 = vld [vmem:[%s2 + $0xb8] sm:$0xf]
  %v83 = vld [vmem:[%s2 + $0xbc] sm:$0xf]
  %v84 = vld [vmem:[%s2 + $0xc0] sm:$0xf]
  %v85 = vld [vmem:[%s2 + $0xc4] sm:$0xf]
  %v86 = vld [vmem:[%s2 + $0xc8] sm:$0xf]
  %v87 = vld [vmem:[%s2 + $0xcc] sm:$0xf]
  %v88 = vld [vmem:[%s2 + $0xd0] sm:$0xf]
  %v89 = vld [vmem:[%s2 + $0xd4] sm:$0xf]
  %v90 = vld [vmem:[%s2 + $0xd8] sm:$0xf]
  %v91 = vld [vmem:[%s2 + $0xdc] sm:$0xf]
  %v92 = vld [vmem:[%s2 + $0xe0] sm:$0xf]
  %v93 = vld [vmem:[%s2 + $0xe4] sm:$0xf]
  %v94 = vld [vmem:[%s2 + $0xe8] sm:$0xf]
  %v95 = vld [vmem:[%s2 + $0xec] sm:$0xf]
  %v96 = vld [vmem:[%s2 + $0xf0] sm:$0xf]
  %v97 = vld [vmem:[%s2 + $0xf4] sm:$0xf]
  %v98 = vld [vmem:[%s2 + $0xf8] sm:$0xf]
  %v99 = vld [vmem:[%s2 + $0xfc] sm:$0xf]
  %v100 = vld [vmem:[%s3] sm:$0x1]
  %v102 = vlaneseq
  %v103 = vshrl.u32 %v102, 7
  %v104 = vsub.s32 0, %v103
  %v105 = vrot.slane %v100, %v104
  %v171 = vunpack.c.l.b16 %v36
  %v172 = vunpack.c.l.b16 %v37
  %v173 = vunpack.c.l.b16 %v38
  %v174 = vunpack.c.l.b16 %v39
  %v175 = vunpack.c.l.b16 %v40
  %v176 = vunpack.c.l.b16 %v41
  %v177 = vunpack.c.l.b16 %v42
  %v178 = vunpack.c.l.b16 %v43
  %v179 = vunpack.c.l.b16 %v44
  %v180 = vunpack.c.l.b16 %v45
  %v181 = vunpack.c.l.b16 %v46
  %v182 = vunpack.c.l.b16 %v47
  %v183 = vunpack.c.l.b16 %v48
  %v184 = vunpack.c.l.b16 %v49
  %v185 = vunpack.c.l.b16 %v50
  %v186 = vunpack.c.l.b16 %v51
  %v187 = vunpack.c.l.b16 %v52
  %v188 = vunpack.c.l.b16 %v53
  %v189 = vunpack.c.l.b16 %v54
  %v190 = vunpack.c.l.b16 %v55
  %v191 = vunpack.c.l.b16 %v56
  %v192 = vunpack.c.l.b16 %v57
  %v193 = vunpack.c.l.b16 %v58
  %v194 = vunpack.c.l.b16 %v59
  %v195 = vunpack.c.l.b16 %v60
  %v196 = vunpack.c.l.b16 %v61
  %v197 = vunpack.c.l.b16 %v62
  %v198 = vunpack.c.l.b16 %v63
  %v199 = vunpack.c.l.b16 %v64
  %v200 = vunpack.c.l.b16 %v65
  %v201 = vunpack.c.l.b16 %v66
  %v202 = vunpack.c.l.b16 %v67
  %v203 = vunpack.c.l.b16 %v68
  %v204 = vunpack.c.l.b16 %v69
  %v205 = vunpack.c.l.b16 %v70
  %v206 = vunpack.c.l.b16 %v71
  %v207 = vunpack.c.l.b16 %v72
  %v208 = vunpack.c.l.b16 %v73
  %v209 = vunpack.c.l.b16 %v74
  %v210 = vunpack.c.l.b16 %v75
  %v211 = vunpack.c.l.b16 %v76
  %v212 = vunpack.c.l.b16 %v77
  %v213 = vunpack.c.l.b16 %v78
  %v214 = vunpack.c.l.b16 %v79
  %v215 = vunpack.c.l.b16 %v80
  %v216 = vunpack.c.l.b16 %v81
  %v217 = vunpack.c.l.b16 %v82
  %v218 = vunpack.c.l.b16 %v83
  %v219 = vunpack.c.l.b16 %v84
  %v220 = vunpack.c.l.b16 %v85
  %v221 = vunpack.c.l.b16 %v86
  %v222 = vunpack.c.l.b16 %v87
  %v223 = vunpack.c.l.b16 %v88
  %v224 = vunpack.c.l.b16 %v89
  %v225 = vunpack.c.l.b16 %v90
  %v226 = vunpack.c.l.b16 %v91
  %v227 = vunpack.c.l.b16 %v92
  %v228 = vunpack.c.l.b16 %v93
  %v229 = vunpack.c.l.b16 %v94
  %v230 = vunpack.c.l.b16 %v95
  %v231 = vunpack.c.l.b16 %v96
  %v232 = vunpack.c.l.b16 %v97
  %v233 = vunpack.c.l.b16 %v98
  %v234 = vunpack.c.l.b16 %v99
  %v235 = vpack.c.b16 %v172, %v171
  %v236 = vpack.c.b16 %v174, %v173
  %v237 = vpack.c.b16 %v176, %v175
  %v238 = vpack.c.b16 %v178, %v177
  %v239 = vpack.c.b16 %v180, %v179
  %v240 = vpack.c.b16 %v182, %v181
  %v241 = vpack.c.b16 %v184, %v183
  %v242 = vpack.c.b16 %v186, %v185
  %v243 = vpack.c.b16 %v188, %v187
  %v244 = vpack.c.b16 %v190, %v189
  %v245 = vpack.c.b16 %v192, %v191
  %v246 = vpack.c.b16 %v194, %v193
  %v247 = vpack.c.b16 %v196, %v195
  %v248 = vpack.c.b16 %v198, %v197
  %v249 = vpack.c.b16 %v200, %v199
  %v250 = vpack.c.b16 %v202, %v201
  %v251 = vpack.c.b16 %v204, %v203
  %v252 = vpack.c.b16 %v206, %v205
  %v253 = vpack.c.b16 %v208, %v207
  %v254 = vpack.c.b16 %v210, %v209
  %v255 = vpack.c.b16 %v212, %v211
  %v256 = vpack.c.b16 %v214, %v213
  %v257 = vpack.c.b16 %v216, %v215
  %v258 = vpack.c.b16 %v218, %v217
  %v259 = vpack.c.b16 %v220, %v219
  %v260 = vpack.c.b16 %v222, %v221
  %v261 = vpack.c.b16 %v224, %v223
  %v262 = vpack.c.b16 %v226, %v225
  %v263 = vpack.c.b16 %v228, %v227
  %v264 = vpack.c.b16 %v230, %v229
  %v265 = vpack.c.b16 %v232, %v231
  %v266 = vpack.c.b16 %v234, %v233
  %299 = vmatprep.subr.bf16.mxu0 0
  %300 = vmatpush1.bf16.msra.mxu0 %v242
  %301 = vmatprep.subr.bf16.mxu0 0
  %302 = vmatpush1.bf16.msra.mxu0 %v241
  %303 = vmatprep.subr.bf16.mxu0 0
  %304 = vmatpush1.bf16.msra.mxu0 %v240
  %305 = vmatprep.subr.bf16.mxu0 0
  %306 = vmatpush1.bf16.msra.mxu0 %v239
  %307 = vmatprep.subr.bf16.mxu0 0
  %308 = vmatpush1.bf16.msra.mxu0 %v238
  %309 = vmatprep.subr.bf16.mxu0 0
  %310 = vmatpush1.bf16.msra.mxu0 %v237
  %311 = vmatprep.subr.bf16.mxu0 0
  %312 = vmatpush1.bf16.msra.mxu0 %v236
  %313 = vmatprep.subr.bf16.mxu0 0
  %314 = vmatpush1.bf16.msra.mxu0 %v235
  %315 = vmatprep.subr.bf16.mxu0 0
  %316 = vmatpush2.bf16.msra.mxu0 %v250
  %317 = vmatprep.subr.bf16.mxu0 0
  %318 = vmatpush2.bf16.msra.mxu0 %v249
  %319 = vmatprep.subr.bf16.mxu0 0
  %320 = vmatpush2.bf16.msra.mxu0 %v248
  %321 = vmatprep.subr.bf16.mxu0 0
  %322 = vmatpush2.bf16.msra.mxu0 %v247
  %323 = vmatprep.subr.bf16.mxu0 0
  %324 = vmatpush2.bf16.msra.mxu0 %v246
  %325 = vmatprep.subr.bf16.mxu0 0
  %326 = vmatpush2.bf16.msra.mxu0 %v245
  %327 = vmatprep.subr.bf16.mxu0 0
  %328 = vmatpush2.bf16.msra.mxu0 %v244
  %329 = vmatprep.subr.bf16.mxu0 0
  %330 = vmatpush2.bf16.msra.mxu0 %v243
  %331 = vmatprep.mubr.bf16.mxu0 %v33
  %332 = vmatmul.mubr.bf16.gmra.mxu0 %v32
  %v333 = vpop.f32.mrf.mxu0
  %v334 = vadd.f32 %v105, %v333
  %v335 = vpop.f32.mrf.mxu0
  %v336 = vpop.f32.mrf.mxu0
  %v337 = vadd.f32 %v105, %v336
  %v338 = vpop.f32.mrf.mxu0
  %339 = vdwg.mxu0
  %340 = vmatprep.subr.bf16.mxu0 0
  %341 = vmatpush1.bf16.msra.mxu0 %v258
  %342 = vmatprep.subr.bf16.mxu0 0
  %343 = vmatpush1.bf16.msra.mxu0 %v257
  %344 = vmatprep.subr.bf16.mxu0 0
  %345 = vmatpush1.bf16.msra.mxu0 %v256
  %346 = vmatprep.subr.bf16.mxu0 0
  %347 = vmatpush1.bf16.msra.mxu0 %v255
  %348 = vmatprep.subr.bf16.mxu0 0
  %349 = vmatpush1.bf16.msra.mxu0 %v254
  %350 = vmatprep.subr.bf16.mxu0 0
  %351 = vmatpush1.bf16.msra.mxu0 %v253
  %352 = vmatprep.subr.bf16.mxu0 0
  %353 = vmatpush1.bf16.msra.mxu0 %v252
  %354 = vmatprep.subr.bf16.mxu0 0
  %355 = vmatpush1.bf16.msra.mxu0 %v251
  %356 = vmatprep.subr.bf16.mxu0 0
  %357 = vmatpush2.bf16.msra.mxu0 %v266
  %358 = vmatprep.subr.bf16.mxu0 0
  %359 = vmatpush2.bf16.msra.mxu0 %v265
  %360 = vmatprep.subr.bf16.mxu0 0
  %361 = vmatpush2.bf16.msra.mxu0 %v264
  %362 = vmatprep.subr.bf16.mxu0 0
  %363 = vmatpush2.bf16.msra.mxu0 %v263
  %364 = vmatprep.subr.bf16.mxu0 0
  %365 = vmatpush2.bf16.msra.mxu0 %v262
  %366 = vmatprep.subr.bf16.mxu0 0
  %367 = vmatpush2.bf16.msra.mxu0 %v261
  %368 = vmatprep.subr.bf16.mxu0 0
  %369 = vmatpush2.bf16.msra.mxu0 %v260
  %370 = vmatprep.subr.bf16.mxu0 0
  %371 = vmatpush2.bf16.msra.mxu0 %v259
  %372 = vmatprep.mubr.bf16.mxu0 %v35
  %373 = vmatmul.mubr.bf16.gmra.mxu0 %v34
  %v374 = vpop.f32.mrf.mxu0
  %v375 = vadd.f32 %v334, %v374
  %v376 = vpop.f32.mrf.mxu0
  %v377 = vpop.f32.mrf.mxu0
  %v378 = vadd.f32 %v337, %v377
  %v379 = vpop.f32.mrf.mxu0
  %380 = vdwg.mxu0
  %v381 = vld [vmem:[%s0] sm:$0xff]
  %v382 = vld [vmem:[%s0 + $0x8] sm:$0xff]
  %v383 = vpack.c.bf16 %v382, %v381
  %v384 = vpack.c.bf16 %v378, %v375
  %v385 = vld [vmem:[%s4] sm:$0xf]
  %v386 = vld [vmem:[%s4 + $0x4] sm:$0xf]
  %v387 = vld [vmem:[%s4 + $0x8] sm:$0xf]
  %v388 = vld [vmem:[%s4 + $0xc] sm:$0xf]
  %v389 = vld [vmem:[%s4 + $0x10] sm:$0xf]
  %v390 = vld [vmem:[%s4 + $0x14] sm:$0xf]
  %v391 = vld [vmem:[%s4 + $0x18] sm:$0xf]
  %v392 = vld [vmem:[%s4 + $0x1c] sm:$0xf]
  %v393 = vld [vmem:[%s4 + $0x20] sm:$0xf]
  %v394 = vld [vmem:[%s4 + $0x24] sm:$0xf]
  %v395 = vld [vmem:[%s4 + $0x28] sm:$0xf]
  %v396 = vld [vmem:[%s4 + $0x2c] sm:$0xf]
  %v397 = vld [vmem:[%s4 + $0x30] sm:$0xf]
  %v398 = vld [vmem:[%s4 + $0x34] sm:$0xf]
  %v399 = vld [vmem:[%s4 + $0x38] sm:$0xf]
  %v400 = vld [vmem:[%s4 + $0x3c] sm:$0xf]
  %v401 = vld [vmem:[%s4 + $0x40] sm:$0xf]
  %v402 = vld [vmem:[%s4 + $0x44] sm:$0xf]
  %v403 = vld [vmem:[%s4 + $0x48] sm:$0xf]
  %v404 = vld [vmem:[%s4 + $0x4c] sm:$0xf]
  %v405 = vld [vmem:[%s4 + $0x50] sm:$0xf]
  %v406 = vld [vmem:[%s4 + $0x54] sm:$0xf]
  %v407 = vld [vmem:[%s4 + $0x58] sm:$0xf]
  %v408 = vld [vmem:[%s4 + $0x5c] sm:$0xf]
  %v409 = vld [vmem:[%s4 + $0x60] sm:$0xf]
  %v410 = vld [vmem:[%s4 + $0x64] sm:$0xf]
  %v411 = vld [vmem:[%s4 + $0x68] sm:$0xf]
  %v412 = vld [vmem:[%s4 + $0x6c] sm:$0xf]
  %v413 = vld [vmem:[%s4 + $0x70] sm:$0xf]
  %v414 = vld [vmem:[%s4 + $0x74] sm:$0xf]
  %v415 = vld [vmem:[%s4 + $0x78] sm:$0xf]
  %v416 = vld [vmem:[%s4 + $0x7c] sm:$0xf]
  %v417 = vld [vmem:[%s4 + $0x80] sm:$0xf]
  %v418 = vld [vmem:[%s4 + $0x84] sm:$0xf]
  %v419 = vld [vmem:[%s4 + $0x88] sm:$0xf]
  %v420 = vld [vmem:[%s4 + $0x8c] sm:$0xf]
  %v421 = vld [vmem:[%s4 + $0x90] sm:$0xf]
  %v422 = vld [vmem:[%s4 + $0x94] sm:$0xf]
  %v423 = vld [vmem:[%s4 + $0x98] sm:$0xf]
  %v424 = vld [vmem:[%s4 + $0x9c] sm:$0xf]
  %v425 = vld [vmem:[%s4 + $0xa0] sm:$0xf]
  %v426 = vld [vmem:[%s4 + $0xa4] sm:$0xf]
  %v427 = vld [vmem:[%s4 + $0xa8] sm:$0xf]
  %v428 = vld [vmem:[%s4 + $0xac] sm:$0xf]
  %v429 = vld [vmem:[%s4 + $0xb0] sm:$0xf]
  %v430 = vld [vmem:[%s4 + $0xb4] sm:$0xf]
  %v431 = vld [vmem:[%s4 + $0xb8] sm:$0xf]
  %v432 = vld [vmem:[%s4 + $0xbc] sm:$0xf]
  %v433 = vld [vmem:[%s4 + $0xc0] sm:$0xf]
  %v434 = vld [vmem:[%s4 + $0xc4] sm:$0xf]
  %v435 = vld [vmem:[%s4 + $0xc8] sm:$0xf]
  %v436 = vld [vmem:[%s4 + $0xcc] sm:$0xf]
  %v437 = vld [vmem:[%s4 + $0xd0] sm:$0xf]
  %v438 = vld [vmem:[%s4 + $0xd4] sm:$0xf]
  %v439 = vld [vmem:[%s4 + $0xd8] sm:$0xf]
  %v440 = vld [vmem:[%s4 + $0xdc] sm:$0xf]
  %v441 = vld [vmem:[%s4 + $0xe0] sm:$0xf]
  %v442 = vld [vmem:[%s4 + $0xe4] sm:$0xf]
  %v443 = vld [vmem:[%s4 + $0xe8] sm:$0xf]
  %v444 = vld [vmem:[%s4 + $0xec] sm:$0xf]
  %v445 = vld [vmem:[%s4 + $0xf0] sm:$0xf]
  %v446 = vld [vmem:[%s4 + $0xf4] sm:$0xf]
  %v447 = vld [vmem:[%s4 + $0xf8] sm:$0xf]
  %v448 = vld [vmem:[%s4 + $0xfc] sm:$0xf]
  %v449 = vld [vmem:[%s4 + $0x100] sm:$0xf]
  %v450 = vld [vmem:[%s4 + $0x104] sm:$0xf]
  %v451 = vld [vmem:[%s4 + $0x108] sm:$0xf]
  %v452 = vld [vmem:[%s4 + $0x10c] sm:$0xf]
  %v453 = vld [vmem:[%s4 + $0x110] sm:$0xf]
  %v454 = vld [vmem:[%s4 + $0x114] sm:$0xf]
  %v455 = vld [vmem:[%s4 + $0x118] sm:$0xf]
  %v456 = vld [vmem:[%s4 + $0x11c] sm:$0xf]
  %v457 = vld [vmem:[%s4 + $0x120] sm:$0xf]
  %v458 = vld [vmem:[%s4 + $0x124] sm:$0xf]
  %v459 = vld [vmem:[%s4 + $0x128] sm:$0xf]
  %v460 = vld [vmem:[%s4 + $0x12c] sm:$0xf]
  %v461 = vld [vmem:[%s4 + $0x130] sm:$0xf]
  %v462 = vld [vmem:[%s4 + $0x134] sm:$0xf]
  %v463 = vld [vmem:[%s4 + $0x138] sm:$0xf]
  %v464 = vld [vmem:[%s4 + $0x13c] sm:$0xf]
  %v465 = vld [vmem:[%s4 + $0x140] sm:$0xf]
  %v466 = vld [vmem:[%s4 + $0x144] sm:$0xf]
  %v467 = vld [vmem:[%s4 + $0x148] sm:$0xf]
  %v468 = vld [vmem:[%s4 + $0x14c] sm:$0xf]
  %v469 = vld [vmem:[%s4 + $0x150] sm:$0xf]
  %v470 = vld [vmem:[%s4 + $0x154] sm:$0xf]
  %v471 = vld [vmem:[%s4 + $0x158] sm:$0xf]
  %v472 = vld [vmem:[%s4 + $0x15c] sm:$0xf]
  %v473 = vld [vmem:[%s4 + $0x160] sm:$0xf]
  %v474 = vld [vmem:[%s4 + $0x164] sm:$0xf]
  %v475 = vld [vmem:[%s4 + $0x168] sm:$0xf]
  %v476 = vld [vmem:[%s4 + $0x16c] sm:$0xf]
  %v477 = vld [vmem:[%s4 + $0x170] sm:$0xf]
  %v478 = vld [vmem:[%s4 + $0x174] sm:$0xf]
  %v479 = vld [vmem:[%s4 + $0x178] sm:$0xf]
  %v480 = vld [vmem:[%s4 + $0x17c] sm:$0xf]
  %v481 = vld [vmem:[%s4 + $0x180] sm:$0xf]
  %v482 = vld [vmem:[%s4 + $0x184] sm:$0xf]
  %v483 = vld [vmem:[%s4 + $0x188] sm:$0xf]
  %v484 = vld [vmem:[%s4 + $0x18c] sm:$0xf]
  %v485 = vld [vmem:[%s4 + $0x190] sm:$0xf]
  %v486 = vld [vmem:[%s4 + $0x194] sm:$0xf]
  %v487 = vld [vmem:[%s4 + $0x198] sm:$0xf]
  %v488 = vld [vmem:[%s4 + $0x19c] sm:$0xf]
  %v489 = vld [vmem:[%s4 + $0x1a0] sm:$0xf]
  %v490 = vld [vmem:[%s4 + $0x1a4] sm:$0xf]
  %v491 = vld [vmem:[%s4 + $0x1a8] sm:$0xf]
  %v492 = vld [vmem:[%s4 + $0x1ac] sm:$0xf]
  %v493 = vld [vmem:[%s4 + $0x1b0] sm:$0xf]
  %v494 = vld [vmem:[%s4 + $0x1b4] sm:$0xf]
  %v495 = vld [vmem:[%s4 + $0x1b8] sm:$0xf]
  %v496 = vld [vmem:[%s4 + $0x1bc] sm:$0xf]
  %v497 = vld [vmem:[%s4 + $0x1c0] sm:$0xf]
  %v498 = vld [vmem:[%s4 + $0x1c4] sm:$0xf]
  %v499 = vld [vmem:[%s4 + $0x1c8] sm:$0xf]
  %v500 = vld [vmem:[%s4 + $0x1cc] sm:$0xf]
  %v501 = vld [vmem:[%s4 + $0x1d0] sm:$0xf]
  %v502 = vld [vmem:[%s4 + $0x1d4] sm:$0xf]
  %v503 = vld [vmem:[%s4 + $0x1d8] sm:$0xf]
  %v504 = vld [vmem:[%s4 + $0x1dc] sm:$0xf]
  %v505 = vld [vmem:[%s4 + $0x1e0] sm:$0xf]
  %v506 = vld [vmem:[%s4 + $0x1e4] sm:$0xf]
  %v507 = vld [vmem:[%s4 + $0x1e8] sm:$0xf]
  %v508 = vld [vmem:[%s4 + $0x1ec] sm:$0xf]
  %v509 = vld [vmem:[%s4 + $0x1f0] sm:$0xf]
  %v510 = vld [vmem:[%s4 + $0x1f4] sm:$0xf]
  %v511 = vld [vmem:[%s4 + $0x1f8] sm:$0xf]
  %v512 = vld [vmem:[%s4 + $0x1fc] sm:$0xf]
  %v513 = vld [vmem:[%s4 + $0x200] sm:$0xf]
  %v514 = vld [vmem:[%s4 + $0x204] sm:$0xf]
  %v515 = vld [vmem:[%s4 + $0x208] sm:$0xf]
  %v516 = vld [vmem:[%s4 + $0x20c] sm:$0xf]
  %v517 = vld [vmem:[%s4 + $0x210] sm:$0xf]
  %v518 = vld [vmem:[%s4 + $0x214] sm:$0xf]
  %v519 = vld [vmem:[%s4 + $0x218] sm:$0xf]
  %v520 = vld [vmem:[%s4 + $0x21c] sm:$0xf]
  %v521 = vld [vmem:[%s4 + $0x220] sm:$0xf]
  %v522 = vld [vmem:[%s4 + $0x224] sm:$0xf]
  %v523 = vld [vmem:[%s4 + $0x228] sm:$0xf]
  %v524 = vld [vmem:[%s4 + $0x22c] sm:$0xf]
  %v525 = vld [vmem:[%s4 + $0x230] sm:$0xf]
  %v526 = vld [vmem:[%s4 + $0x234] sm:$0xf]
  %v527 = vld [vmem:[%s4 + $0x238] sm:$0xf]
  %v528 = vld [vmem:[%s4 + $0x23c] sm:$0xf]
  %v529 = vld [vmem:[%s4 + $0x240] sm:$0xf]
  %v530 = vld [vmem:[%s4 + $0x244] sm:$0xf]
  %v531 = vld [vmem:[%s4 + $0x248] sm:$0xf]
  %v532 = vld [vmem:[%s4 + $0x24c] sm:$0xf]
  %v533 = vld [vmem:[%s4 + $0x250] sm:$0xf]
  %v534 = vld [vmem:[%s4 + $0x254] sm:$0xf]
  %v535 = vld [vmem:[%s4 + $0x258] sm:$0xf]
  %v536 = vld [vmem:[%s4 + $0x25c] sm:$0xf]
  %v537 = vld [vmem:[%s4 + $0x260] sm:$0xf]
  %v538 = vld [vmem:[%s4 + $0x264] sm:$0xf]
  %v539 = vld [vmem:[%s4 + $0x268] sm:$0xf]
  %v540 = vld [vmem:[%s4 + $0x26c] sm:$0xf]
  %v541 = vld [vmem:[%s4 + $0x270] sm:$0xf]
  %v542 = vld [vmem:[%s4 + $0x274] sm:$0xf]
  %v543 = vld [vmem:[%s4 + $0x278] sm:$0xf]
  %v544 = vld [vmem:[%s4 + $0x27c] sm:$0xf]
  %v545 = vld [vmem:[%s4 + $0x280] sm:$0xf]
  %v546 = vld [vmem:[%s4 + $0x284] sm:$0xf]
  %v547 = vld [vmem:[%s4 + $0x288] sm:$0xf]
  %v548 = vld [vmem:[%s4 + $0x28c] sm:$0xf]
  %v549 = vld [vmem:[%s4 + $0x290] sm:$0xf]
  %v550 = vld [vmem:[%s4 + $0x294] sm:$0xf]
  %v551 = vld [vmem:[%s4 + $0x298] sm:$0xf]
  %v552 = vld [vmem:[%s4 + $0x29c] sm:$0xf]
  %v553 = vld [vmem:[%s4 + $0x2a0] sm:$0xf]
  %v554 = vld [vmem:[%s4 + $0x2a4] sm:$0xf]
  %v555 = vld [vmem:[%s4 + $0x2a8] sm:$0xf]
  %v556 = vld [vmem:[%s4 + $0x2ac] sm:$0xf]
  %v557 = vld [vmem:[%s4 + $0x2b0] sm:$0xf]
  %v558 = vld [vmem:[%s4 + $0x2b4] sm:$0xf]
  %v559 = vld [vmem:[%s4 + $0x2b8] sm:$0xf]
  %v560 = vld [vmem:[%s4 + $0x2bc] sm:$0xf]
  %v561 = vld [vmem:[%s4 + $0x2c0] sm:$0xf]
  %v562 = vld [vmem:[%s4 + $0x2c4] sm:$0xf]
  %v563 = vld [vmem:[%s4 + $0x2c8] sm:$0xf]
  %v564 = vld [vmem:[%s4 + $0x2cc] sm:$0xf]
  %v565 = vld [vmem:[%s4 + $0x2d0] sm:$0xf]
  %v566 = vld [vmem:[%s4 + $0x2d4] sm:$0xf]
  %v567 = vld [vmem:[%s4 + $0x2d8] sm:$0xf]
  %v568 = vld [vmem:[%s4 + $0x2dc] sm:$0xf]
  %v569 = vld [vmem:[%s4 + $0x2e0] sm:$0xf]
  %v570 = vld [vmem:[%s4 + $0x2e4] sm:$0xf]
  %v571 = vld [vmem:[%s4 + $0x2e8] sm:$0xf]
  %v572 = vld [vmem:[%s4 + $0x2ec] sm:$0xf]
  %v573 = vld [vmem:[%s4 + $0x2f0] sm:$0xf]
  %v574 = vld [vmem:[%s4 + $0x2f4] sm:$0xf]
  %v575 = vld [vmem:[%s4 + $0x2f8] sm:$0xf]
  %v576 = vld [vmem:[%s4 + $0x2fc] sm:$0xf]
  %v577 = vld [vmem:[%s4 + $0x300] sm:$0xf]
  %v578 = vld [vmem:[%s4 + $0x304] sm:$0xf]
  %v579 = vld [vmem:[%s4 + $0x308] sm:$0xf]
  %v580 = vld [vmem:[%s4 + $0x30c] sm:$0xf]
  %v581 = vld [vmem:[%s4 + $0x310] sm:$0xf]
  %v582 = vld [vmem:[%s4 + $0x314] sm:$0xf]
  %v583 = vld [vmem:[%s4 + $0x318] sm:$0xf]
  %v584 = vld [vmem:[%s4 + $0x31c] sm:$0xf]
  %v585 = vld [vmem:[%s4 + $0x320] sm:$0xf]
  %v586 = vld [vmem:[%s4 + $0x324] sm:$0xf]
  %v587 = vld [vmem:[%s4 + $0x328] sm:$0xf]
  %v588 = vld [vmem:[%s4 + $0x32c] sm:$0xf]
  %v589 = vld [vmem:[%s4 + $0x330] sm:$0xf]
  %v590 = vld [vmem:[%s4 + $0x334] sm:$0xf]
  %v591 = vld [vmem:[%s4 + $0x338] sm:$0xf]
  %v592 = vld [vmem:[%s4 + $0x33c] sm:$0xf]
  %v593 = vld [vmem:[%s4 + $0x340] sm:$0xf]
  %v594 = vld [vmem:[%s4 + $0x344] sm:$0xf]
  %v595 = vld [vmem:[%s4 + $0x348] sm:$0xf]
  %v596 = vld [vmem:[%s4 + $0x34c] sm:$0xf]
  %v597 = vld [vmem:[%s4 + $0x350] sm:$0xf]
  %v598 = vld [vmem:[%s4 + $0x354] sm:$0xf]
  %v599 = vld [vmem:[%s4 + $0x358] sm:$0xf]
  %v600 = vld [vmem:[%s4 + $0x35c] sm:$0xf]
  %v601 = vld [vmem:[%s4 + $0x360] sm:$0xf]
  %v602 = vld [vmem:[%s4 + $0x364] sm:$0xf]
  %v603 = vld [vmem:[%s4 + $0x368] sm:$0xf]
  %v604 = vld [vmem:[%s4 + $0x36c] sm:$0xf]
  %v605 = vld [vmem:[%s4 + $0x370] sm:$0xf]
  %v606 = vld [vmem:[%s4 + $0x374] sm:$0xf]
  %v607 = vld [vmem:[%s4 + $0x378] sm:$0xf]
  %v608 = vld [vmem:[%s4 + $0x37c] sm:$0xf]
  %v609 = vld [vmem:[%s4 + $0x380] sm:$0xf]
  %v610 = vld [vmem:[%s4 + $0x384] sm:$0xf]
  %v611 = vld [vmem:[%s4 + $0x388] sm:$0xf]
  %v612 = vld [vmem:[%s4 + $0x38c] sm:$0xf]
  %v613 = vld [vmem:[%s4 + $0x390] sm:$0xf]
  %v614 = vld [vmem:[%s4 + $0x394] sm:$0xf]
  %v615 = vld [vmem:[%s4 + $0x398] sm:$0xf]
  %v616 = vld [vmem:[%s4 + $0x39c] sm:$0xf]
  %v617 = vld [vmem:[%s4 + $0x3a0] sm:$0xf]
  %v618 = vld [vmem:[%s4 + $0x3a4] sm:$0xf]
  %v619 = vld [vmem:[%s4 + $0x3a8] sm:$0xf]
  %v620 = vld [vmem:[%s4 + $0x3ac] sm:$0xf]
  %v621 = vld [vmem:[%s4 + $0x3b0] sm:$0xf]
  %v622 = vld [vmem:[%s4 + $0x3b4] sm:$0xf]
  %v623 = vld [vmem:[%s4 + $0x3b8] sm:$0xf]
  %v624 = vld [vmem:[%s4 + $0x3bc] sm:$0xf]
  %v625 = vld [vmem:[%s4 + $0x3c0] sm:$0xf]
  %v626 = vld [vmem:[%s4 + $0x3c4] sm:$0xf]
  %v627 = vld [vmem:[%s4 + $0x3c8] sm:$0xf]
  %v628 = vld [vmem:[%s4 + $0x3cc] sm:$0xf]
  %v629 = vld [vmem:[%s4 + $0x3d0] sm:$0xf]
  %v630 = vld [vmem:[%s4 + $0x3d4] sm:$0xf]
  %v631 = vld [vmem:[%s4 + $0x3d8] sm:$0xf]
  %v632 = vld [vmem:[%s4 + $0x3dc] sm:$0xf]
  %v633 = vld [vmem:[%s4 + $0x3e0] sm:$0xf]
  %v634 = vld [vmem:[%s4 + $0x3e4] sm:$0xf]
  %v635 = vld [vmem:[%s4 + $0x3e8] sm:$0xf]
  %v636 = vld [vmem:[%s4 + $0x3ec] sm:$0xf]
  %v637 = vld [vmem:[%s4 + $0x3f0] sm:$0xf]
  %v638 = vld [vmem:[%s4 + $0x3f4] sm:$0xf]
  %v639 = vld [vmem:[%s4 + $0x3f8] sm:$0xf]
  %v640 = vld [vmem:[%s4 + $0x3fc] sm:$0xf]
  %v673 = vunpack.c.l.b16 %v385
  %v674 = vunpack.c.l.b16 %v386
  %v675 = vunpack.c.l.b16 %v387
  %v676 = vunpack.c.l.b16 %v388
  %v677 = vunpack.c.l.b16 %v389
  %v678 = vunpack.c.l.b16 %v390
  %v679 = vunpack.c.l.b16 %v391
  %v680 = vunpack.c.l.b16 %v392
  %v681 = vunpack.c.l.b16 %v393
  %v682 = vunpack.c.l.b16 %v394
  %v683 = vunpack.c.l.b16 %v395
  %v684 = vunpack.c.l.b16 %v396
  %v685 = vunpack.c.l.b16 %v397
  %v686 = vunpack.c.l.b16 %v398
  %v687 = vunpack.c.l.b16 %v399
  %v688 = vunpack.c.l.b16 %v400
  %v689 = vunpack.c.l.b16 %v401
  %v690 = vunpack.c.l.b16 %v402
  %v691 = vunpack.c.l.b16 %v403
  %v692 = vunpack.c.l.b16 %v404
  %v693 = vunpack.c.l.b16 %v405
  %v694 = vunpack.c.l.b16 %v406
  %v695 = vunpack.c.l.b16 %v407
  %v696 = vunpack.c.l.b16 %v408
  %v697 = vunpack.c.l.b16 %v409
  %v698 = vunpack.c.l.b16 %v410
  %v699 = vunpack.c.l.b16 %v411
  %v700 = vunpack.c.l.b16 %v412
  %v701 = vunpack.c.l.b16 %v413
  %v702 = vunpack.c.l.b16 %v414
  %v703 = vunpack.c.l.b16 %v415
  %v704 = vunpack.c.l.b16 %v416
  %v705 = vpack.c.b16 %v674, %v673
  %v706 = vpack.c.b16 %v676, %v675
  %v707 = vpack.c.b16 %v678, %v677
  %v708 = vpack.c.b16 %v680, %v679
  %v709 = vpack.c.b16 %v682, %v681
  %v710 = vpack.c.b16 %v684, %v683
  %v711 = vpack.c.b16 %v686, %v685
  %v712 = vpack.c.b16 %v688, %v687
  %v713 = vpack.c.b16 %v690, %v689
  %v714 = vpack.c.b16 %v692, %v691
  %v715 = vpack.c.b16 %v694, %v693
  %v716 = vpack.c.b16 %v696, %v695
  %v717 = vpack.c.b16 %v698, %v697
  %v718 = vpack.c.b16 %v700, %v699
  %v719 = vpack.c.b16 %v702, %v701
  %v720 = vpack.c.b16 %v704, %v703
  %737 = vmatprep.subr.bf16.mxu0 0
  %738 = vmatpush1.bf16.msra.mxu0 %v712
  %739 = vmatprep.subr.bf16.mxu0 0
  %740 = vmatpush1.bf16.msra.mxu0 %v711
  %741 = vmatprep.subr.bf16.mxu0 0
  %742 = vmatpush1.bf16.msra.mxu0 %v710
  %743 = vmatprep.subr.bf16.mxu0 0
  %744 = vmatpush1.bf16.msra.mxu0 %v709
  %745 = vmatprep.subr.bf16.mxu0 0
  %746 = vmatpush1.bf16.msra.mxu0 %v708
  %747 = vmatprep.subr.bf16.mxu0 0
  %748 = vmatpush1.bf16.msra.mxu0 %v707
  %749 = vmatprep.subr.bf16.mxu0 0
  %750 = vmatpush1.bf16.msra.mxu0 %v706
  %751 = vmatprep.subr.bf16.mxu0 0
  %752 = vmatpush1.bf16.msra.mxu0 %v705
  %753 = vmatprep.subr.bf16.mxu0 0
  %754 = vmatpush2.bf16.msra.mxu0 %v720
  %755 = vmatprep.subr.bf16.mxu0 0
  %756 = vmatpush2.bf16.msra.mxu0 %v719
  %757 = vmatprep.subr.bf16.mxu0 0
  %758 = vmatpush2.bf16.msra.mxu0 %v718
  %759 = vmatprep.subr.bf16.mxu0 0
  %760 = vmatpush2.bf16.msra.mxu0 %v717
  %761 = vmatprep.subr.bf16.mxu0 0
  %762 = vmatpush2.bf16.msra.mxu0 %v716
  %763 = vmatprep.subr.bf16.mxu0 0
  %764 = vmatpush2.bf16.msra.mxu0 %v715
  %765 = vmatprep.subr.bf16.mxu0 0
  %766 = vmatpush2.bf16.msra.mxu0 %v714
  %767 = vmatprep.subr.bf16.mxu0 0
  %768 = vmatpush2.bf16.msra.mxu0 %v713
  %769 = vmatprep.mubr.bf16.mxu0 %v384
  %770 = vmatmul.mubr.bf16.gmra.mxu0 %v383
  %v771 = vpop.f32.mrf.mxu0
  %v772 = vadd.f32 0.0, %v771
  %v773 = vpop.f32.mrf.mxu0
  %v774 = vpop.f32.mrf.mxu0
  %v775 = vadd.f32 0.0, %v774
  %v776 = vpop.f32.mrf.mxu0
  %777 = vdwg.mxu0
  %v810 = vunpack.c.l.b16 %v417
  %v811 = vunpack.c.l.b16 %v418
  %v812 = vunpack.c.l.b16 %v419
  %v813 = vunpack.c.l.b16 %v420
  %v814 = vunpack.c.l.b16 %v421
  %v815 = vunpack.c.l.b16 %v422
  %v816 = vunpack.c.l.b16 %v423
  %v817 = vunpack.c.l.b16 %v424
  %v818 = vunpack.c.l.b16 %v425
  %v819 = vunpack.c.l.b16 %v426
  %v820 = vunpack.c.l.b16 %v427
  %v821 = vunpack.c.l.b16 %v428
  %v822 = vunpack.c.l.b16 %v429
  %v823 = vunpack.c.l.b16 %v430
  %v824 = vunpack.c.l.b16 %v431
  %v825 = vunpack.c.l.b16 %v432
  %v826 = vunpack.c.l.b16 %v433
  %v827 = vunpack.c.l.b16 %v434
  %v828 = vunpack.c.l.b16 %v435
  %v829 = vunpack.c.l.b16 %v436
  %v830 = vunpack.c.l.b16 %v437
  %v831 = vunpack.c.l.b16 %v438
  %v832 = vunpack.c.l.b16 %v439
  %v833 = vunpack.c.l.b16 %v440
  %v834 = vunpack.c.l.b16 %v441
  %v835 = vunpack.c.l.b16 %v442
  %v836 = vunpack.c.l.b16 %v443
  %v837 = vunpack.c.l.b16 %v444
  %v838 = vunpack.c.l.b16 %v445
  %v839 = vunpack.c.l.b16 %v446
  %v840 = vunpack.c.l.b16 %v447
  %v841 = vunpack.c.l.b16 %v448
  %v842 = vpack.c.b16 %v811, %v810
  %v843 = vpack.c.b16 %v813, %v812
  %v844 = vpack.c.b16 %v815, %v814
  %v845 = vpack.c.b16 %v817, %v816
  %v846 = vpack.c.b16 %v819, %v818
  %v847 = vpack.c.b16 %v821, %v820
  %v848 = vpack.c.b16 %v823, %v822
  %v849 = vpack.c.b16 %v825, %v824
  %v850 = vpack.c.b16 %v827, %v826
  %v851 = vpack.c.b16 %v829, %v828
  %v852 = vpack.c.b16 %v831, %v830
  %v853 = vpack.c.b16 %v833, %v832
  %v854 = vpack.c.b16 %v835, %v834
  %v855 = vpack.c.b16 %v837, %v836
  %v856 = vpack.c.b16 %v839, %v838
  %v857 = vpack.c.b16 %v841, %v840
  %874 = vmatprep.subr.bf16.mxu0 0
  %875 = vmatpush1.bf16.msra.mxu0 %v849
  %876 = vmatprep.subr.bf16.mxu0 0
  %877 = vmatpush1.bf16.msra.mxu0 %v848
  %878 = vmatprep.subr.bf16.mxu0 0
  %879 = vmatpush1.bf16.msra.mxu0 %v847
  %880 = vmatprep.subr.bf16.mxu0 0
  %881 = vmatpush1.bf16.msra.mxu0 %v846
  %882 = vmatprep.subr.bf16.mxu0 0
  %883 = vmatpush1.bf16.msra.mxu0 %v845
  %884 = vmatprep.subr.bf16.mxu0 0
  %885 = vmatpush1.bf16.msra.mxu0 %v844
  %886 = vmatprep.subr.bf16.mxu0 0
  %887 = vmatpush1.bf16.msra.mxu0 %v843
  %888 = vmatprep.subr.bf16.mxu0 0
  %889 = vmatpush1.bf16.msra.mxu0 %v842
  %890 = vmatprep.subr.bf16.mxu0 0
  %891 = vmatpush2.bf16.msra.mxu0 %v857
  %892 = vmatprep.subr.bf16.mxu0 0
  %893 = vmatpush2.bf16.msra.mxu0 %v856
  %894 = vmatprep.subr.bf16.mxu0 0
  %895 = vmatpush2.bf16.msra.mxu0 %v855
  %896 = vmatprep.subr.bf16.mxu0 0
  %897 = vmatpush2.bf16.msra.mxu0 %v854
  %898 = vmatprep.subr.bf16.mxu0 0
  %899 = vmatpush2.bf16.msra.mxu0 %v853
  %900 = vmatprep.subr.bf16.mxu0 0
  %901 = vmatpush2.bf16.msra.mxu0 %v852
  %902 = vmatprep.subr.bf16.mxu0 0
  %903 = vmatpush2.bf16.msra.mxu0 %v851
  %904 = vmatprep.subr.bf16.mxu0 0
  %905 = vmatpush2.bf16.msra.mxu0 %v850
  %906 = vmatprep.mubr.bf16.mxu0 %v384
  %907 = vmatmul.mubr.bf16.gmra.mxu0 %v383
  %v908 = vpop.f32.mrf.mxu0
  %v909 = vadd.f32 0.0, %v908
  %v910 = vpop.f32.mrf.mxu0
  %v911 = vpop.f32.mrf.mxu0
  %v912 = vadd.f32 0.0, %v911
  %v913 = vpop.f32.mrf.mxu0
  %914 = vdwg.mxu0
  %v947 = vunpack.c.l.b16 %v449
  %v948 = vunpack.c.l.b16 %v450
  %v949 = vunpack.c.l.b16 %v451
  %v950 = vunpack.c.l.b16 %v452
  %v951 = vunpack.c.l.b16 %v453
  %v952 = vunpack.c.l.b16 %v454
  %v953 = vunpack.c.l.b16 %v455
  %v954 = vunpack.c.l.b16 %v456
  %v955 = vunpack.c.l.b16 %v457
  %v956 = vunpack.c.l.b16 %v458
  %v957 = vunpack.c.l.b16 %v459
  %v958 = vunpack.c.l.b16 %v460
  %v959 = vunpack.c.l.b16 %v461
  %v960 = vunpack.c.l.b16 %v462
  %v961 = vunpack.c.l.b16 %v463
  %v962 = vunpack.c.l.b16 %v464
  %v963 = vunpack.c.l.b16 %v465
  %v964 = vunpack.c.l.b16 %v466
  %v965 = vunpack.c.l.b16 %v467
  %v966 = vunpack.c.l.b16 %v468
  %v967 = vunpack.c.l.b16 %v469
  %v968 = vunpack.c.l.b16 %v470
  %v969 = vunpack.c.l.b16 %v471
  %v970 = vunpack.c.l.b16 %v472
  %v971 = vunpack.c.l.b16 %v473
  %v972 = vunpack.c.l.b16 %v474
  %v973 = vunpack.c.l.b16 %v475
  %v974 = vunpack.c.l.b16 %v476
  %v975 = vunpack.c.l.b16 %v477
  %v976 = vunpack.c.l.b16 %v478
  %v977 = vunpack.c.l.b16 %v479
  %v978 = vunpack.c.l.b16 %v480
  %v979 = vpack.c.b16 %v948, %v947
  %v980 = vpack.c.b16 %v950, %v949
  %v981 = vpack.c.b16 %v952, %v951
  %v982 = vpack.c.b16 %v954, %v953
  %v983 = vpack.c.b16 %v956, %v955
  %v984 = vpack.c.b16 %v958, %v957
  %v985 = vpack.c.b16 %v960, %v959
  %v986 = vpack.c.b16 %v962, %v961
  %v987 = vpack.c.b16 %v964, %v963
  %v988 = vpack.c.b16 %v966, %v965
  %v989 = vpack.c.b16 %v968, %v967
  %v990 = vpack.c.b16 %v970, %v969
  %v991 = vpack.c.b16 %v972, %v971
  %v992 = vpack.c.b16 %v974, %v973
  %v993 = vpack.c.b16 %v976, %v975
  %v994 = vpack.c.b16 %v978, %v977
  %1011 = vmatprep.subr.bf16.mxu0 0
  %1012 = vmatpush1.bf16.msra.mxu0 %v986
  %1013 = vmatprep.subr.bf16.mxu0 0
  %1014 = vmatpush1.bf16.msra.mxu0 %v985
  %1015 = vmatprep.subr.bf16.mxu0 0
  %1016 = vmatpush1.bf16.msra.mxu0 %v984
  %1017 = vmatprep.subr.bf16.mxu0 0
  %1018 = vmatpush1.bf16.msra.mxu0 %v983
  %1019 = vmatprep.subr.bf16.mxu0 0
  %1020 = vmatpush1.bf16.msra.mxu0 %v982
  %1021 = vmatprep.subr.bf16.mxu0 0
  %1022 = vmatpush1.bf16.msra.mxu0 %v981
  %1023 = vmatprep.subr.bf16.mxu0 0
  %1024 = vmatpush1.bf16.msra.mxu0 %v980
  %1025 = vmatprep.subr.bf16.mxu0 0
  %1026 = vmatpush1.bf16.msra.mxu0 %v979
  %1027 = vmatprep.subr.bf16.mxu0 0
  %1028 = vmatpush2.bf16.msra.mxu0 %v994
  %1029 = vmatprep.subr.bf16.mxu0 0
  %1030 = vmatpush2.bf16.msra.mxu0 %v993
  %1031 = vmatprep.subr.bf16.mxu0 0
  %1032 = vmatpush2.bf16.msra.mxu0 %v992
  %1033 = vmatprep.subr.bf16.mxu0 0
  %1034 = vmatpush2.bf16.msra.mxu0 %v991
  %1035 = vmatprep.subr.bf16.mxu0 0
  %1036 = vmatpush2.bf16.msra.mxu0 %v990
  %1037 = vmatprep.subr.bf16.mxu0 0
  %1038 = vmatpush2.bf16.msra.mxu0 %v989
  %1039 = vmatprep.subr.bf16.mxu0 0
  %1040 = vmatpush2.bf16.msra.mxu0 %v988
  %1041 = vmatprep.subr.bf16.mxu0 0
  %1042 = vmatpush2.bf16.msra.mxu0 %v987
  %1043 = vmatprep.mubr.bf16.mxu0 %v384
  %1044 = vmatmul.mubr.bf16.gmra.mxu0 %v383
  %v1045 = vpop.f32.mrf.mxu0
  %v1046 = vadd.f32 0.0, %v1045
  %v1047 = vpop.f32.mrf.mxu0
  %v1048 = vpop.f32.mrf.mxu0
  %v1049 = vadd.f32 0.0, %v1048
  %v1050 = vpop.f32.mrf.mxu0
  %1051 = vdwg.mxu0
  %v1084 = vunpack.c.l.b16 %v481
  %v1085 = vunpack.c.l.b16 %v482
  %v1086 = vunpack.c.l.b16 %v483
  %v1087 = vunpack.c.l.b16 %v484
  %v1088 = vunpack.c.l.b16 %v485
  %v1089 = vunpack.c.l.b16 %v486
  %v1090 = vunpack.c.l.b16 %v487
  %v1091 = vunpack.c.l.b16 %v488
  %v1092 = vunpack.c.l.b16 %v489
  %v1093 = vunpack.c.l.b16 %v490
  %v1094 = vunpack.c.l.b16 %v491
  %v1095 = vunpack.c.l.b16 %v492
  %v1096 = vunpack.c.l.b16 %v493
  %v1097 = vunpack.c.l.b16 %v494
  %v1098 = vunpack.c.l.b16 %v495
  %v1099 = vunpack.c.l.b16 %v496
  %v1100 = vunpack.c.l.b16 %v497
  %v1101 = vunpack.c.l.b16 %v498
  %v1102 = vunpack.c.l.b16 %v499
  %v1103 = vunpack.c.l.b16 %v500
  %v1104 = vunpack.c.l.b16 %v501
  %v1105 = vunpack.c.l.b16 %v502
  %v1106 = vunpack.c.l.b16 %v503
  %v1107 = vunpack.c.l.b16 %v504
  %v1108 = vunpack.c.l.b16 %v505
  %v1109 = vunpack.c.l.b16 %v506
  %v1110 = vunpack.c.l.b16 %v507
  %v1111 = vunpack.c.l.b16 %v508
  %v1112 = vunpack.c.l.b16 %v509
  %v1113 = vunpack.c.l.b16 %v510
  %v1114 = vunpack.c.l.b16 %v511
  %v1115 = vunpack.c.l.b16 %v512
  %v1116 = vpack.c.b16 %v1085, %v1084
  %v1117 = vpack.c.b16 %v1087, %v1086
  %v1118 = vpack.c.b16 %v1089, %v1088
  %v1119 = vpack.c.b16 %v1091, %v1090
  %v1120 = vpack.c.b16 %v1093, %v1092
  %v1121 = vpack.c.b16 %v1095, %v1094
  %v1122 = vpack.c.b16 %v1097, %v1096
  %v1123 = vpack.c.b16 %v1099, %v1098
  %v1124 = vpack.c.b16 %v1101, %v1100
  %v1125 = vpack.c.b16 %v1103, %v1102
  %v1126 = vpack.c.b16 %v1105, %v1104
  %v1127 = vpack.c.b16 %v1107, %v1106
  %v1128 = vpack.c.b16 %v1109, %v1108
  %v1129 = vpack.c.b16 %v1111, %v1110
  %v1130 = vpack.c.b16 %v1113, %v1112
  %v1131 = vpack.c.b16 %v1115, %v1114
  %1148 = vmatprep.subr.bf16.mxu0 0
  %1149 = vmatpush1.bf16.msra.mxu0 %v1123
  %1150 = vmatprep.subr.bf16.mxu0 0
  %1151 = vmatpush1.bf16.msra.mxu0 %v1122
  %1152 = vmatprep.subr.bf16.mxu0 0
  %1153 = vmatpush1.bf16.msra.mxu0 %v1121
  %1154 = vmatprep.subr.bf16.mxu0 0
  %1155 = vmatpush1.bf16.msra.mxu0 %v1120
  %1156 = vmatprep.subr.bf16.mxu0 0
  %1157 = vmatpush1.bf16.msra.mxu0 %v1119
  %1158 = vmatprep.subr.bf16.mxu0 0
  %1159 = vmatpush1.bf16.msra.mxu0 %v1118
  %1160 = vmatprep.subr.bf16.mxu0 0
  %1161 = vmatpush1.bf16.msra.mxu0 %v1117
  %1162 = vmatprep.subr.bf16.mxu0 0
  %1163 = vmatpush1.bf16.msra.mxu0 %v1116
  %1164 = vmatprep.subr.bf16.mxu0 0
  %1165 = vmatpush2.bf16.msra.mxu0 %v1131
  %1166 = vmatprep.subr.bf16.mxu0 0
  %1167 = vmatpush2.bf16.msra.mxu0 %v1130
  %1168 = vmatprep.subr.bf16.mxu0 0
  %1169 = vmatpush2.bf16.msra.mxu0 %v1129
  %1170 = vmatprep.subr.bf16.mxu0 0
  %1171 = vmatpush2.bf16.msra.mxu0 %v1128
  %1172 = vmatprep.subr.bf16.mxu0 0
  %1173 = vmatpush2.bf16.msra.mxu0 %v1127
  %1174 = vmatprep.subr.bf16.mxu0 0
  %1175 = vmatpush2.bf16.msra.mxu0 %v1126
  %1176 = vmatprep.subr.bf16.mxu0 0
  %1177 = vmatpush2.bf16.msra.mxu0 %v1125
  %1178 = vmatprep.subr.bf16.mxu0 0
  %1179 = vmatpush2.bf16.msra.mxu0 %v1124
  %1180 = vmatprep.mubr.bf16.mxu0 %v384
  %1181 = vmatmul.mubr.bf16.gmra.mxu0 %v383
  %v1182 = vpop.f32.mrf.mxu0
  %v1183 = vadd.f32 0.0, %v1182
  %v1184 = vpop.f32.mrf.mxu0
  %v1185 = vpop.f32.mrf.mxu0
  %v1186 = vadd.f32 0.0, %v1185
  %v1187 = vpop.f32.mrf.mxu0
  %1188 = vdwg.mxu0
  %v1221 = vunpack.c.l.b16 %v513
  %v1222 = vunpack.c.l.b16 %v514
  %v1223 = vunpack.c.l.b16 %v515
  %v1224 = vunpack.c.l.b16 %v516
  %v1225 = vunpack.c.l.b16 %v517
  %v1226 = vunpack.c.l.b16 %v518
  %v1227 = vunpack.c.l.b16 %v519
  %v1228 = vunpack.c.l.b16 %v520
  %v1229 = vunpack.c.l.b16 %v521
  %v1230 = vunpack.c.l.b16 %v522
  %v1231 = vunpack.c.l.b16 %v523
  %v1232 = vunpack.c.l.b16 %v524
  %v1233 = vunpack.c.l.b16 %v525
  %v1234 = vunpack.c.l.b16 %v526
  %v1235 = vunpack.c.l.b16 %v527
  %v1236 = vunpack.c.l.b16 %v528
  %v1237 = vunpack.c.l.b16 %v529
  %v1238 = vunpack.c.l.b16 %v530
  %v1239 = vunpack.c.l.b16 %v531
  %v1240 = vunpack.c.l.b16 %v532
  %v1241 = vunpack.c.l.b16 %v533
  %v1242 = vunpack.c.l.b16 %v534
  %v1243 = vunpack.c.l.b16 %v535
  %v1244 = vunpack.c.l.b16 %v536
  %v1245 = vunpack.c.l.b16 %v537
  %v1246 = vunpack.c.l.b16 %v538
  %v1247 = vunpack.c.l.b16 %v539
  %v1248 = vunpack.c.l.b16 %v540
  %v1249 = vunpack.c.l.b16 %v541
  %v1250 = vunpack.c.l.b16 %v542
  %v1251 = vunpack.c.l.b16 %v543
  %v1252 = vunpack.c.l.b16 %v544
  %v1253 = vpack.c.b16 %v1222, %v1221
  %v1254 = vpack.c.b16 %v1224, %v1223
  %v1255 = vpack.c.b16 %v1226, %v1225
  %v1256 = vpack.c.b16 %v1228, %v1227
  %v1257 = vpack.c.b16 %v1230, %v1229
  %v1258 = vpack.c.b16 %v1232, %v1231
  %v1259 = vpack.c.b16 %v1234, %v1233
  %v1260 = vpack.c.b16 %v1236, %v1235
  %v1261 = vpack.c.b16 %v1238, %v1237
  %v1262 = vpack.c.b16 %v1240, %v1239
  %v1263 = vpack.c.b16 %v1242, %v1241
  %v1264 = vpack.c.b16 %v1244, %v1243
  %v1265 = vpack.c.b16 %v1246, %v1245
  %v1266 = vpack.c.b16 %v1248, %v1247
  %v1267 = vpack.c.b16 %v1250, %v1249
  %v1268 = vpack.c.b16 %v1252, %v1251
  %1285 = vmatprep.subr.bf16.mxu0 0
  %1286 = vmatpush1.bf16.msra.mxu0 %v1260
  %1287 = vmatprep.subr.bf16.mxu0 0
  %1288 = vmatpush1.bf16.msra.mxu0 %v1259
  %1289 = vmatprep.subr.bf16.mxu0 0
  %1290 = vmatpush1.bf16.msra.mxu0 %v1258
  %1291 = vmatprep.subr.bf16.mxu0 0
  %1292 = vmatpush1.bf16.msra.mxu0 %v1257
  %1293 = vmatprep.subr.bf16.mxu0 0
  %1294 = vmatpush1.bf16.msra.mxu0 %v1256
  %1295 = vmatprep.subr.bf16.mxu0 0
  %1296 = vmatpush1.bf16.msra.mxu0 %v1255
  %1297 = vmatprep.subr.bf16.mxu0 0
  %1298 = vmatpush1.bf16.msra.mxu0 %v1254
  %1299 = vmatprep.subr.bf16.mxu0 0
  %1300 = vmatpush1.bf16.msra.mxu0 %v1253
  %1301 = vmatprep.subr.bf16.mxu0 0
  %1302 = vmatpush2.bf16.msra.mxu0 %v1268
  %1303 = vmatprep.subr.bf16.mxu0 0
  %1304 = vmatpush2.bf16.msra.mxu0 %v1267
  %1305 = vmatprep.subr.bf16.mxu0 0
  %1306 = vmatpush2.bf16.msra.mxu0 %v1266
  %1307 = vmatprep.subr.bf16.mxu0 0
  %1308 = vmatpush2.bf16.msra.mxu0 %v1265
  %1309 = vmatprep.subr.bf16.mxu0 0
  %1310 = vmatpush2.bf16.msra.mxu0 %v1264
  %1311 = vmatprep.subr.bf16.mxu0 0
  %1312 = vmatpush2.bf16.msra.mxu0 %v1263
  %1313 = vmatprep.subr.bf16.mxu0 0
  %1314 = vmatpush2.bf16.msra.mxu0 %v1262
  %1315 = vmatprep.subr.bf16.mxu0 0
  %1316 = vmatpush2.bf16.msra.mxu0 %v1261
  %1317 = vmatprep.mubr.bf16.mxu0 %v384
  %1318 = vmatmul.mubr.bf16.gmra.mxu0 %v383
  %v1319 = vpop.f32.mrf.mxu0
  %v1320 = vadd.f32 0.0, %v1319
  %v1321 = vpop.f32.mrf.mxu0
  %v1322 = vpop.f32.mrf.mxu0
  %v1323 = vadd.f32 0.0, %v1322
  %v1324 = vpop.f32.mrf.mxu0
  %1325 = vdwg.mxu0
  %v1358 = vunpack.c.l.b16 %v545
  %v1359 = vunpack.c.l.b16 %v546
  %v1360 = vunpack.c.l.b16 %v547
  %v1361 = vunpack.c.l.b16 %v548
  %v1362 = vunpack.c.l.b16 %v549
  %v1363 = vunpack.c.l.b16 %v550
  %v1364 = vunpack.c.l.b16 %v551
  %v1365 = vunpack.c.l.b16 %v552
  %v1366 = vunpack.c.l.b16 %v553
  %v1367 = vunpack.c.l.b16 %v554
  %v1368 = vunpack.c.l.b16 %v555
  %v1369 = vunpack.c.l.b16 %v556
  %v1370 = vunpack.c.l.b16 %v557
  %v1371 = vunpack.c.l.b16 %v558
  %v1372 = vunpack.c.l.b16 %v559
  %v1373 = vunpack.c.l.b16 %v560
  %v1374 = vunpack.c.l.b16 %v561
  %v1375 = vunpack.c.l.b16 %v562
  %v1376 = vunpack.c.l.b16 %v563
  %v1377 = vunpack.c.l.b16 %v564
  %v1378 = vunpack.c.l.b16 %v565
  %v1379 = vunpack.c.l.b16 %v566
  %v1380 = vunpack.c.l.b16 %v567
  %v1381 = vunpack.c.l.b16 %v568
  %v1382 = vunpack.c.l.b16 %v569
  %v1383 = vunpack.c.l.b16 %v570
  %v1384 = vunpack.c.l.b16 %v571
  %v1385 = vunpack.c.l.b16 %v572
  %v1386 = vunpack.c.l.b16 %v573
  %v1387 = vunpack.c.l.b16 %v574
  %v1388 = vunpack.c.l.b16 %v575
  %v1389 = vunpack.c.l.b16 %v576
  %v1390 = vpack.c.b16 %v1359, %v1358
  %v1391 = vpack.c.b16 %v1361, %v1360
  %v1392 = vpack.c.b16 %v1363, %v1362
  %v1393 = vpack.c.b16 %v1365, %v1364
  %v1394 = vpack.c.b16 %v1367, %v1366
  %v1395 = vpack.c.b16 %v1369, %v1368
  %v1396 = vpack.c.b16 %v1371, %v1370
  %v1397 = vpack.c.b16 %v1373, %v1372
  %v1398 = vpack.c.b16 %v1375, %v1374
  %v1399 = vpack.c.b16 %v1377, %v1376
  %v1400 = vpack.c.b16 %v1379, %v1378
  %v1401 = vpack.c.b16 %v1381, %v1380
  %v1402 = vpack.c.b16 %v1383, %v1382
  %v1403 = vpack.c.b16 %v1385, %v1384
  %v1404 = vpack.c.b16 %v1387, %v1386
  %v1405 = vpack.c.b16 %v1389, %v1388
  %1422 = vmatprep.subr.bf16.mxu0 0
  %1423 = vmatpush1.bf16.msra.mxu0 %v1397
  %1424 = vmatprep.subr.bf16.mxu0 0
  %1425 = vmatpush1.bf16.msra.mxu0 %v1396
  %1426 = vmatprep.subr.bf16.mxu0 0
  %1427 = vmatpush1.bf16.msra.mxu0 %v1395
  %1428 = vmatprep.subr.bf16.mxu0 0
  %1429 = vmatpush1.bf16.msra.mxu0 %v1394
  %1430 = vmatprep.subr.bf16.mxu0 0
  %1431 = vmatpush1.bf16.msra.mxu0 %v1393
  %1432 = vmatprep.subr.bf16.mxu0 0
  %1433 = vmatpush1.bf16.msra.mxu0 %v1392
  %1434 = vmatprep.subr.bf16.mxu0 0
  %1435 = vmatpush1.bf16.msra.mxu0 %v1391
  %1436 = vmatprep.subr.bf16.mxu0 0
  %1437 = vmatpush1.bf16.msra.mxu0 %v1390
  %1438 = vmatprep.subr.bf16.mxu0 0
  %1439 = vmatpush2.bf16.msra.mxu0 %v1405
  %1440 = vmatprep.subr.bf16.mxu0 0
  %1441 = vmatpush2.bf16.msra.mxu0 %v1404
  %1442 = vmatprep.subr.bf16.mxu0 0
  %1443 = vmatpush2.bf16.msra.mxu0 %v1403
  %1444 = vmatprep.subr.bf16.mxu0 0
  %1445 = vmatpush2.bf16.msra.mxu0 %v1402
  %1446 = vmatprep.subr.bf16.mxu0 0
  %1447 = vmatpush2.bf16.msra.mxu0 %v1401
  %1448 = vmatprep.subr.bf16.mxu0 0
  %1449 = vmatpush2.bf16.msra.mxu0 %v1400
  %1450 = vmatprep.subr.bf16.mxu0 0
  %1451 = vmatpush2.bf16.msra.mxu0 %v1399
  %1452 = vmatprep.subr.bf16.mxu0 0
  %1453 = vmatpush2.bf16.msra.mxu0 %v1398
  %1454 = vmatprep.mubr.bf16.mxu0 %v384
  %1455 = vmatmul.mubr.bf16.gmra.mxu0 %v383
  %v1456 = vpop.f32.mrf.mxu0
  %v1457 = vadd.f32 0.0, %v1456
  %v1458 = vpop.f32.mrf.mxu0
  %v1459 = vpop.f32.mrf.mxu0
  %v1460 = vadd.f32 0.0, %v1459
  %v1461 = vpop.f32.mrf.mxu0
  %1462 = vdwg.mxu0
  %v1495 = vunpack.c.l.b16 %v577
  %v1496 = vunpack.c.l.b16 %v578
  %v1497 = vunpack.c.l.b16 %v579
  %v1498 = vunpack.c.l.b16 %v580
  %v1499 = vunpack.c.l.b16 %v581
  %v1500 = vunpack.c.l.b16 %v582
  %v1501 = vunpack.c.l.b16 %v583
  %v1502 = vunpack.c.l.b16 %v584
  %v1503 = vunpack.c.l.b16 %v585
  %v1504 = vunpack.c.l.b16 %v586
  %v1505 = vunpack.c.l.b16 %v587
  %v1506 = vunpack.c.l.b16 %v588
  %v1507 = vunpack.c.l.b16 %v589
  %v1508 = vunpack.c.l.b16 %v590
  %v1509 = vunpack.c.l.b16 %v591
  %v1510 = vunpack.c.l.b16 %v592
  %v1511 = vunpack.c.l.b16 %v593
  %v1512 = vunpack.c.l.b16 %v594
  %v1513 = vunpack.c.l.b16 %v595
  %v1514 = vunpack.c.l.b16 %v596
  %v1515 = vunpack.c.l.b16 %v597
  %v1516 = vunpack.c.l.b16 %v598
  %v1517 = vunpack.c.l.b16 %v599
  %v1518 = vunpack.c.l.b16 %v600
  %v1519 = vunpack.c.l.b16 %v601
  %v1520 = vunpack.c.l.b16 %v602
  %v1521 = vunpack.c.l.b16 %v603
  %v1522 = vunpack.c.l.b16 %v604
  %v1523 = vunpack.c.l.b16 %v605
  %v1524 = vunpack.c.l.b16 %v606
  %v1525 = vunpack.c.l.b16 %v607
  %v1526 = vunpack.c.l.b16 %v608
  %v1527 = vpack.c.b16 %v1496, %v1495
  %v1528 = vpack.c.b16 %v1498, %v1497
  %v1529 = vpack.c.b16 %v1500, %v1499
  %v1530 = vpack.c.b16 %v1502, %v1501
  %v1531 = vpack.c.b16 %v1504, %v1503
  %v1532 = vpack.c.b16 %v1506, %v1505
  %v1533 = vpack.c.b16 %v1508, %v1507
  %v1534 = vpack.c.b16 %v1510, %v1509
  %v1535 = vpack.c.b16 %v1512, %v1511
  %v1536 = vpack.c.b16 %v1514, %v1513
  %v1537 = vpack.c.b16 %v1516, %v1515
  %v1538 = vpack.c.b16 %v1518, %v1517
  %v1539 = vpack.c.b16 %v1520, %v1519
  %v1540 = vpack.c.b16 %v1522, %v1521
  %v1541 = vpack.c.b16 %v1524, %v1523
  %v1542 = vpack.c.b16 %v1526, %v1525
  %1559 = vmatprep.subr.bf16.mxu0 0
  %1560 = vmatpush1.bf16.msra.mxu0 %v1534
  %1561 = vmatprep.subr.bf16.mxu0 0
  %1562 = vmatpush1.bf16.msra.mxu0 %v1533
  %1563 = vmatprep.subr.bf16.mxu0 0
  %1564 = vmatpush1.bf16.msra.mxu0 %v1532
  %1565 = vmatprep.subr.bf16.mxu0 0
  %1566 = vmatpush1.bf16.msra.mxu0 %v1531
  %1567 = vmatprep.subr.bf16.mxu0 0
  %1568 = vmatpush1.bf16.msra.mxu0 %v1530
  %1569 = vmatprep.subr.bf16.mxu0 0
  %1570 = vmatpush1.bf16.msra.mxu0 %v1529
  %1571 = vmatprep.subr.bf16.mxu0 0
  %1572 = vmatpush1.bf16.msra.mxu0 %v1528
  %1573 = vmatprep.subr.bf16.mxu0 0
  %1574 = vmatpush1.bf16.msra.mxu0 %v1527
  %1575 = vmatprep.subr.bf16.mxu0 0
  %1576 = vmatpush2.bf16.msra.mxu0 %v1542
  %1577 = vmatprep.subr.bf16.mxu0 0
  %1578 = vmatpush2.bf16.msra.mxu0 %v1541
  %1579 = vmatprep.subr.bf16.mxu0 0
  %1580 = vmatpush2.bf16.msra.mxu0 %v1540
  %1581 = vmatprep.subr.bf16.mxu0 0
  %1582 = vmatpush2.bf16.msra.mxu0 %v1539
  %1583 = vmatprep.subr.bf16.mxu0 0
  %1584 = vmatpush2.bf16.msra.mxu0 %v1538
  %1585 = vmatprep.subr.bf16.mxu0 0
  %1586 = vmatpush2.bf16.msra.mxu0 %v1537
  %1587 = vmatprep.subr.bf16.mxu0 0
  %1588 = vmatpush2.bf16.msra.mxu0 %v1536
  %1589 = vmatprep.subr.bf16.mxu0 0
  %1590 = vmatpush2.bf16.msra.mxu0 %v1535
  %1591 = vmatprep.mubr.bf16.mxu0 %v384
  %1592 = vmatmul.mubr.bf16.gmra.mxu0 %v383
  %v1593 = vpop.f32.mrf.mxu0
  %v1594 = vadd.f32 0.0, %v1593
  %v1595 = vpop.f32.mrf.mxu0
  %v1596 = vpop.f32.mrf.mxu0
  %v1597 = vadd.f32 0.0, %v1596
  %v1598 = vpop.f32.mrf.mxu0
  %1599 = vdwg.mxu0
  %v1632 = vunpack.c.l.b16 %v609
  %v1633 = vunpack.c.l.b16 %v610
  %v1634 = vunpack.c.l.b16 %v611
  %v1635 = vunpack.c.l.b16 %v612
  %v1636 = vunpack.c.l.b16 %v613
  %v1637 = vunpack.c.l.b16 %v614
  %v1638 = vunpack.c.l.b16 %v615
  %v1639 = vunpack.c.l.b16 %v616
  %v1640 = vunpack.c.l.b16 %v617
  %v1641 = vunpack.c.l.b16 %v618
  %v1642 = vunpack.c.l.b16 %v619
  %v1643 = vunpack.c.l.b16 %v620
  %v1644 = vunpack.c.l.b16 %v621
  %v1645 = vunpack.c.l.b16 %v622
  %v1646 = vunpack.c.l.b16 %v623
  %v1647 = vunpack.c.l.b16 %v624
  %v1648 = vunpack.c.l.b16 %v625
  %v1649 = vunpack.c.l.b16 %v626
  %v1650 = vunpack.c.l.b16 %v627
  %v1651 = vunpack.c.l.b16 %v628
  %v1652 = vunpack.c.l.b16 %v629
  %v1653 = vunpack.c.l.b16 %v630
  %v1654 = vunpack.c.l.b16 %v631
  %v1655 = vunpack.c.l.b16 %v632
  %v1656 = vunpack.c.l.b16 %v633
  %v1657 = vunpack.c.l.b16 %v634
  %v1658 = vunpack.c.l.b16 %v635
  %v1659 = vunpack.c.l.b16 %v636
  %v1660 = vunpack.c.l.b16 %v637
  %v1661 = vunpack.c.l.b16 %v638
  %v1662 = vunpack.c.l.b16 %v639
  %v1663 = vunpack.c.l.b16 %v640
  %v1664 = vpack.c.b16 %v1633, %v1632
  %v1665 = vpack.c.b16 %v1635, %v1634
  %v1666 = vpack.c.b16 %v1637, %v1636
  %v1667 = vpack.c.b16 %v1639, %v1638
  %v1668 = vpack.c.b16 %v1641, %v1640
  %v1669 = vpack.c.b16 %v1643, %v1642
  %v1670 = vpack.c.b16 %v1645, %v1644
  %v1671 = vpack.c.b16 %v1647, %v1646
  %v1672 = vpack.c.b16 %v1649, %v1648
  %v1673 = vpack.c.b16 %v1651, %v1650
  %v1674 = vpack.c.b16 %v1653, %v1652
  %v1675 = vpack.c.b16 %v1655, %v1654
  %v1676 = vpack.c.b16 %v1657, %v1656
  %v1677 = vpack.c.b16 %v1659, %v1658
  %v1678 = vpack.c.b16 %v1661, %v1660
  %v1679 = vpack.c.b16 %v1663, %v1662
  %1696 = vmatprep.subr.bf16.mxu0 0
  %1697 = vmatpush1.bf16.msra.mxu0 %v1671
  %1698 = vmatprep.subr.bf16.mxu0 0
  %1699 = vmatpush1.bf16.msra.mxu0 %v1670
  %1700 = vmatprep.subr.bf16.mxu0 0
  %1701 = vmatpush1.bf16.msra.mxu0 %v1669
  %1702 = vmatprep.subr.bf16.mxu0 0
  %1703 = vmatpush1.bf16.msra.mxu0 %v1668
  %1704 = vmatprep.subr.bf16.mxu0 0
  %1705 = vmatpush1.bf16.msra.mxu0 %v1667
  %1706 = vmatprep.subr.bf16.mxu0 0
  %1707 = vmatpush1.bf16.msra.mxu0 %v1666
  %1708 = vmatprep.subr.bf16.mxu0 0
  %1709 = vmatpush1.bf16.msra.mxu0 %v1665
  %1710 = vmatprep.subr.bf16.mxu0 0
  %1711 = vmatpush1.bf16.msra.mxu0 %v1664
  %1712 = vmatprep.subr.bf16.mxu0 0
  %1713 = vmatpush2.bf16.msra.mxu0 %v1679
  %1714 = vmatprep.subr.bf16.mxu0 0
  %1715 = vmatpush2.bf16.msra.mxu0 %v1678
  %1716 = vmatprep.subr.bf16.mxu0 0
  %1717 = vmatpush2.bf16.msra.mxu0 %v1677
  %1718 = vmatprep.subr.bf16.mxu0 0
  %1719 = vmatpush2.bf16.msra.mxu0 %v1676
  %1720 = vmatprep.subr.bf16.mxu0 0
  %1721 = vmatpush2.bf16.msra.mxu0 %v1675
  %1722 = vmatprep.subr.bf16.mxu0 0
  %1723 = vmatpush2.bf16.msra.mxu0 %v1674
  %1724 = vmatprep.subr.bf16.mxu0 0
  %1725 = vmatpush2.bf16.msra.mxu0 %v1673
  %1726 = vmatprep.subr.bf16.mxu0 0
  %1727 = vmatpush2.bf16.msra.mxu0 %v1672
  %1728 = vmatprep.mubr.bf16.mxu0 %v384
  %1729 = vmatmul.mubr.bf16.gmra.mxu0 %v383
  %v1730 = vpop.f32.mrf.mxu0
  %v1731 = vadd.f32 0.0, %v1730
  %v1732 = vpop.f32.mrf.mxu0
  %v1733 = vpop.f32.mrf.mxu0
  %v1734 = vadd.f32 0.0, %v1733
  %v1735 = vpop.f32.mrf.mxu0
  %1736 = vdwg.mxu0
  %v1737 = vpack.c.bf16 %v775, %v772
  %v1738 = vpack.c.bf16 %v912, %v909
  %v1739 = vpack.c.bf16 %v1049, %v1046
  %v1740 = vpack.c.bf16 %v1186, %v1183
  %v1741 = vpack.c.bf16 %v1323, %v1320
  %v1742 = vpack.c.bf16 %v1460, %v1457
  %v1743 = vpack.c.bf16 %v1597, %v1594
  %v1744 = vpack.c.bf16 %v1734, %v1731
  %1746 = vrot.lane.b32.xlu0 %v1737, 96
  %v1747 = vpop.permute.xlu0 %1746
  %vm1748 = vcmask 261120
  %v1750 = vsel %vm1748, %v1737, 0
  %v1753 = vsel %vm1748, %v1747, 0
  %1755 = vmatprep.subr.bf16.mxu0 0
  %1756 = vmatpush1.bf16.xpose.msra.mxu0 0
  %1757 = vmatprep.subr.bf16.mxu0 0
  %1758 = vmatpush1.bf16.xpose.msra.mxu0 0
  %1759 = vmatprep.subr.bf16.mxu0 0
  %1760 = vmatpush1.bf16.xpose.msra.mxu0 0
  %1761 = vmatprep.subr.bf16.mxu0 0
  %1762 = vmatpush1.bf16.xpose.msra.mxu0 0
  %1763 = vmatprep.subr.bf16.mxu0 0
  %1764 = vmatpush1.bf16.xpose.msra.mxu0 0
  %1765 = vmatprep.subr.bf16.mxu0 0
  %1766 = vmatpush1.bf16.xpose.msra.mxu0 0
  %1767 = vmatprep.subr.bf16.mxu0 0
  %1768 = vmatpush1.bf16.xpose.msra.mxu0 0
  %1769 = vmatprep.subr.bf16.mxu0 0
  %1770 = vmatpush1.bf16.xpose.msra.mxu0 %v1753
  %1771 = vmatprep.subr.bf16.mxu0 0
  %1772 = vmatpush2.bf16.xpose.msra.mxu0 0
  %1773 = vmatprep.subr.bf16.mxu0 0
  %1774 = vmatpush2.bf16.xpose.msra.mxu0 0
  %1775 = vmatprep.subr.bf16.mxu0 0
  %1776 = vmatpush2.bf16.xpose.msra.mxu0 0
  %1777 = vmatprep.subr.bf16.mxu0 0
  %1778 = vmatpush2.bf16.xpose.msra.mxu0 0
  %1779 = vmatprep.subr.bf16.mxu0 0
  %1780 = vmatpush2.bf16.xpose.msra.mxu0 0
  %1781 = vmatprep.subr.bf16.mxu0 0
  %1782 = vmatpush2.bf16.xpose.msra.mxu0 0
  %1783 = vmatprep.subr.bf16.mxu0 0
  %1784 = vmatpush2.bf16.xpose.msra.mxu0 0
  %1785 = vmatprep.subr.bf16.mxu0 0
  %1786 = vmatpush2.bf16.xpose.msra.mxu0 0
  %1787 = vmatprep.mubr.bf16.mxu0 0
  %1788 = vmatmul.mubr.bf16.gmra.mxu0 %v1750
  %v1789 = vpop.f32.mrf.mxu0
  %v1790 = vadd.f32 0.0, %v1789
  %v1791 = vpop.f32.mrf.mxu0
  %v1792 = vpop.f32.mrf.mxu0
  %v1793 = vadd.f32 0.0, %v1792
  %v1794 = vpop.f32.mrf.mxu0
  %1795 = vdwg.mxu0
  %1797 = vrot.lane.b32.xlu0 %v1738, 96
  %v1798 = vpop.permute.xlu0 %1797
  %v1800 = vsel %vm1748, %v1738, 0
  %v1803 = vsel %vm1748, %v1798, 0
  %1805 = vmatprep.subr.bf16.mxu0 0
  %1806 = vmatpush1.bf16.xpose.msra.mxu0 0
  %1807 = vmatprep.subr.bf16.mxu0 0
  %1808 = vmatpush1.bf16.xpose.msra.mxu0 0
  %1809 = vmatprep.subr.bf16.mxu0 0
  %1810 = vmatpush1.bf16.xpose.msra.mxu0 0
  %1811 = vmatprep.subr.bf16.mxu0 0
  %1812 = vmatpush1.bf16.xpose.msra.mxu0 0
  %1813 = vmatprep.subr.bf16.mxu0 0
  %1814 = vmatpush1.bf16.xpose.msra.mxu0 0
  %1815 = vmatprep.subr.bf16.mxu0 0
  %1816 = vmatpush1.bf16.xpose.msra.mxu0 0
  %1817 = vmatprep.subr.bf16.mxu0 0
  %1818 = vmatpush1.bf16.xpose.msra.mxu0 0
  %1819 = vmatprep.subr.bf16.mxu0 0
  %1820 = vmatpush1.bf16.xpose.msra.mxu0 %v1803
  %1821 = vmatprep.subr.bf16.mxu0 0
  %1822 = vmatpush2.bf16.xpose.msra.mxu0 0
  %1823 = vmatprep.subr.bf16.mxu0 0
  %1824 = vmatpush2.bf16.xpose.msra.mxu0 0
  %1825 = vmatprep.subr.bf16.mxu0 0
  %1826 = vmatpush2.bf16.xpose.msra.mxu0 0
  %1827 = vmatprep.subr.bf16.mxu0 0
  %1828 = vmatpush2.bf16.xpose.msra.mxu0 0
  %1829 = vmatprep.subr.bf16.mxu0 0
  %1830 = vmatpush2.bf16.xpose.msra.mxu0 0
  %1831 = vmatprep.subr.bf16.mxu0 0
  %1832 = vmatpush2.bf16.xpose.msra.mxu0 0
  %1833 = vmatprep.subr.bf16.mxu0 0
  %1834 = vmatpush2.bf16.xpose.msra.mxu0 0
  %1835 = vmatprep.subr.bf16.mxu0 0
  %1836 = vmatpush2.bf16.xpose.msra.mxu0 0
  %1837 = vmatprep.mubr.bf16.mxu0 0
  %1838 = vmatmul.mubr.bf16.gmra.mxu0 %v1800
  %v1839 = vpop.f32.mrf.mxu0
  %v1840 = vadd.f32 0.0, %v1839
  %v1841 = vpop.f32.mrf.mxu0
  %v1842 = vpop.f32.mrf.mxu0
  %v1843 = vadd.f32 0.0, %v1842
  %v1844 = vpop.f32.mrf.mxu0
  %1845 = vdwg.mxu0
  %1847 = vrot.lane.b32.xlu0 %v1739, 96
  %v1848 = vpop.permute.xlu0 %1847
  %v1850 = vsel %vm1748, %v1739, 0
  %v1853 = vsel %vm1748, %v1848, 0
  %1855 = vmatprep.subr.bf16.mxu0 0
  %1856 = vmatpush1.bf16.xpose.msra.mxu0 0
  %1857 = vmatprep.subr.bf16.mxu0 0
  %1858 = vmatpush1.bf16.xpose.msra.mxu0 0
  %1859 = vmatprep.subr.bf16.mxu0 0
  %1860 = vmatpush1.bf16.xpose.msra.mxu0 0
  %1861 = vmatprep.subr.bf16.mxu0 0
  %1862 = vmatpush1.bf16.xpose.msra.mxu0 0
  %1863 = vmatprep.subr.bf16.mxu0 0
  %1864 = vmatpush1.bf16.xpose.msra.mxu0 0
  %1865 = vmatprep.subr.bf16.mxu0 0
  %1866 = vmatpush1.bf16.xpose.msra.mxu0 0
  %1867 = vmatprep.subr.bf16.mxu0 0
  %1868 = vmatpush1.bf16.xpose.msra.mxu0 0
  %1869 = vmatprep.subr.bf16.mxu0 0
  %1870 = vmatpush1.bf16.xpose.msra.mxu0 %v1853
  %1871 = vmatprep.subr.bf16.mxu0 0
  %1872 = vmatpush2.bf16.xpose.msra.mxu0 0
  %1873 = vmatprep.subr.bf16.mxu0 0
  %1874 = vmatpush2.bf16.xpose.msra.mxu0 0
  %1875 = vmatprep.subr.bf16.mxu0 0
  %1876 = vmatpush2.bf16.xpose.msra.mxu0 0
  %1877 = vmatprep.subr.bf16.mxu0 0
  %1878 = vmatpush2.bf16.xpose.msra.mxu0 0
  %1879 = vmatprep.subr.bf16.mxu0 0
  %1880 = vmatpush2.bf16.xpose.msra.mxu0 0
  %1881 = vmatprep.subr.bf16.mxu0 0
  %1882 = vmatpush2.bf16.xpose.msra.mxu0 0
  %1883 = vmatprep.subr.bf16.mxu0 0
  %1884 = vmatpush2.bf16.xpose.msra.mxu0 0
  %1885 = vmatprep.subr.bf16.mxu0 0
  %1886 = vmatpush2.bf16.xpose.msra.mxu0 0
  %1887 = vmatprep.mubr.bf16.mxu0 0
  %1888 = vmatmul.mubr.bf16.gmra.mxu0 %v1850
  %v1889 = vpop.f32.mrf.mxu0
  %v1890 = vadd.f32 0.0, %v1889
  %v1891 = vpop.f32.mrf.mxu0
  %v1892 = vpop.f32.mrf.mxu0
  %v1893 = vadd.f32 0.0, %v1892
  %v1894 = vpop.f32.mrf.mxu0
  %1895 = vdwg.mxu0
  %1897 = vrot.lane.b32.xlu0 %v1740, 96
  %v1898 = vpop.permute.xlu0 %1897
  %v1900 = vsel %vm1748, %v1740, 0
  %v1903 = vsel %vm1748, %v1898, 0
  %1905 = vmatprep.subr.bf16.mxu0 0
  %1906 = vmatpush1.bf16.xpose.msra.mxu0 0
  %1907 = vmatprep.subr.bf16.mxu0 0
  %1908 = vmatpush1.bf16.xpose.msra.mxu0 0
  %1909 = vmatprep.subr.bf16.mxu0 0
  %1910 = vmatpush1.bf16.xpose.msra.mxu0 0
  %1911 = vmatprep.subr.bf16.mxu0 0
  %1912 = vmatpush1.bf16.xpose.msra.mxu0 0
  %1913 = vmatprep.subr.bf16.mxu0 0
  %1914 = vmatpush1.bf16.xpose.msra.mxu0 0
  %1915 = vmatprep.subr.bf16.mxu0 0
  %1916 = vmatpush1.bf16.xpose.msra.mxu0 0
  %1917 = vmatprep.subr.bf16.mxu0 0
  %1918 = vmatpush1.bf16.xpose.msra.mxu0 0
  %1919 = vmatprep.subr.bf16.mxu0 0
  %1920 = vmatpush1.bf16.xpose.msra.mxu0 %v1903
  %1921 = vmatprep.subr.bf16.mxu0 0
  %1922 = vmatpush2.bf16.xpose.msra.mxu0 0
  %1923 = vmatprep.subr.bf16.mxu0 0
  %1924 = vmatpush2.bf16.xpose.msra.mxu0 0
  %1925 = vmatprep.subr.bf16.mxu0 0
  %1926 = vmatpush2.bf16.xpose.msra.mxu0 0
  %1927 = vmatprep.subr.bf16.mxu0 0
  %1928 = vmatpush2.bf16.xpose.msra.mxu0 0
  %1929 = vmatprep.subr.bf16.mxu0 0
  %1930 = vmatpush2.bf16.xpose.msra.mxu0 0
  %1931 = vmatprep.subr.bf16.mxu0 0
  %1932 = vmatpush2.bf16.xpose.msra.mxu0 0
  %1933 = vmatprep.subr.bf16.mxu0 0
  %1934 = vmatpush2.bf16.xpose.msra.mxu0 0
  %1935 = vmatprep.subr.bf16.mxu0 0
  %1936 = vmatpush2.bf16.xpose.msra.mxu0 0
  %1937 = vmatprep.mubr.bf16.mxu0 0
  %1938 = vmatmul.mubr.bf16.gmra.mxu0 %v1900
  %v1939 = vpop.f32.mrf.mxu0
  %v1940 = vadd.f32 0.0, %v1939
  %v1941 = vpop.f32.mrf.mxu0
  %v1942 = vpop.f32.mrf.mxu0
  %v1943 = vadd.f32 0.0, %v1942
  %v1944 = vpop.f32.mrf.mxu0
  %1945 = vdwg.mxu0
  %1947 = vrot.lane.b32.xlu0 %v1741, 96
  %v1948 = vpop.permute.xlu0 %1947
  %v1950 = vsel %vm1748, %v1741, 0
  %v1953 = vsel %vm1748, %v1948, 0
  %1955 = vmatprep.subr.bf16.mxu0 0
  %1956 = vmatpush1.bf16.xpose.msra.mxu0 0
  %1957 = vmatprep.subr.bf16.mxu0 0
  %1958 = vmatpush1.bf16.xpose.msra.mxu0 0
  %1959 = vmatprep.subr.bf16.mxu0 0
  %1960 = vmatpush1.bf16.xpose.msra.mxu0 0
  %1961 = vmatprep.subr.bf16.mxu0 0
  %1962 = vmatpush1.bf16.xpose.msra.mxu0 0
  %1963 = vmatprep.subr.bf16.mxu0 0
  %1964 = vmatpush1.bf16.xpose.msra.mxu0 0
  %1965 = vmatprep.subr.bf16.mxu0 0
  %1966 = vmatpush1.bf16.xpose.msra.mxu0 0
  %1967 = vmatprep.subr.bf16.mxu0 0
  %1968 = vmatpush1.bf16.xpose.msra.mxu0 0
  %1969 = vmatprep.subr.bf16.mxu0 0
  %1970 = vmatpush1.bf16.xpose.msra.mxu0 %v1953
  %1971 = vmatprep.subr.bf16.mxu0 0
  %1972 = vmatpush2.bf16.xpose.msra.mxu0 0
  %1973 = vmatprep.subr.bf16.mxu0 0
  %1974 = vmatpush2.bf16.xpose.msra.mxu0 0
  %1975 = vmatprep.subr.bf16.mxu0 0
  %1976 = vmatpush2.bf16.xpose.msra.mxu0 0
  %1977 = vmatprep.subr.bf16.mxu0 0
  %1978 = vmatpush2.bf16.xpose.msra.mxu0 0
  %1979 = vmatprep.subr.bf16.mxu0 0
  %1980 = vmatpush2.bf16.xpose.msra.mxu0 0
  %1981 = vmatprep.subr.bf16.mxu0 0
  %1982 = vmatpush2.bf16.xpose.msra.mxu0 0
  %1983 = vmatprep.subr.bf16.mxu0 0
  %1984 = vmatpush2.bf16.xpose.msra.mxu0 0
  %1985 = vmatprep.subr.bf16.mxu0 0
  %1986 = vmatpush2.bf16.xpose.msra.mxu0 0
  %1987 = vmatprep.mubr.bf16.mxu0 0
  %1988 = vmatmul.mubr.bf16.gmra.mxu0 %v1950
  %v1989 = vpop.f32.mrf.mxu0
  %v1990 = vadd.f32 0.0, %v1989
  %v1991 = vpop.f32.mrf.mxu0
  %v1992 = vpop.f32.mrf.mxu0
  %v1993 = vadd.f32 0.0, %v1992
  %v1994 = vpop.f32.mrf.mxu0
  %1995 = vdwg.mxu0
  %1997 = vrot.lane.b32.xlu0 %v1742, 96
  %v1998 = vpop.permute.xlu0 %1997
  %v2000 = vsel %vm1748, %v1742, 0
  %v2003 = vsel %vm1748, %v1998, 0
  %2005 = vmatprep.subr.bf16.mxu0 0
  %2006 = vmatpush1.bf16.xpose.msra.mxu0 0
  %2007 = vmatprep.subr.bf16.mxu0 0
  %2008 = vmatpush1.bf16.xpose.msra.mxu0 0
  %2009 = vmatprep.subr.bf16.mxu0 0
  %2010 = vmatpush1.bf16.xpose.msra.mxu0 0
  %2011 = vmatprep.subr.bf16.mxu0 0
  %2012 = vmatpush1.bf16.xpose.msra.mxu0 0
  %2013 = vmatprep.subr.bf16.mxu0 0
  %2014 = vmatpush1.bf16.xpose.msra.mxu0 0
  %2015 = vmatprep.subr.bf16.mxu0 0
  %2016 = vmatpush1.bf16.xpose.msra.mxu0 0
  %2017 = vmatprep.subr.bf16.mxu0 0
  %2018 = vmatpush1.bf16.xpose.msra.mxu0 0
  %2019 = vmatprep.subr.bf16.mxu0 0
  %2020 = vmatpush1.bf16.xpose.msra.mxu0 %v2003
  %2021 = vmatprep.subr.bf16.mxu0 0
  %2022 = vmatpush2.bf16.xpose.msra.mxu0 0
  %2023 = vmatprep.subr.bf16.mxu0 0
  %2024 = vmatpush2.bf16.xpose.msra.mxu0 0
  %2025 = vmatprep.subr.bf16.mxu0 0
  %2026 = vmatpush2.bf16.xpose.msra.mxu0 0
  %2027 = vmatprep.subr.bf16.mxu0 0
  %2028 = vmatpush2.bf16.xpose.msra.mxu0 0
  %2029 = vmatprep.subr.bf16.mxu0 0
  %2030 = vmatpush2.bf16.xpose.msra.mxu0 0
  %2031 = vmatprep.subr.bf16.mxu0 0
  %2032 = vmatpush2.bf16.xpose.msra.mxu0 0
  %2033 = vmatprep.subr.bf16.mxu0 0
  %2034 = vmatpush2.bf16.xpose.msra.mxu0 0
  %2035 = vmatprep.subr.bf16.mxu0 0
  %2036 = vmatpush2.bf16.xpose.msra.mxu0 0
  %2037 = vmatprep.mubr.bf16.mxu0 0
  %2038 = vmatmul.mubr.bf16.gmra.mxu0 %v2000
  %v2039 = vpop.f32.mrf.mxu0
  %v2040 = vadd.f32 0.0, %v2039
  %v2041 = vpop.f32.mrf.mxu0
  %v2042 = vpop.f32.mrf.mxu0
  %v2043 = vadd.f32 0.0, %v2042
  %v2044 = vpop.f32.mrf.mxu0
  %2045 = vdwg.mxu0
  %2047 = vrot.lane.b32.xlu0 %v1743, 96
  %v2048 = vpop.permute.xlu0 %2047
  %v2050 = vsel %vm1748, %v1743, 0
  %v2053 = vsel %vm1748, %v2048, 0
  %2055 = vmatprep.subr.bf16.mxu0 0
  %2056 = vmatpush1.bf16.xpose.msra.mxu0 0
  %2057 = vmatprep.subr.bf16.mxu0 0
  %2058 = vmatpush1.bf16.xpose.msra.mxu0 0
  %2059 = vmatprep.subr.bf16.mxu0 0
  %2060 = vmatpush1.bf16.xpose.msra.mxu0 0
  %2061 = vmatprep.subr.bf16.mxu0 0
  %2062 = vmatpush1.bf16.xpose.msra.mxu0 0
  %2063 = vmatprep.subr.bf16.mxu0 0
  %2064 = vmatpush1.bf16.xpose.msra.mxu0 0
  %2065 = vmatprep.subr.bf16.mxu0 0
  %2066 = vmatpush1.bf16.xpose.msra.mxu0 0
  %2067 = vmatprep.subr.bf16.mxu0 0
  %2068 = vmatpush1.bf16.xpose.msra.mxu0 0
  %2069 = vmatprep.subr.bf16.mxu0 0
  %2070 = vmatpush1.bf16.xpose.msra.mxu0 %v2053
  %2071 = vmatprep.subr.bf16.mxu0 0
  %2072 = vmatpush2.bf16.xpose.msra.mxu0 0
  %2073 = vmatprep.subr.bf16.mxu0 0
  %2074 = vmatpush2.bf16.xpose.msra.mxu0 0
  %2075 = vmatprep.subr.bf16.mxu0 0
  %2076 = vmatpush2.bf16.xpose.msra.mxu0 0
  %2077 = vmatprep.subr.bf16.mxu0 0
  %2078 = vmatpush2.bf16.xpose.msra.mxu0 0
  %2079 = vmatprep.subr.bf16.mxu0 0
  %2080 = vmatpush2.bf16.xpose.msra.mxu0 0
  %2081 = vmatprep.subr.bf16.mxu0 0
  %2082 = vmatpush2.bf16.xpose.msra.mxu0 0
  %2083 = vmatprep.subr.bf16.mxu0 0
  %2084 = vmatpush2.bf16.xpose.msra.mxu0 0
  %2085 = vmatprep.subr.bf16.mxu0 0
  %2086 = vmatpush2.bf16.xpose.msra.mxu0 0
  %2087 = vmatprep.mubr.bf16.mxu0 0
  %2088 = vmatmul.mubr.bf16.gmra.mxu0 %v2050
  %v2089 = vpop.f32.mrf.mxu0
  %v2090 = vadd.f32 0.0, %v2089
  %v2091 = vpop.f32.mrf.mxu0
  %v2092 = vpop.f32.mrf.mxu0
  %v2093 = vadd.f32 0.0, %v2092
  %v2094 = vpop.f32.mrf.mxu0
  %2095 = vdwg.mxu0
  %2097 = vrot.lane.b32.xlu0 %v1744, 96
  %v2098 = vpop.permute.xlu0 %2097
  %v2100 = vsel %vm1748, %v1744, 0
  %v2103 = vsel %vm1748, %v2098, 0
  %2105 = vmatprep.subr.bf16.mxu0 0
  %2106 = vmatpush1.bf16.xpose.msra.mxu0 0
  %2107 = vmatprep.subr.bf16.mxu0 0
  %2108 = vmatpush1.bf16.xpose.msra.mxu0 0
  %2109 = vmatprep.subr.bf16.mxu0 0
  %2110 = vmatpush1.bf16.xpose.msra.mxu0 0
  %2111 = vmatprep.subr.bf16.mxu0 0
  %2112 = vmatpush1.bf16.xpose.msra.mxu0 0
  %2113 = vmatprep.subr.bf16.mxu0 0
  %2114 = vmatpush1.bf16.xpose.msra.mxu0 0
  %2115 = vmatprep.subr.bf16.mxu0 0
  %2116 = vmatpush1.bf16.xpose.msra.mxu0 0
  %2117 = vmatprep.subr.bf16.mxu0 0
  %2118 = vmatpush1.bf16.xpose.msra.mxu0 0
  %2119 = vmatprep.subr.bf16.mxu0 0
  %2120 = vmatpush1.bf16.xpose.msra.mxu0 %v2103
  %2121 = vmatprep.subr.bf16.mxu0 0
  %2122 = vmatpush2.bf16.xpose.msra.mxu0 0
  %2123 = vmatprep.subr.bf16.mxu0 0
  %2124 = vmatpush2.bf16.xpose.msra.mxu0 0
  %2125 = vmatprep.subr.bf16.mxu0 0
  %2126 = vmatpush2.bf16.xpose.msra.mxu0 0
  %2127 = vmatprep.subr.bf16.mxu0 0
  %2128 = vmatpush2.bf16.xpose.msra.mxu0 0
  %2129 = vmatprep.subr.bf16.mxu0 0
  %2130 = vmatpush2.bf16.xpose.msra.mxu0 0
  %2131 = vmatprep.subr.bf16.mxu0 0
  %2132 = vmatpush2.bf16.xpose.msra.mxu0 0
  %2133 = vmatprep.subr.bf16.mxu0 0
  %2134 = vmatpush2.bf16.xpose.msra.mxu0 0
  %2135 = vmatprep.subr.bf16.mxu0 0
  %2136 = vmatpush2.bf16.xpose.msra.mxu0 0
  %2137 = vmatprep.mubr.bf16.mxu0 0
  %2138 = vmatmul.mubr.bf16.gmra.mxu0 %v2100
  %v2139 = vpop.f32.mrf.mxu0
  %v2140 = vadd.f32 0.0, %v2139
  %v2141 = vpop.f32.mrf.mxu0
  %v2142 = vpop.f32.mrf.mxu0
  %v2143 = vadd.f32 0.0, %v2142
  %v2144 = vpop.f32.mrf.mxu0
  %2145 = vdwg.mxu0
  %v2146 = vmul.f32 %v1790, 0.17677669
  %v2147 = vmul.f32 %v1793, 0.17677669
  %v2148 = vmul.f32 %v1840, 0.17677669
  %v2149 = vmul.f32 %v1843, 0.17677669
  %v2150 = vmul.f32 %v1890, 0.17677669
  %v2151 = vmul.f32 %v1893, 0.17677669
  %v2152 = vmul.f32 %v1940, 0.17677669
  %v2153 = vmul.f32 %v1943, 0.17677669
  %v2154 = vmul.f32 %v1990, 0.17677669
  %v2155 = vmul.f32 %v1993, 0.17677669
  %v2156 = vmul.f32 %v2040, 0.17677669
  %v2157 = vmul.f32 %v2043, 0.17677669
  %v2158 = vmul.f32 %v2090, 0.17677669
  %v2159 = vmul.f32 %v2093, 0.17677669
  %v2160 = vmul.f32 %v2140, 0.17677669
  %v2161 = vmul.f32 %v2143, 0.17677669
  %vm2162 = vcmask 130048
  %v2163 = vsel %vm2162, %v2146, -inf
  %2164 = vmax.xlane.f32.xlu0 %v2163
  %v2165 = vpop.xlane.xlu0 %2164
  %v2166 = vsel %vm2162, %v2147, -inf
  %2167 = vmax.xlane.f32.xlu0 %v2166
  %v2168 = vpop.xlane.xlu0 %2167
  %v2169 = vsel %vm2162, %v2148, -inf
  %2170 = vmax.xlane.f32.xlu0 %v2169
  %v2171 = vpop.xlane.xlu0 %2170
  %v2172 = vsel %vm2162, %v2149, -inf
  %2173 = vmax.xlane.f32.xlu0 %v2172
  %v2174 = vpop.xlane.xlu0 %2173
  %v2175 = vsel %vm2162, %v2150, -inf
  %2176 = vmax.xlane.f32.xlu0 %v2175
  %v2177 = vpop.xlane.xlu0 %2176
  %v2178 = vsel %vm2162, %v2151, -inf
  %2179 = vmax.xlane.f32.xlu0 %v2178
  %v2180 = vpop.xlane.xlu0 %2179
  %v2181 = vsel %vm2162, %v2152, -inf
  %2182 = vmax.xlane.f32.xlu0 %v2181
  %v2183 = vpop.xlane.xlu0 %2182
  %v2184 = vsel %vm2162, %v2153, -inf
  %2185 = vmax.xlane.f32.xlu0 %v2184
  %v2186 = vpop.xlane.xlu0 %2185
  %v2187 = vsel %vm2162, %v2154, -inf
  %2188 = vmax.xlane.f32.xlu0 %v2187
  %v2189 = vpop.xlane.xlu0 %2188
  %v2190 = vsel %vm2162, %v2155, -inf
  %2191 = vmax.xlane.f32.xlu0 %v2190
  %v2192 = vpop.xlane.xlu0 %2191
  %v2193 = vsel %vm2162, %v2156, -inf
  %2194 = vmax.xlane.f32.xlu0 %v2193
  %v2195 = vpop.xlane.xlu0 %2194
  %v2196 = vsel %vm2162, %v2157, -inf
  %2197 = vmax.xlane.f32.xlu0 %v2196
  %v2198 = vpop.xlane.xlu0 %2197
  %v2199 = vsel %vm2162, %v2158, -inf
  %2200 = vmax.xlane.f32.xlu0 %v2199
  %v2201 = vpop.xlane.xlu0 %2200
  %v2202 = vsel %vm2162, %v2159, -inf
  %2203 = vmax.xlane.f32.xlu0 %v2202
  %v2204 = vpop.xlane.xlu0 %2203
  %v2205 = vsel %vm2162, %v2160, -inf
  %2206 = vmax.xlane.f32.xlu0 %v2205
  %v2207 = vpop.xlane.xlu0 %2206
  %v2208 = vsel %vm2162, %v2161, -inf
  %2209 = vmax.xlane.f32.xlu0 %v2208
  %v2210 = vpop.xlane.xlu0 %2209
  %v2211 = vsub.f32 %v2146, %v2165
  %v2212 = vsub.f32 %v2147, %v2168
  %v2213 = vsub.f32 %v2148, %v2171
  %v2214 = vsub.f32 %v2149, %v2174
  %v2215 = vsub.f32 %v2150, %v2177
  %v2216 = vsub.f32 %v2151, %v2180
  %v2217 = vsub.f32 %v2152, %v2183
  %v2218 = vsub.f32 %v2153, %v2186
  %v2219 = vsub.f32 %v2154, %v2189
  %v2220 = vsub.f32 %v2155, %v2192
  %v2221 = vsub.f32 %v2156, %v2195
  %v2222 = vsub.f32 %v2157, %v2198
  %v2223 = vsub.f32 %v2158, %v2201
  %v2224 = vsub.f32 %v2159, %v2204
  %v2225 = vsub.f32 %v2160, %v2207
  %v2226 = vsub.f32 %v2161, %v2210
  %v2227 = vmul.f32 %v2211, 1.442695
  %v2228 = vpow.pop %v2227
  %v2229 = vmul.f32 %v2212, 1.442695
  %v2230 = vpow.pop %v2229
  %v2231 = vmul.f32 %v2213, 1.442695
  %v2232 = vpow.pop %v2231
  %v2233 = vmul.f32 %v2214, 1.442695
  %v2234 = vpow.pop %v2233
  %v2235 = vmul.f32 %v2215, 1.442695
  %v2236 = vpow.pop %v2235
  %v2237 = vmul.f32 %v2216, 1.442695
  %v2238 = vpow.pop %v2237
  %v2239 = vmul.f32 %v2217, 1.442695
  %v2240 = vpow.pop %v2239
  %v2241 = vmul.f32 %v2218, 1.442695
  %v2242 = vpow.pop %v2241
  %v2243 = vmul.f32 %v2219, 1.442695
  %v2244 = vpow.pop %v2243
  %v2245 = vmul.f32 %v2220, 1.442695
  %v2246 = vpow.pop %v2245
  %v2247 = vmul.f32 %v2221, 1.442695
  %v2248 = vpow.pop %v2247
  %v2249 = vmul.f32 %v2222, 1.442695
  %v2250 = vpow.pop %v2249
  %v2251 = vmul.f32 %v2223, 1.442695
  %v2252 = vpow.pop %v2251
  %v2253 = vmul.f32 %v2224, 1.442695
  %v2254 = vpow.pop %v2253
  %v2255 = vmul.f32 %v2225, 1.442695
  %v2256 = vpow.pop %v2255
  %v2257 = vmul.f32 %v2226, 1.442695
  %v2258 = vpow.pop %v2257
  %v2259 = vsel %vm2162, %v2228, 0.0
  %2260 = vadd.xlane.f32.xlu0 %v2259
  %v2261 = vpop.xlane.xlu0 %2260
  %v2262 = vsel %vm2162, %v2230, 0.0
  %2263 = vadd.xlane.f32.xlu0 %v2262
  %v2264 = vpop.xlane.xlu0 %2263
  %v2265 = vsel %vm2162, %v2232, 0.0
  %2266 = vadd.xlane.f32.xlu0 %v2265
  %v2267 = vpop.xlane.xlu0 %2266
  %v2268 = vsel %vm2162, %v2234, 0.0
  %2269 = vadd.xlane.f32.xlu0 %v2268
  %v2270 = vpop.xlane.xlu0 %2269
  %v2271 = vsel %vm2162, %v2236, 0.0
  %2272 = vadd.xlane.f32.xlu0 %v2271
  %v2273 = vpop.xlane.xlu0 %2272
  %v2274 = vsel %vm2162, %v2238, 0.0
  %2275 = vadd.xlane.f32.xlu0 %v2274
  %v2276 = vpop.xlane.xlu0 %2275
  %v2277 = vsel %vm2162, %v2240, 0.0
  %2278 = vadd.xlane.f32.xlu0 %v2277
  %v2279 = vpop.xlane.xlu0 %2278
  %v2280 = vsel %vm2162, %v2242, 0.0
  %2281 = vadd.xlane.f32.xlu0 %v2280
  %v2282 = vpop.xlane.xlu0 %2281
  %v2283 = vsel %vm2162, %v2244, 0.0
  %2284 = vadd.xlane.f32.xlu0 %v2283
  %v2285 = vpop.xlane.xlu0 %2284
  %v2286 = vsel %vm2162, %v2246, 0.0
  %2287 = vadd.xlane.f32.xlu0 %v2286
  %v2288 = vpop.xlane.xlu0 %2287
  %v2289 = vsel %vm2162, %v2248, 0.0
  %2290 = vadd.xlane.f32.xlu0 %v2289
  %v2291 = vpop.xlane.xlu0 %2290
  %v2292 = vsel %vm2162, %v2250, 0.0
  %2293 = vadd.xlane.f32.xlu0 %v2292
  %v2294 = vpop.xlane.xlu0 %2293
  %v2295 = vsel %vm2162, %v2252, 0.0
  %2296 = vadd.xlane.f32.xlu0 %v2295
  %v2297 = vpop.xlane.xlu0 %2296
  %v2298 = vsel %vm2162, %v2254, 0.0
  %2299 = vadd.xlane.f32.xlu0 %v2298
  %v2300 = vpop.xlane.xlu0 %2299
  %v2301 = vsel %vm2162, %v2256, 0.0
  %2302 = vadd.xlane.f32.xlu0 %v2301
  %v2303 = vpop.xlane.xlu0 %2302
  %v2304 = vsel %vm2162, %v2258, 0.0
  %2305 = vadd.xlane.f32.xlu0 %v2304
  %v2306 = vpop.xlane.xlu0 %2305
  %v2307 = vrcp.pop %v2261
  %v2308 = vrcp.pop %v2264
  %v2309 = vrcp.pop %v2267
  %v2310 = vrcp.pop %v2270
  %v2311 = vrcp.pop %v2273
  %v2312 = vrcp.pop %v2276
  %v2313 = vrcp.pop %v2279
  %v2314 = vrcp.pop %v2282
  %v2315 = vrcp.pop %v2285
  %v2316 = vrcp.pop %v2288
  %v2317 = vrcp.pop %v2291
  %v2318 = vrcp.pop %v2294
  %v2319 = vrcp.pop %v2297
  %v2320 = vrcp.pop %v2300
  %v2321 = vrcp.pop %v2303
  %v2322 = vrcp.pop %v2306
  %v2323 = vmul.f32 %v2228, %v2307
  %v2324 = vmul.f32 %v2230, %v2308
  %v2325 = vmul.f32 %v2232, %v2309
  %v2326 = vmul.f32 %v2234, %v2310
  %v2327 = vmul.f32 %v2236, %v2311
  %v2328 = vmul.f32 %v2238, %v2312
  %v2329 = vmul.f32 %v2240, %v2313
  %v2330 = vmul.f32 %v2242, %v2314
  %v2331 = vmul.f32 %v2244, %v2315
  %v2332 = vmul.f32 %v2246, %v2316
  %v2333 = vmul.f32 %v2248, %v2317
  %v2334 = vmul.f32 %v2250, %v2318
  %v2335 = vmul.f32 %v2252, %v2319
  %v2336 = vmul.f32 %v2254, %v2320
  %v2337 = vmul.f32 %v2256, %v2321
  %v2338 = vmul.f32 %v2258, %v2322
  %v2339 = vpack.c.bf16 %v2324, %v2323
  %v2340 = vpack.c.bf16 %v2326, %v2325
  %v2341 = vpack.c.bf16 %v2328, %v2327
  %v2342 = vpack.c.bf16 %v2330, %v2329
  %v2343 = vpack.c.bf16 %v2332, %v2331
  %v2344 = vpack.c.bf16 %v2334, %v2333
  %v2345 = vpack.c.bf16 %v2336, %v2335
  %v2346 = vpack.c.bf16 %v2338, %v2337
  %2347 = vrot.lane.b32.xlu0 %v1737, 64
  %v2348 = vpop.permute.xlu0 %2347
  %v2351 = vsel %vm2162, %v2339, 0
  %2353 = vmatprep.subr.bf16.mxu0 0
  %2354 = vmatpush1.bf16.msra.mxu0 0
  %2355 = vmatprep.subr.bf16.mxu0 0
  %2356 = vmatpush1.bf16.msra.mxu0 0
  %2357 = vmatprep.subr.bf16.mxu0 0
  %2358 = vmatpush1.bf16.msra.mxu0 0
  %2359 = vmatprep.subr.bf16.mxu0 0
  %2360 = vmatpush1.bf16.msra.mxu0 0
  %2361 = vmatprep.subr.bf16.mxu0 0
  %2362 = vmatpush1.bf16.msra.mxu0 0
  %2363 = vmatprep.subr.bf16.mxu0 0
  %2364 = vmatpush1.bf16.msra.mxu0 0
  %2365 = vmatprep.subr.bf16.mxu0 0
  %2366 = vmatpush1.bf16.msra.mxu0 0
  %2367 = vmatprep.subr.bf16.mxu0 0
  %2368 = vmatpush1.bf16.msra.mxu0 %v2348
  %2369 = vmatprep.subr.bf16.mxu0 0
  %2370 = vmatpush2.bf16.msra.mxu0 0
  %2371 = vmatprep.subr.bf16.mxu0 0
  %2372 = vmatpush2.bf16.msra.mxu0 0
  %2373 = vmatprep.subr.bf16.mxu0 0
  %2374 = vmatpush2.bf16.msra.mxu0 0
  %2375 = vmatprep.subr.bf16.mxu0 0
  %2376 = vmatpush2.bf16.msra.mxu0 0
  %2377 = vmatprep.subr.bf16.mxu0 0
  %2378 = vmatpush2.bf16.msra.mxu0 0
  %2379 = vmatprep.subr.bf16.mxu0 0
  %2380 = vmatpush2.bf16.msra.mxu0 0
  %2381 = vmatprep.subr.bf16.mxu0 0
  %2382 = vmatpush2.bf16.msra.mxu0 0
  %2383 = vmatprep.subr.bf16.mxu0 0
  %2384 = vmatpush2.bf16.msra.mxu0 0
  %2385 = vmatprep.mubr.bf16.mxu0 0
  %2386 = vmatmul.mubr.bf16.gmra.mxu0 %v2351
  %v2387 = vpop.f32.mrf.mxu0
  %v2388 = vadd.f32 0.0, %v2387
  %v2389 = vpop.f32.mrf.mxu0
  %v2390 = vpop.f32.mrf.mxu0
  %v2391 = vadd.f32 0.0, %v2390
  %v2392 = vpop.f32.mrf.mxu0
  %2393 = vdwg.mxu0
  %2394 = vrot.lane.b32.xlu0 %v1738, 64
  %v2395 = vpop.permute.xlu0 %2394
  %v2398 = vsel %vm2162, %v2340, 0
  %2400 = vmatprep.subr.bf16.mxu0 0
  %2401 = vmatpush1.bf16.msra.mxu0 0
  %2402 = vmatprep.subr.bf16.mxu0 0
  %2403 = vmatpush1.bf16.msra.mxu0 0
  %2404 = vmatprep.subr.bf16.mxu0 0
  %2405 = vmatpush1.bf16.msra.mxu0 0
  %2406 = vmatprep.subr.bf16.mxu0 0
  %2407 = vmatpush1.bf16.msra.mxu0 0
  %2408 = vmatprep.subr.bf16.mxu0 0
  %2409 = vmatpush1.bf16.msra.mxu0 0
  %2410 = vmatprep.subr.bf16.mxu0 0
  %2411 = vmatpush1.bf16.msra.mxu0 0
  %2412 = vmatprep.subr.bf16.mxu0 0
  %2413 = vmatpush1.bf16.msra.mxu0 0
  %2414 = vmatprep.subr.bf16.mxu0 0
  %2415 = vmatpush1.bf16.msra.mxu0 %v2395
  %2416 = vmatprep.subr.bf16.mxu0 0
  %2417 = vmatpush2.bf16.msra.mxu0 0
  %2418 = vmatprep.subr.bf16.mxu0 0
  %2419 = vmatpush2.bf16.msra.mxu0 0
  %2420 = vmatprep.subr.bf16.mxu0 0
  %2421 = vmatpush2.bf16.msra.mxu0 0
  %2422 = vmatprep.subr.bf16.mxu0 0
  %2423 = vmatpush2.bf16.msra.mxu0 0
  %2424 = vmatprep.subr.bf16.mxu0 0
  %2425 = vmatpush2.bf16.msra.mxu0 0
  %2426 = vmatprep.subr.bf16.mxu0 0
  %2427 = vmatpush2.bf16.msra.mxu0 0
  %2428 = vmatprep.subr.bf16.mxu0 0
  %2429 = vmatpush2.bf16.msra.mxu0 0
  %2430 = vmatprep.subr.bf16.mxu0 0
  %2431 = vmatpush2.bf16.msra.mxu0 0
  %2432 = vmatprep.mubr.bf16.mxu0 0
  %2433 = vmatmul.mubr.bf16.gmra.mxu0 %v2398
  %v2434 = vpop.f32.mrf.mxu0
  %v2435 = vadd.f32 0.0, %v2434
  %v2436 = vpop.f32.mrf.mxu0
  %v2437 = vpop.f32.mrf.mxu0
  %v2438 = vadd.f32 0.0, %v2437
  %v2439 = vpop.f32.mrf.mxu0
  %2440 = vdwg.mxu0
  %2441 = vrot.lane.b32.xlu0 %v1739, 64
  %v2442 = vpop.permute.xlu0 %2441
  %v2445 = vsel %vm2162, %v2341, 0
  %2447 = vmatprep.subr.bf16.mxu0 0
  %2448 = vmatpush1.bf16.msra.mxu0 0
  %2449 = vmatprep.subr.bf16.mxu0 0
  %2450 = vmatpush1.bf16.msra.mxu0 0
  %2451 = vmatprep.subr.bf16.mxu0 0
  %2452 = vmatpush1.bf16.msra.mxu0 0
  %2453 = vmatprep.subr.bf16.mxu0 0
  %2454 = vmatpush1.bf16.msra.mxu0 0
  %2455 = vmatprep.subr.bf16.mxu0 0
  %2456 = vmatpush1.bf16.msra.mxu0 0
  %2457 = vmatprep.subr.bf16.mxu0 0
  %2458 = vmatpush1.bf16.msra.mxu0 0
  %2459 = vmatprep.subr.bf16.mxu0 0
  %2460 = vmatpush1.bf16.msra.mxu0 0
  %2461 = vmatprep.subr.bf16.mxu0 0
  %2462 = vmatpush1.bf16.msra.mxu0 %v2442
  %2463 = vmatprep.subr.bf16.mxu0 0
  %2464 = vmatpush2.bf16.msra.mxu0 0
  %2465 = vmatprep.subr.bf16.mxu0 0
  %2466 = vmatpush2.bf16.msra.mxu0 0
  %2467 = vmatprep.subr.bf16.mxu0 0
  %2468 = vmatpush2.bf16.msra.mxu0 0
  %2469 = vmatprep.subr.bf16.mxu0 0
  %2470 = vmatpush2.bf16.msra.mxu0 0
  %2471 = vmatprep.subr.bf16.mxu0 0
  %2472 = vmatpush2.bf16.msra.mxu0 0
  %2473 = vmatprep.subr.bf16.mxu0 0
  %2474 = vmatpush2.bf16.msra.mxu0 0
  %2475 = vmatprep.subr.bf16.mxu0 0
  %2476 = vmatpush2.bf16.msra.mxu0 0
  %2477 = vmatprep.subr.bf16.mxu0 0
  %2478 = vmatpush2.bf16.msra.mxu0 0
  %2479 = vmatprep.mubr.bf16.mxu0 0
  %2480 = vmatmul.mubr.bf16.gmra.mxu0 %v2445
  %v2481 = vpop.f32.mrf.mxu0
  %v2482 = vadd.f32 0.0, %v2481
  %v2483 = vpop.f32.mrf.mxu0
  %v2484 = vpop.f32.mrf.mxu0
  %v2485 = vadd.f32 0.0, %v2484
  %v2486 = vpop.f32.mrf.mxu0
  %2487 = vdwg.mxu0
  %2488 = vrot.lane.b32.xlu0 %v1740, 64
  %v2489 = vpop.permute.xlu0 %2488
  %v2492 = vsel %vm2162, %v2342, 0
  %2494 = vmatprep.subr.bf16.mxu0 0
  %2495 = vmatpush1.bf16.msra.mxu0 0
  %2496 = vmatprep.subr.bf16.mxu0 0
  %2497 = vmatpush1.bf16.msra.mxu0 0
  %2498 = vmatprep.subr.bf16.mxu0 0
  %2499 = vmatpush1.bf16.msra.mxu0 0
  %2500 = vmatprep.subr.bf16.mxu0 0
  %2501 = vmatpush1.bf16.msra.mxu0 0
  %2502 = vmatprep.subr.bf16.mxu0 0
  %2503 = vmatpush1.bf16.msra.mxu0 0
  %2504 = vmatprep.subr.bf16.mxu0 0
  %2505 = vmatpush1.bf16.msra.mxu0 0
  %2506 = vmatprep.subr.bf16.mxu0 0
  %2507 = vmatpush1.bf16.msra.mxu0 0
  %2508 = vmatprep.subr.bf16.mxu0 0
  %2509 = vmatpush1.bf16.msra.mxu0 %v2489
  %2510 = vmatprep.subr.bf16.mxu0 0
  %2511 = vmatpush2.bf16.msra.mxu0 0
  %2512 = vmatprep.subr.bf16.mxu0 0
  %2513 = vmatpush2.bf16.msra.mxu0 0
  %2514 = vmatprep.subr.bf16.mxu0 0
  %2515 = vmatpush2.bf16.msra.mxu0 0
  %2516 = vmatprep.subr.bf16.mxu0 0
  %2517 = vmatpush2.bf16.msra.mxu0 0
  %2518 = vmatprep.subr.bf16.mxu0 0
  %2519 = vmatpush2.bf16.msra.mxu0 0
  %2520 = vmatprep.subr.bf16.mxu0 0
  %2521 = vmatpush2.bf16.msra.mxu0 0
  %2522 = vmatprep.subr.bf16.mxu0 0
  %2523 = vmatpush2.bf16.msra.mxu0 0
  %2524 = vmatprep.subr.bf16.mxu0 0
  %2525 = vmatpush2.bf16.msra.mxu0 0
  %2526 = vmatprep.mubr.bf16.mxu0 0
  %2527 = vmatmul.mubr.bf16.gmra.mxu0 %v2492
  %v2528 = vpop.f32.mrf.mxu0
  %v2529 = vadd.f32 0.0, %v2528
  %v2530 = vpop.f32.mrf.mxu0
  %v2531 = vpop.f32.mrf.mxu0
  %v2532 = vadd.f32 0.0, %v2531
  %v2533 = vpop.f32.mrf.mxu0
  %2534 = vdwg.mxu0
  %2535 = vrot.lane.b32.xlu0 %v1741, 64
  %v2536 = vpop.permute.xlu0 %2535
  %v2539 = vsel %vm2162, %v2343, 0
  %2541 = vmatprep.subr.bf16.mxu0 0
  %2542 = vmatpush1.bf16.msra.mxu0 0
  %2543 = vmatprep.subr.bf16.mxu0 0
  %2544 = vmatpush1.bf16.msra.mxu0 0
  %2545 = vmatprep.subr.bf16.mxu0 0
  %2546 = vmatpush1.bf16.msra.mxu0 0
  %2547 = vmatprep.subr.bf16.mxu0 0
  %2548 = vmatpush1.bf16.msra.mxu0 0
  %2549 = vmatprep.subr.bf16.mxu0 0
  %2550 = vmatpush1.bf16.msra.mxu0 0
  %2551 = vmatprep.subr.bf16.mxu0 0
  %2552 = vmatpush1.bf16.msra.mxu0 0
  %2553 = vmatprep.subr.bf16.mxu0 0
  %2554 = vmatpush1.bf16.msra.mxu0 0
  %2555 = vmatprep.subr.bf16.mxu0 0
  %2556 = vmatpush1.bf16.msra.mxu0 %v2536
  %2557 = vmatprep.subr.bf16.mxu0 0
  %2558 = vmatpush2.bf16.msra.mxu0 0
  %2559 = vmatprep.subr.bf16.mxu0 0
  %2560 = vmatpush2.bf16.msra.mxu0 0
  %2561 = vmatprep.subr.bf16.mxu0 0
  %2562 = vmatpush2.bf16.msra.mxu0 0
  %2563 = vmatprep.subr.bf16.mxu0 0
  %2564 = vmatpush2.bf16.msra.mxu0 0
  %2565 = vmatprep.subr.bf16.mxu0 0
  %2566 = vmatpush2.bf16.msra.mxu0 0
  %2567 = vmatprep.subr.bf16.mxu0 0
  %2568 = vmatpush2.bf16.msra.mxu0 0
  %2569 = vmatprep.subr.bf16.mxu0 0
  %2570 = vmatpush2.bf16.msra.mxu0 0
  %2571 = vmatprep.subr.bf16.mxu0 0
  %2572 = vmatpush2.bf16.msra.mxu0 0
  %2573 = vmatprep.mubr.bf16.mxu0 0
  %2574 = vmatmul.mubr.bf16.gmra.mxu0 %v2539
  %v2575 = vpop.f32.mrf.mxu0
  %v2576 = vadd.f32 0.0, %v2575
  %v2577 = vpop.f32.mrf.mxu0
  %v2578 = vpop.f32.mrf.mxu0
  %v2579 = vadd.f32 0.0, %v2578
  %v2580 = vpop.f32.mrf.mxu0
  %2581 = vdwg.mxu0
  %2582 = vrot.lane.b32.xlu0 %v1742, 64
  %v2583 = vpop.permute.xlu0 %2582
  %v2586 = vsel %vm2162, %v2344, 0
  %2588 = vmatprep.subr.bf16.mxu0 0
  %2589 = vmatpush1.bf16.msra.mxu0 0
  %2590 = vmatprep.subr.bf16.mxu0 0
  %2591 = vmatpush1.bf16.msra.mxu0 0
  %2592 = vmatprep.subr.bf16.mxu0 0
  %2593 = vmatpush1.bf16.msra.mxu0 0
  %2594 = vmatprep.subr.bf16.mxu0 0
  %2595 = vmatpush1.bf16.msra.mxu0 0
  %2596 = vmatprep.subr.bf16.mxu0 0
  %2597 = vmatpush1.bf16.msra.mxu0 0
  %2598 = vmatprep.subr.bf16.mxu0 0
  %2599 = vmatpush1.bf16.msra.mxu0 0
  %2600 = vmatprep.subr.bf16.mxu0 0
  %2601 = vmatpush1.bf16.msra.mxu0 0
  %2602 = vmatprep.subr.bf16.mxu0 0
  %2603 = vmatpush1.bf16.msra.mxu0 %v2583
  %2604 = vmatprep.subr.bf16.mxu0 0
  %2605 = vmatpush2.bf16.msra.mxu0 0
  %2606 = vmatprep.subr.bf16.mxu0 0
  %2607 = vmatpush2.bf16.msra.mxu0 0
  %2608 = vmatprep.subr.bf16.mxu0 0
  %2609 = vmatpush2.bf16.msra.mxu0 0
  %2610 = vmatprep.subr.bf16.mxu0 0
  %2611 = vmatpush2.bf16.msra.mxu0 0
  %2612 = vmatprep.subr.bf16.mxu0 0
  %2613 = vmatpush2.bf16.msra.mxu0 0
  %2614 = vmatprep.subr.bf16.mxu0 0
  %2615 = vmatpush2.bf16.msra.mxu0 0
  %2616 = vmatprep.subr.bf16.mxu0 0
  %2617 = vmatpush2.bf16.msra.mxu0 0
  %2618 = vmatprep.subr.bf16.mxu0 0
  %2619 = vmatpush2.bf16.msra.mxu0 0
  %2620 = vmatprep.mubr.bf16.mxu0 0
  %2621 = vmatmul.mubr.bf16.gmra.mxu0 %v2586
  %v2622 = vpop.f32.mrf.mxu0
  %v2623 = vadd.f32 0.0, %v2622
  %v2624 = vpop.f32.mrf.mxu0
  %v2625 = vpop.f32.mrf.mxu0
  %v2626 = vadd.f32 0.0, %v2625
  %v2627 = vpop.f32.mrf.mxu0
  %2628 = vdwg.mxu0
  %2629 = vrot.lane.b32.xlu0 %v1743, 64
  %v2630 = vpop.permute.xlu0 %2629
  %v2633 = vsel %vm2162, %v2345, 0
  %2635 = vmatprep.subr.bf16.mxu0 0
  %2636 = vmatpush1.bf16.msra.mxu0 0
  %2637 = vmatprep.subr.bf16.mxu0 0
  %2638 = vmatpush1.bf16.msra.mxu0 0
  %2639 = vmatprep.subr.bf16.mxu0 0
  %2640 = vmatpush1.bf16.msra.mxu0 0
  %2641 = vmatprep.subr.bf16.mxu0 0
  %2642 = vmatpush1.bf16.msra.mxu0 0
  %2643 = vmatprep.subr.bf16.mxu0 0
  %2644 = vmatpush1.bf16.msra.mxu0 0
  %2645 = vmatprep.subr.bf16.mxu0 0
  %2646 = vmatpush1.bf16.msra.mxu0 0
  %2647 = vmatprep.subr.bf16.mxu0 0
  %2648 = vmatpush1.bf16.msra.mxu0 0
  %2649 = vmatprep.subr.bf16.mxu0 0
  %2650 = vmatpush1.bf16.msra.mxu0 %v2630
  %2651 = vmatprep.subr.bf16.mxu0 0
  %2652 = vmatpush2.bf16.msra.mxu0 0
  %2653 = vmatprep.subr.bf16.mxu0 0
  %2654 = vmatpush2.bf16.msra.mxu0 0
  %2655 = vmatprep.subr.bf16.mxu0 0
  %2656 = vmatpush2.bf16.msra.mxu0 0
  %2657 = vmatprep.subr.bf16.mxu0 0
  %2658 = vmatpush2.bf16.msra.mxu0 0
  %2659 = vmatprep.subr.bf16.mxu0 0
  %2660 = vmatpush2.bf16.msra.mxu0 0
  %2661 = vmatprep.subr.bf16.mxu0 0
  %2662 = vmatpush2.bf16.msra.mxu0 0
  %2663 = vmatprep.subr.bf16.mxu0 0
  %2664 = vmatpush2.bf16.msra.mxu0 0
  %2665 = vmatprep.subr.bf16.mxu0 0
  %2666 = vmatpush2.bf16.msra.mxu0 0
  %2667 = vmatprep.mubr.bf16.mxu0 0
  %2668 = vmatmul.mubr.bf16.gmra.mxu0 %v2633
  %v2669 = vpop.f32.mrf.mxu0
  %v2670 = vadd.f32 0.0, %v2669
  %v2671 = vpop.f32.mrf.mxu0
  %v2672 = vpop.f32.mrf.mxu0
  %v2673 = vadd.f32 0.0, %v2672
  %v2674 = vpop.f32.mrf.mxu0
  %2675 = vdwg.mxu0
  %2676 = vrot.lane.b32.xlu0 %v1744, 64
  %v2677 = vpop.permute.xlu0 %2676
  %v2680 = vsel %vm2162, %v2346, 0
  %2682 = vmatprep.subr.bf16.mxu0 0
  %2683 = vmatpush1.bf16.msra.mxu0 0
  %2684 = vmatprep.subr.bf16.mxu0 0
  %2685 = vmatpush1.bf16.msra.mxu0 0
  %2686 = vmatprep.subr.bf16.mxu0 0
  %2687 = vmatpush1.bf16.msra.mxu0 0
  %2688 = vmatprep.subr.bf16.mxu0 0
  %2689 = vmatpush1.bf16.msra.mxu0 0
  %2690 = vmatprep.subr.bf16.mxu0 0
  %2691 = vmatpush1.bf16.msra.mxu0 0
  %2692 = vmatprep.subr.bf16.mxu0 0
  %2693 = vmatpush1.bf16.msra.mxu0 0
  %2694 = vmatprep.subr.bf16.mxu0 0
  %2695 = vmatpush1.bf16.msra.mxu0 0
  %2696 = vmatprep.subr.bf16.mxu0 0
  %2697 = vmatpush1.bf16.msra.mxu0 %v2677
  %2698 = vmatprep.subr.bf16.mxu0 0
  %2699 = vmatpush2.bf16.msra.mxu0 0
  %2700 = vmatprep.subr.bf16.mxu0 0
  %2701 = vmatpush2.bf16.msra.mxu0 0
  %2702 = vmatprep.subr.bf16.mxu0 0
  %2703 = vmatpush2.bf16.msra.mxu0 0
  %2704 = vmatprep.subr.bf16.mxu0 0
  %2705 = vmatpush2.bf16.msra.mxu0 0
  %2706 = vmatprep.subr.bf16.mxu0 0
  %2707 = vmatpush2.bf16.msra.mxu0 0
  %2708 = vmatprep.subr.bf16.mxu0 0
  %2709 = vmatpush2.bf16.msra.mxu0 0
  %2710 = vmatprep.subr.bf16.mxu0 0
  %2711 = vmatpush2.bf16.msra.mxu0 0
  %2712 = vmatprep.subr.bf16.mxu0 0
  %2713 = vmatpush2.bf16.msra.mxu0 0
  %2714 = vmatprep.mubr.bf16.mxu0 0
  %2715 = vmatmul.mubr.bf16.gmra.mxu0 %v2680
  %v2716 = vpop.f32.mrf.mxu0
  %v2717 = vadd.f32 0.0, %v2716
  %v2718 = vpop.f32.mrf.mxu0
  %v2719 = vpop.f32.mrf.mxu0
  %v2720 = vadd.f32 0.0, %v2719
  %v2721 = vpop.f32.mrf.mxu0
  %2722 = vdwg.mxu0
  %v2723 = vpack.c.bf16 %v2391, %v2388
  %v2724 = vpack.c.bf16 %v2438, %v2435
  %v2725 = vpack.c.bf16 %v2485, %v2482
  %v2726 = vpack.c.bf16 %v2532, %v2529
  %v2727 = vpack.c.bf16 %v2579, %v2576
  %v2728 = vpack.c.bf16 %v2626, %v2623
  %v2729 = vpack.c.bf16 %v2673, %v2670
  %v2730 = vpack.c.bf16 %v2720, %v2717
  %v2731 = vld [vmem:[%s5] sm:$0xf]
  %v2732 = vld [vmem:[%s5 + $0x4] sm:$0xf]
  %v2733 = vld [vmem:[%s5 + $0x8] sm:$0xf]
  %v2734 = vld [vmem:[%s5 + $0xc] sm:$0xf]
  %v2735 = vld [vmem:[%s5 + $0x10] sm:$0xf]
  %v2736 = vld [vmem:[%s5 + $0x14] sm:$0xf]
  %v2737 = vld [vmem:[%s5 + $0x18] sm:$0xf]
  %v2738 = vld [vmem:[%s5 + $0x1c] sm:$0xf]
  %v2739 = vld [vmem:[%s5 + $0x20] sm:$0xf]
  %v2740 = vld [vmem:[%s5 + $0x24] sm:$0xf]
  %v2741 = vld [vmem:[%s5 + $0x28] sm:$0xf]
  %v2742 = vld [vmem:[%s5 + $0x2c] sm:$0xf]
  %v2743 = vld [vmem:[%s5 + $0x30] sm:$0xf]
  %v2744 = vld [vmem:[%s5 + $0x34] sm:$0xf]
  %v2745 = vld [vmem:[%s5 + $0x38] sm:$0xf]
  %v2746 = vld [vmem:[%s5 + $0x3c] sm:$0xf]
  %v2747 = vld [vmem:[%s5 + $0x40] sm:$0xf]
  %v2748 = vld [vmem:[%s5 + $0x44] sm:$0xf]
  %v2749 = vld [vmem:[%s5 + $0x48] sm:$0xf]
  %v2750 = vld [vmem:[%s5 + $0x4c] sm:$0xf]
  %v2751 = vld [vmem:[%s5 + $0x50] sm:$0xf]
  %v2752 = vld [vmem:[%s5 + $0x54] sm:$0xf]
  %v2753 = vld [vmem:[%s5 + $0x58] sm:$0xf]
  %v2754 = vld [vmem:[%s5 + $0x5c] sm:$0xf]
  %v2755 = vld [vmem:[%s5 + $0x60] sm:$0xf]
  %v2756 = vld [vmem:[%s5 + $0x64] sm:$0xf]
  %v2757 = vld [vmem:[%s5 + $0x68] sm:$0xf]
  %v2758 = vld [vmem:[%s5 + $0x6c] sm:$0xf]
  %v2759 = vld [vmem:[%s5 + $0x70] sm:$0xf]
  %v2760 = vld [vmem:[%s5 + $0x74] sm:$0xf]
  %v2761 = vld [vmem:[%s5 + $0x78] sm:$0xf]
  %v2762 = vld [vmem:[%s5 + $0x7c] sm:$0xf]
  %v2767 = vunpack.c.l.b16 %v2731
  %v2768 = vunpack.c.l.b16 %v2732
  %v2769 = vunpack.c.l.b16 %v2733
  %v2770 = vunpack.c.l.b16 %v2734
  %v2771 = vpack.c.b16 %v2768, %v2767
  %v2772 = vpack.c.b16 %v2770, %v2769
  %v2776 = vsel %vm1748, %v2723, 0
  %2778 = vmatprep.subr.bf16.mxu0 0
  %2779 = vmatpush1.bf16.msra.mxu0 0
  %2780 = vmatprep.subr.bf16.mxu0 0
  %2781 = vmatpush1.bf16.msra.mxu0 0
  %2782 = vmatprep.subr.bf16.mxu0 0
  %2783 = vmatpush1.bf16.msra.mxu0 0
  %2784 = vmatprep.subr.bf16.mxu0 0
  %2785 = vmatpush1.bf16.msra.mxu0 0
  %2786 = vmatprep.subr.bf16.mxu0 0
  %2787 = vmatpush1.bf16.msra.mxu0 0
  %2788 = vmatprep.subr.bf16.mxu0 0
  %2789 = vmatpush1.bf16.msra.mxu0 0
  %2790 = vmatprep.subr.bf16.mxu0 0
  %2791 = vmatpush1.bf16.msra.mxu0 %v2772
  %2792 = vmatprep.subr.bf16.mxu0 0
  %2793 = vmatpush1.bf16.msra.mxu0 %v2771
  %2794 = vmatprep.subr.bf16.mxu0 0
  %2795 = vmatpush2.bf16.msra.mxu0 0
  %2796 = vmatprep.subr.bf16.mxu0 0
  %2797 = vmatpush2.bf16.msra.mxu0 0
  %2798 = vmatprep.subr.bf16.mxu0 0
  %2799 = vmatpush2.bf16.msra.mxu0 0
  %2800 = vmatprep.subr.bf16.mxu0 0
  %2801 = vmatpush2.bf16.msra.mxu0 0
  %2802 = vmatprep.subr.bf16.mxu0 0
  %2803 = vmatpush2.bf16.msra.mxu0 0
  %2804 = vmatprep.subr.bf16.mxu0 0
  %2805 = vmatpush2.bf16.msra.mxu0 0
  %2806 = vmatprep.subr.bf16.mxu0 0
  %2807 = vmatpush2.bf16.msra.mxu0 0
  %2808 = vmatprep.subr.bf16.mxu0 0
  %2809 = vmatpush2.bf16.msra.mxu0 0
  %2810 = vmatprep.mubr.bf16.mxu0 0
  %2811 = vmatmul.mubr.bf16.gmra.mxu0 %v2776
  %v2812 = vpop.f32.mrf.mxu0
  %v2813 = vadd.f32 0.0, %v2812
  %v2814 = vpop.f32.mrf.mxu0
  %v2815 = vpop.f32.mrf.mxu0
  %v2816 = vadd.f32 0.0, %v2815
  %v2817 = vpop.f32.mrf.mxu0
  %2818 = vdwg.mxu0
  %v2823 = vunpack.c.l.b16 %v2735
  %v2824 = vunpack.c.l.b16 %v2736
  %v2825 = vunpack.c.l.b16 %v2737
  %v2826 = vunpack.c.l.b16 %v2738
  %v2827 = vpack.c.b16 %v2824, %v2823
  %v2828 = vpack.c.b16 %v2826, %v2825
  %v2832 = vsel %vm1748, %v2724, 0
  %2834 = vmatprep.subr.bf16.mxu0 0
  %2835 = vmatpush1.bf16.msra.mxu0 0
  %2836 = vmatprep.subr.bf16.mxu0 0
  %2837 = vmatpush1.bf16.msra.mxu0 0
  %2838 = vmatprep.subr.bf16.mxu0 0
  %2839 = vmatpush1.bf16.msra.mxu0 0
  %2840 = vmatprep.subr.bf16.mxu0 0
  %2841 = vmatpush1.bf16.msra.mxu0 0
  %2842 = vmatprep.subr.bf16.mxu0 0
  %2843 = vmatpush1.bf16.msra.mxu0 0
  %2844 = vmatprep.subr.bf16.mxu0 0
  %2845 = vmatpush1.bf16.msra.mxu0 0
  %2846 = vmatprep.subr.bf16.mxu0 0
  %2847 = vmatpush1.bf16.msra.mxu0 %v2828
  %2848 = vmatprep.subr.bf16.mxu0 0
  %2849 = vmatpush1.bf16.msra.mxu0 %v2827
  %2850 = vmatprep.subr.bf16.mxu0 0
  %2851 = vmatpush2.bf16.msra.mxu0 0
  %2852 = vmatprep.subr.bf16.mxu0 0
  %2853 = vmatpush2.bf16.msra.mxu0 0
  %2854 = vmatprep.subr.bf16.mxu0 0
  %2855 = vmatpush2.bf16.msra.mxu0 0
  %2856 = vmatprep.subr.bf16.mxu0 0
  %2857 = vmatpush2.bf16.msra.mxu0 0
  %2858 = vmatprep.subr.bf16.mxu0 0
  %2859 = vmatpush2.bf16.msra.mxu0 0
  %2860 = vmatprep.subr.bf16.mxu0 0
  %2861 = vmatpush2.bf16.msra.mxu0 0
  %2862 = vmatprep.subr.bf16.mxu0 0
  %2863 = vmatpush2.bf16.msra.mxu0 0
  %2864 = vmatprep.subr.bf16.mxu0 0
  %2865 = vmatpush2.bf16.msra.mxu0 0
  %2866 = vmatprep.mubr.bf16.mxu0 0
  %2867 = vmatmul.mubr.bf16.gmra.mxu0 %v2832
  %v2868 = vpop.f32.mrf.mxu0
  %v2869 = vadd.f32 0.0, %v2868
  %v2870 = vpop.f32.mrf.mxu0
  %v2871 = vpop.f32.mrf.mxu0
  %v2872 = vadd.f32 0.0, %v2871
  %v2873 = vpop.f32.mrf.mxu0
  %2874 = vdwg.mxu0
  %v2879 = vunpack.c.l.b16 %v2739
  %v2880 = vunpack.c.l.b16 %v2740
  %v2881 = vunpack.c.l.b16 %v2741
  %v2882 = vunpack.c.l.b16 %v2742
  %v2883 = vpack.c.b16 %v2880, %v2879
  %v2884 = vpack.c.b16 %v2882, %v2881
  %v2888 = vsel %vm1748, %v2725, 0
  %2890 = vmatprep.subr.bf16.mxu0 0
  %2891 = vmatpush1.bf16.msra.mxu0 0
  %2892 = vmatprep.subr.bf16.mxu0 0
  %2893 = vmatpush1.bf16.msra.mxu0 0
  %2894 = vmatprep.subr.bf16.mxu0 0
  %2895 = vmatpush1.bf16.msra.mxu0 0
  %2896 = vmatprep.subr.bf16.mxu0 0
  %2897 = vmatpush1.bf16.msra.mxu0 0
  %2898 = vmatprep.subr.bf16.mxu0 0
  %2899 = vmatpush1.bf16.msra.mxu0 0
  %2900 = vmatprep.subr.bf16.mxu0 0
  %2901 = vmatpush1.bf16.msra.mxu0 0
  %2902 = vmatprep.subr.bf16.mxu0 0
  %2903 = vmatpush1.bf16.msra.mxu0 %v2884
  %2904 = vmatprep.subr.bf16.mxu0 0
  %2905 = vmatpush1.bf16.msra.mxu0 %v2883
  %2906 = vmatprep.subr.bf16.mxu0 0
  %2907 = vmatpush2.bf16.msra.mxu0 0
  %2908 = vmatprep.subr.bf16.mxu0 0
  %2909 = vmatpush2.bf16.msra.mxu0 0
  %2910 = vmatprep.subr.bf16.mxu0 0
  %2911 = vmatpush2.bf16.msra.mxu0 0
  %2912 = vmatprep.subr.bf16.mxu0 0
  %2913 = vmatpush2.bf16.msra.mxu0 0
  %2914 = vmatprep.subr.bf16.mxu0 0
  %2915 = vmatpush2.bf16.msra.mxu0 0
  %2916 = vmatprep.subr.bf16.mxu0 0
  %2917 = vmatpush2.bf16.msra.mxu0 0
  %2918 = vmatprep.subr.bf16.mxu0 0
  %2919 = vmatpush2.bf16.msra.mxu0 0
  %2920 = vmatprep.subr.bf16.mxu0 0
  %2921 = vmatpush2.bf16.msra.mxu0 0
  %2922 = vmatprep.mubr.bf16.mxu0 0
  %2923 = vmatmul.mubr.bf16.gmra.mxu0 %v2888
  %v2924 = vpop.f32.mrf.mxu0
  %v2925 = vadd.f32 0.0, %v2924
  %v2926 = vpop.f32.mrf.mxu0
  %v2927 = vpop.f32.mrf.mxu0
  %v2928 = vadd.f32 0.0, %v2927
  %v2929 = vpop.f32.mrf.mxu0
  %2930 = vdwg.mxu0
  %v2935 = vunpack.c.l.b16 %v2743
  %v2936 = vunpack.c.l.b16 %v2744
  %v2937 = vunpack.c.l.b16 %v2745
  %v2938 = vunpack.c.l.b16 %v2746
  %v2939 = vpack.c.b16 %v2936, %v2935
  %v2940 = vpack.c.b16 %v2938, %v2937
  %v2944 = vsel %vm1748, %v2726, 0
  %2946 = vmatprep.subr.bf16.mxu0 0
  %2947 = vmatpush1.bf16.msra.mxu0 0
  %2948 = vmatprep.subr.bf16.mxu0 0
  %2949 = vmatpush1.bf16.msra.mxu0 0
  %2950 = vmatprep.subr.bf16.mxu0 0
  %2951 = vmatpush1.bf16.msra.mxu0 0
  %2952 = vmatprep.subr.bf16.mxu0 0
  %2953 = vmatpush1.bf16.msra.mxu0 0
  %2954 = vmatprep.subr.bf16.mxu0 0
  %2955 = vmatpush1.bf16.msra.mxu0 0
  %2956 = vmatprep.subr.bf16.mxu0 0
  %2957 = vmatpush1.bf16.msra.mxu0 0
  %2958 = vmatprep.subr.bf16.mxu0 0
  %2959 = vmatpush1.bf16.msra.mxu0 %v2940
  %2960 = vmatprep.subr.bf16.mxu0 0
  %2961 = vmatpush1.bf16.msra.mxu0 %v2939
  %2962 = vmatprep.subr.bf16.mxu0 0
  %2963 = vmatpush2.bf16.msra.mxu0 0
  %2964 = vmatprep.subr.bf16.mxu0 0
  %2965 = vmatpush2.bf16.msra.mxu0 0
  %2966 = vmatprep.subr.bf16.mxu0 0
  %2967 = vmatpush2.bf16.msra.mxu0 0
  %2968 = vmatprep.subr.bf16.mxu0 0
  %2969 = vmatpush2.bf16.msra.mxu0 0
  %2970 = vmatprep.subr.bf16.mxu0 0
  %2971 = vmatpush2.bf16.msra.mxu0 0
  %2972 = vmatprep.subr.bf16.mxu0 0
  %2973 = vmatpush2.bf16.msra.mxu0 0
  %2974 = vmatprep.subr.bf16.mxu0 0
  %2975 = vmatpush2.bf16.msra.mxu0 0
  %2976 = vmatprep.subr.bf16.mxu0 0
  %2977 = vmatpush2.bf16.msra.mxu0 0
  %2978 = vmatprep.mubr.bf16.mxu0 0
  %2979 = vmatmul.mubr.bf16.gmra.mxu0 %v2944
  %v2980 = vpop.f32.mrf.mxu0
  %v2981 = vadd.f32 0.0, %v2980
  %v2982 = vpop.f32.mrf.mxu0
  %v2983 = vpop.f32.mrf.mxu0
  %v2984 = vadd.f32 0.0, %v2983
  %v2985 = vpop.f32.mrf.mxu0
  %2986 = vdwg.mxu0
  %v2991 = vunpack.c.l.b16 %v2747
  %v2992 = vunpack.c.l.b16 %v2748
  %v2993 = vunpack.c.l.b16 %v2749
  %v2994 = vunpack.c.l.b16 %v2750
  %v2995 = vpack.c.b16 %v2992, %v2991
  %v2996 = vpack.c.b16 %v2994, %v2993
  %v3000 = vsel %vm1748, %v2727, 0
  %3002 = vmatprep.subr.bf16.mxu0 0
  %3003 = vmatpush1.bf16.msra.mxu0 0
  %3004 = vmatprep.subr.bf16.mxu0 0
  %3005 = vmatpush1.bf16.msra.mxu0 0
  %3006 = vmatprep.subr.bf16.mxu0 0
  %3007 = vmatpush1.bf16.msra.mxu0 0
  %3008 = vmatprep.subr.bf16.mxu0 0
  %3009 = vmatpush1.bf16.msra.mxu0 0
  %3010 = vmatprep.subr.bf16.mxu0 0
  %3011 = vmatpush1.bf16.msra.mxu0 0
  %3012 = vmatprep.subr.bf16.mxu0 0
  %3013 = vmatpush1.bf16.msra.mxu0 0
  %3014 = vmatprep.subr.bf16.mxu0 0
  %3015 = vmatpush1.bf16.msra.mxu0 %v2996
  %3016 = vmatprep.subr.bf16.mxu0 0
  %3017 = vmatpush1.bf16.msra.mxu0 %v2995
  %3018 = vmatprep.subr.bf16.mxu0 0
  %3019 = vmatpush2.bf16.msra.mxu0 0
  %3020 = vmatprep.subr.bf16.mxu0 0
  %3021 = vmatpush2.bf16.msra.mxu0 0
  %3022 = vmatprep.subr.bf16.mxu0 0
  %3023 = vmatpush2.bf16.msra.mxu0 0
  %3024 = vmatprep.subr.bf16.mxu0 0
  %3025 = vmatpush2.bf16.msra.mxu0 0
  %3026 = vmatprep.subr.bf16.mxu0 0
  %3027 = vmatpush2.bf16.msra.mxu0 0
  %3028 = vmatprep.subr.bf16.mxu0 0
  %3029 = vmatpush2.bf16.msra.mxu0 0
  %3030 = vmatprep.subr.bf16.mxu0 0
  %3031 = vmatpush2.bf16.msra.mxu0 0
  %3032 = vmatprep.subr.bf16.mxu0 0
  %3033 = vmatpush2.bf16.msra.mxu0 0
  %3034 = vmatprep.mubr.bf16.mxu0 0
  %3035 = vmatmul.mubr.bf16.gmra.mxu0 %v3000
  %v3036 = vpop.f32.mrf.mxu0
  %v3037 = vadd.f32 0.0, %v3036
  %v3038 = vpop.f32.mrf.mxu0
  %v3039 = vpop.f32.mrf.mxu0
  %v3040 = vadd.f32 0.0, %v3039
  %v3041 = vpop.f32.mrf.mxu0
  %3042 = vdwg.mxu0
  %v3047 = vunpack.c.l.b16 %v2751
  %v3048 = vunpack.c.l.b16 %v2752
  %v3049 = vunpack.c.l.b16 %v2753
  %v3050 = vunpack.c.l.b16 %v2754
  %v3051 = vpack.c.b16 %v3048, %v3047
  %v3052 = vpack.c.b16 %v3050, %v3049
  %v3056 = vsel %vm1748, %v2728, 0
  %3058 = vmatprep.subr.bf16.mxu0 0
  %3059 = vmatpush1.bf16.msra.mxu0 0
  %3060 = vmatprep.subr.bf16.mxu0 0
  %3061 = vmatpush1.bf16.msra.mxu0 0
  %3062 = vmatprep.subr.bf16.mxu0 0
  %3063 = vmatpush1.bf16.msra.mxu0 0
  %3064 = vmatprep.subr.bf16.mxu0 0
  %3065 = vmatpush1.bf16.msra.mxu0 0
  %3066 = vmatprep.subr.bf16.mxu0 0
  %3067 = vmatpush1.bf16.msra.mxu0 0
  %3068 = vmatprep.subr.bf16.mxu0 0
  %3069 = vmatpush1.bf16.msra.mxu0 0
  %3070 = vmatprep.subr.bf16.mxu0 0
  %3071 = vmatpush1.bf16.msra.mxu0 %v3052
  %3072 = vmatprep.subr.bf16.mxu0 0
  %3073 = vmatpush1.bf16.msra.mxu0 %v3051
  %3074 = vmatprep.subr.bf16.mxu0 0
  %3075 = vmatpush2.bf16.msra.mxu0 0
  %3076 = vmatprep.subr.bf16.mxu0 0
  %3077 = vmatpush2.bf16.msra.mxu0 0
  %3078 = vmatprep.subr.bf16.mxu0 0
  %3079 = vmatpush2.bf16.msra.mxu0 0
  %3080 = vmatprep.subr.bf16.mxu0 0
  %3081 = vmatpush2.bf16.msra.mxu0 0
  %3082 = vmatprep.subr.bf16.mxu0 0
  %3083 = vmatpush2.bf16.msra.mxu0 0
  %3084 = vmatprep.subr.bf16.mxu0 0
  %3085 = vmatpush2.bf16.msra.mxu0 0
  %3086 = vmatprep.subr.bf16.mxu0 0
  %3087 = vmatpush2.bf16.msra.mxu0 0
  %3088 = vmatprep.subr.bf16.mxu0 0
  %3089 = vmatpush2.bf16.msra.mxu0 0
  %3090 = vmatprep.mubr.bf16.mxu0 0
  %3091 = vmatmul.mubr.bf16.gmra.mxu0 %v3056
  %v3092 = vpop.f32.mrf.mxu0
  %v3093 = vadd.f32 0.0, %v3092
  %v3094 = vpop.f32.mrf.mxu0
  %v3095 = vpop.f32.mrf.mxu0
  %v3096 = vadd.f32 0.0, %v3095
  %v3097 = vpop.f32.mrf.mxu0
  %3098 = vdwg.mxu0
  %v3103 = vunpack.c.l.b16 %v2755
  %v3104 = vunpack.c.l.b16 %v2756
  %v3105 = vunpack.c.l.b16 %v2757
  %v3106 = vunpack.c.l.b16 %v2758
  %v3107 = vpack.c.b16 %v3104, %v3103
  %v3108 = vpack.c.b16 %v3106, %v3105
  %v3112 = vsel %vm1748, %v2729, 0
  %3114 = vmatprep.subr.bf16.mxu0 0
  %3115 = vmatpush1.bf16.msra.mxu0 0
  %3116 = vmatprep.subr.bf16.mxu0 0
  %3117 = vmatpush1.bf16.msra.mxu0 0
  %3118 = vmatprep.subr.bf16.mxu0 0
  %3119 = vmatpush1.bf16.msra.mxu0 0
  %3120 = vmatprep.subr.bf16.mxu0 0
  %3121 = vmatpush1.bf16.msra.mxu0 0
  %3122 = vmatprep.subr.bf16.mxu0 0
  %3123 = vmatpush1.bf16.msra.mxu0 0
  %3124 = vmatprep.subr.bf16.mxu0 0
  %3125 = vmatpush1.bf16.msra.mxu0 0
  %3126 = vmatprep.subr.bf16.mxu0 0
  %3127 = vmatpush1.bf16.msra.mxu0 %v3108
  %3128 = vmatprep.subr.bf16.mxu0 0
  %3129 = vmatpush1.bf16.msra.mxu0 %v3107
  %3130 = vmatprep.subr.bf16.mxu0 0
  %3131 = vmatpush2.bf16.msra.mxu0 0
  %3132 = vmatprep.subr.bf16.mxu0 0
  %3133 = vmatpush2.bf16.msra.mxu0 0
  %3134 = vmatprep.subr.bf16.mxu0 0
  %3135 = vmatpush2.bf16.msra.mxu0 0
  %3136 = vmatprep.subr.bf16.mxu0 0
  %3137 = vmatpush2.bf16.msra.mxu0 0
  %3138 = vmatprep.subr.bf16.mxu0 0
  %3139 = vmatpush2.bf16.msra.mxu0 0
  %3140 = vmatprep.subr.bf16.mxu0 0
  %3141 = vmatpush2.bf16.msra.mxu0 0
  %3142 = vmatprep.subr.bf16.mxu0 0
  %3143 = vmatpush2.bf16.msra.mxu0 0
  %3144 = vmatprep.subr.bf16.mxu0 0
  %3145 = vmatpush2.bf16.msra.mxu0 0
  %3146 = vmatprep.mubr.bf16.mxu0 0
  %3147 = vmatmul.mubr.bf16.gmra.mxu0 %v3112
  %v3148 = vpop.f32.mrf.mxu0
  %v3149 = vadd.f32 0.0, %v3148
  %v3150 = vpop.f32.mrf.mxu0
  %v3151 = vpop.f32.mrf.mxu0
  %v3152 = vadd.f32 0.0, %v3151
  %v3153 = vpop.f32.mrf.mxu0
  %3154 = vdwg.mxu0
  %v3159 = vunpack.c.l.b16 %v2759
  %v3160 = vunpack.c.l.b16 %v2760
  %v3161 = vunpack.c.l.b16 %v2761
  %v3162 = vunpack.c.l.b16 %v2762
  %v3163 = vpack.c.b16 %v3160, %v3159
  %v3164 = vpack.c.b16 %v3162, %v3161
  %v3168 = vsel %vm1748, %v2730, 0
  %3170 = vmatprep.subr.bf16.mxu0 0
  %3171 = vmatpush1.bf16.msra.mxu0 0
  %3172 = vmatprep.subr.bf16.mxu0 0
  %3173 = vmatpush1.bf16.msra.mxu0 0
  %3174 = vmatprep.subr.bf16.mxu0 0
  %3175 = vmatpush1.bf16.msra.mxu0 0
  %3176 = vmatprep.subr.bf16.mxu0 0
  %3177 = vmatpush1.bf16.msra.mxu0 0
  %3178 = vmatprep.subr.bf16.mxu0 0
  %3179 = vmatpush1.bf16.msra.mxu0 0
  %3180 = vmatprep.subr.bf16.mxu0 0
  %3181 = vmatpush1.bf16.msra.mxu0 0
  %3182 = vmatprep.subr.bf16.mxu0 0
  %3183 = vmatpush1.bf16.msra.mxu0 %v3164
  %3184 = vmatprep.subr.bf16.mxu0 0
  %3185 = vmatpush1.bf16.msra.mxu0 %v3163
  %3186 = vmatprep.subr.bf16.mxu0 0
  %3187 = vmatpush2.bf16.msra.mxu0 0
  %3188 = vmatprep.subr.bf16.mxu0 0
  %3189 = vmatpush2.bf16.msra.mxu0 0
  %3190 = vmatprep.subr.bf16.mxu0 0
  %3191 = vmatpush2.bf16.msra.mxu0 0
  %3192 = vmatprep.subr.bf16.mxu0 0
  %3193 = vmatpush2.bf16.msra.mxu0 0
  %3194 = vmatprep.subr.bf16.mxu0 0
  %3195 = vmatpush2.bf16.msra.mxu0 0
  %3196 = vmatprep.subr.bf16.mxu0 0
  %3197 = vmatpush2.bf16.msra.mxu0 0
  %3198 = vmatprep.subr.bf16.mxu0 0
  %3199 = vmatpush2.bf16.msra.mxu0 0
  %3200 = vmatprep.subr.bf16.mxu0 0
  %3201 = vmatpush2.bf16.msra.mxu0 0
  %3202 = vmatprep.mubr.bf16.mxu0 0
  %3203 = vmatmul.mubr.bf16.gmra.mxu0 %v3168
  %v3204 = vpop.f32.mrf.mxu0
  %v3205 = vadd.f32 0.0, %v3204
  %v3206 = vpop.f32.mrf.mxu0
  %v3207 = vpop.f32.mrf.mxu0
  %v3208 = vadd.f32 0.0, %v3207
  %v3209 = vpop.f32.mrf.mxu0
  %3210 = vdwg.mxu0
  %v3211 = vadd.f32 %v2813, %v2869
  %v3212 = vadd.f32 %v3211, %v2925
  %v3213 = vadd.f32 %v3212, %v2981
  %v3214 = vadd.f32 %v3213, %v3037
  %v3215 = vadd.f32 %v3214, %v3093
  %v3216 = vadd.f32 %v3215, %v3149
  %v3217 = vadd.f32 %v3216, %v3205
  %v3218 = vadd.f32 %v2816, %v2872
  %v3219 = vadd.f32 %v3218, %v2928
  %v3220 = vadd.f32 %v3219, %v2984
  %v3221 = vadd.f32 %v3220, %v3040
  %v3222 = vadd.f32 %v3221, %v3096
  %v3223 = vadd.f32 %v3222, %v3152
  %v3224 = vadd.f32 %v3223, %v3208
  %3225 = vst [vmem:[%s6] sm:$0xff] %v3217
  %3226 = vst [vmem:[%s6 + $0x8] sm:$0xff] %v3224
  // Predicated region
  $region26: #{model_forward.4} parent=0 // pred_check
    _
  $region27: #{model_forward.4} parent=0 // pred_check_branch
    %3228 = sbr.rel (0) target = $region29
  $region28: #{model_forward.4} parent=0 // pred_region
    _
  $region29: #{model_forward.4} parent=0 // pred_fallthru
    _
  // Predicated region
  $region30: #{model_forward.4} parent=0 // pred_check
    _
  $region31: #{model_forward.4} parent=0 // pred_check_branch
    %3230 = sbr.rel (0) target = $region33
  $region32: #{model_forward.4} parent=0 // pred_region
    _
  $region33: #{model_forward.4} parent=0 // pred_fallthru
    _

</llo_original>
